<compile_context>
chip_gen: v7x
topology: tpu7x:2x2x1
jax: 0.10.0
libtpu: 0.0.40
codegen_flags: <defaults>
</compile_context>

<pallas_src>
import functools

import jax
import jax.numpy as jnp
from jax import lax
from jax.experimental import pallas as pl
from jax.experimental.pallas import tpu as pltpu


def _round_up(v, m):
    return -(-v // m) * m


# ---------------------------------------------------------------------------
# One-time probe: can constant-index blocks be single-buffered
# (pipeline_mode=pl.Buffered(1))?  Falls back to default double buffering.
# ---------------------------------------------------------------------------
_SINGLE_BUF = None


def _single_buffer_supported():
    global _SINGLE_BUF
    if _SINGLE_BUF is not None:
        return _SINGLE_BUF
    if not hasattr(pl, "Buffered"):
        _SINGLE_BUF = False
        return _SINGLE_BUF

    def _probe_kernel(w_ref, x_ref, o_ref):
        o_ref[...] = x_ref[...] + w_ref[...]

    try:
        w = jnp.ones((8, 128), jnp.float32)
        x = jnp.ones((16, 128), jnp.float32)
        out = pl.pallas_call(
            _probe_kernel,
            out_shape=jax.ShapeDtypeStruct((16, 128), jnp.float32),
            grid=(2,),
            in_specs=[pl.BlockSpec((8, 128), lambda i: (0, 0),
                                   pipeline_mode=pl.Buffered(1)),
                      pl.BlockSpec((8, 128), lambda i: (i, 0))],
            out_specs=pl.BlockSpec((8, 128), lambda i: (i, 0)),
        )(w, x)
        out = jax.block_until_ready(out)
        _SINGLE_BUF = bool(jnp.allclose(out, 2.0))
    except Exception:  # fall back to default double buffering
        _SINGLE_BUF = False
    return _SINGLE_BUF


# ---------------------------------------------------------------------------
# Fused kernel: expand (MXU) -> depthwise (VPU) -> project (MXU) -> residual
# One grid step = one batch element x one tile of TR output rows.
# ---------------------------------------------------------------------------
def _fused_kernel(*refs, stride, TR, H, W, Wt, has_expand, use_res):
    if has_expand:
        x_ref, w1_ref, b1_ref, wdw_ref, b2_ref, w3_ref, b3_ref, o_ref = refs
    else:
        x_ref, wdw_ref, b2_ref, w3_ref, b3_ref, o_ref = refs

    win = (TR - 1) * stride + 3          # input rows needed for TR output rows
    Wp = x_ref.shape[2]                  # padded input width (multiple of 8)
    Cin = x_ref.shape[3]
    Ch = wdw_ref.shape[1]
    Cout = w3_ref.shape[1]

    # Row window of the (spatially + channel) padded input for this tile.  The
    # x block is per-batch and reused across the row-tile grid axis, so this is
    # a cheap dynamic VMEM slice (no extra HBM traffic).
    i = pl.program_id(1)
    r0 = i * (TR * stride)
    xw = x_ref[0, pl.ds(pl.multiple_of(r0, TR * stride), win)]  # (win,Wp,Cin) bf16

    # ---- stage 1: 1x1 expand + folded-BN bias + ReLU6 -----------------------
    if has_expand:
        h = jnp.dot(xw.reshape(win * Wp, Cin), w1_ref[...],
                    preferred_element_type=jnp.float32)
        h = jnp.clip(h + b1_ref[...], 0.0, 6.0).reshape(win, Wp, Ch)
        # 2-D halo mask (the BN bias would otherwise leak through ReLU6 into
        # the depthwise taps at zero-padded positions); one broadcast multiply.
        row = lax.broadcasted_iota(jnp.int32, (win, Wp), 0) + r0
        col = lax.broadcasted_iota(jnp.int32, (win, Wp), 1)
        mask = ((row >= 1) & (row <= H) & (col >= 1) & (col <= W)
                ).astype(jnp.float32)
        h = h * mask[:, :, None]
    else:
        h = xw.astype(jnp.float32)       # padded positions are already zero

    # ---- stage 2: 3x3 depthwise conv (BN scale pre-folded) + ReLU6 ----------
    wdw = wdw_ref[...]                   # (9, Ch) f32, loaded once (hoisted)
    acc = jnp.zeros((TR, Wt, Ch), jnp.float32)
    if stride == 1:
        # 3 XLU column rolls (kj = 0 is h itself); each tap is then a
        # sublane-aligned row/column slice (column slice starts at 0, len Wt).
        shifted = (h,
                   pltpu.roll(h, Wp - 1, axis=1),   # shifted[kj][:, w] = h[:, w+kj]
                   pltpu.roll(h, Wp - 2, axis=1))
        for k in range(9):
            ki, kj = divmod(k, 3)
            tap = lax.slice(shifted[kj], (ki, 0, 0), (ki + TR, Wt, Ch))
            acc = acc + tap * wdw[k][None, None, :]
    else:  # stride == 2: two column-parity relayouts instead of 9 strided slices
        he = lax.slice(h, (0, 0, 0), (win, Wp, Ch), (1, 2, 1))
        ho = lax.slice(h, (0, 1, 0), (win, Wp, Ch), (1, 2, 1))
        for k in range(9):
            ki, kj = divmod(k, 3)
            src = he if kj % 2 == 0 else ho
            tap = lax.slice(src, (ki, kj // 2, 0),
                            (ki + (TR - 1) * 2 + 1, kj // 2 + Wt, Ch),
                            (2, 1, 1))
            acc = acc + tap * wdw[k][None, None, :]
    a = jnp.clip(acc + b2_ref[...].reshape(1, 1, Ch), 0.0, 6.0)

    # ---- stage 3: 1x1 project + folded-BN bias (MXU, f32 accumulation) ------
    # acc was built at Wt (multiple of 8) columns, so no pad/slice is needed.
    y = jnp.dot(a.reshape(TR * Wt, Ch).astype(jnp.bfloat16), w3_ref[...],
                preferred_element_type=jnp.float32)
    y = (y + b3_ref[...]).reshape(TR, Wt, Cout)

    # ---- residual (stride == 1 and inp == oup => Cin == Cout) ---------------
    if use_res:
        y = y + lax.slice(xw, (1, 1, 0),
                          (1 + TR, 1 + Wt, Cout)).astype(jnp.float32)

    o_ref[0] = y.astype(o_ref.dtype)


# ---------------------------------------------------------------------------
# Host-side BN fold (inference running stats): scales into weights, keep biases
# ---------------------------------------------------------------------------
def fold_bn(params, *, expand_ratio):
    has_expand = expand_ratio != 1
    f = {}
    if has_expand:
        f["w1"] = (params["w1"] * params["s1"][None, :]).astype(jnp.bfloat16)
        f["b1"] = params["b1"].astype(jnp.float32)
    f["wdw"] = (params["wdw"] * params["s2"][None, :]).astype(jnp.float32)
    f["b2"] = params["b2"].astype(jnp.float32)
    f["w3"] = (params["w3"] * params["s3"][None, :]).astype(jnp.bfloat16)
    f["b3"] = params["b3"].astype(jnp.float32)
    return f


# ---------------------------------------------------------------------------
# Wrapper: NCHW boundary, channel/width/row padding, BlockSpecs, VMEM budget
# ---------------------------------------------------------------------------
def inverted_residual(x_nchw, params, *, stride, expand_ratio, oup,
                      row_tile=16, padded_nhwc_output=False):
    assert stride in (1, 2)
    N, inp, H, W = x_nchw.shape
    hidden = int(inp * expand_ratio)
    has_expand = expand_ratio != 1
    use_res = (stride == 1) and (inp == oup)

    # Lane-dense channel padding.
    cin_p = _round_up(inp, 128)
    ch_p = _round_up(hidden, 128) if has_expand else cin_p
    cout_p = _round_up(oup, 128)

    hout = (H - 1) // stride + 1         # == (H + 2 - 3)//stride + 1
    wout = (W - 1) // stride + 1
    Wt = _round_up(wout, 8)              # in-kernel / output tile width
    # Input width sized so every depthwise tap at Wt columns stays in bounds.
    if stride == 1:
        wp = _round_up(max(W + 2, Wt + 2), 8)
    else:
        wp = _round_up(max(W + 2, 2 * Wt + 2), 8)

    # Row tiling: no "divides hout" constraint; output rows padded to tiles*tr.
    tr = max(1, min(row_tile, hout))
    tiles = pl.cdiv(hout, tr)
    hout_p = tiles * tr
    rows_in = (hout_p - 1) * stride + 3  # >= H + 2
    win = (tr - 1) * stride + 3

    # NCHW -> NHWC bf16, zero-pad: conv halo + extra bottom rows, width -> wp,
    # channels -> cin_p.
    x = jnp.transpose(x_nchw, (0, 2, 3, 1)).astype(jnp.bfloat16)
    x = jnp.pad(x, ((0, 0), (1, rows_in - (H + 1)),
                    (1, wp - (W + 1)), (0, cin_p - inp)))

    fp = fold_bn(params, expand_ratio=expand_ratio)
    wdw = jnp.pad(fp["wdw"], ((0, 0), (0, ch_p - hidden)))
    b2 = jnp.pad(fp["b2"], (0, ch_p - hidden)).reshape(1, -1)
    w3 = jnp.pad(fp["w3"], ((0, ch_p - hidden), (0, cout_p - oup)))
    b3 = jnp.pad(fp["b3"], (0, cout_p - oup)).reshape(1, -1)

    args = [x]
    if has_expand:
        w1 = jnp.pad(fp["w1"], ((0, cin_p - inp), (0, ch_p - hidden)))
        b1 = jnp.pad(fp["b1"], (0, ch_p - hidden)).reshape(1, -1)
        args += [w1, b1]
    args += [wdw, b2, w3, b3]

    def build_specs(single_buf):
        def const_spec(shape):
            imap = lambda n, i: (0, 0)
            if single_buf:
                # Constant-index blocks: no benefit from double buffering.
                return pl.BlockSpec(shape, imap, pipeline_mode=pl.Buffered(1))
            return pl.BlockSpec(shape, imap)

        specs = [pl.BlockSpec((1, rows_in, wp, cin_p),
                              lambda n, i: (n, 0, 0, 0))]
        if has_expand:
            specs += [const_spec((cin_p, ch_p)), const_spec((1, ch_p))]
        specs += [const_spec((9, ch_p)), const_spec((1, ch_p)),
                  const_spec((ch_p, cout_p)), const_spec((1, cout_p))]
        return specs

    # VMEM budget: pipelined blocks + in-kernel temporaries, 25% margin,
    # capped at 48 MiB (v7x: 64 MiB physical per core -> leave headroom).
    blk = (2 * rows_in * wp * cin_p * 2                       # x (2 bufs, bf16)
           + 2 * tr * Wt * cout_p * 2                          # out (2 bufs, bf16)
           + ((cin_p * ch_p * 2 + 8 * ch_p * 4) if has_expand else 0)
           + 16 * ch_p * 4 + 8 * ch_p * 4                      # wdw (sublane pad), b2
           + ch_p * cout_p * 2 + 8 * cout_p * 4)               # w3, b3
    n_h = 3 if stride == 1 else 2
    tmp = ((1 + n_h) * win * wp * ch_p * 4                     # h + rolled/parity copies
           + 2 * tr * Wt * ch_p * 4 + tr * Wt * ch_p * 2       # acc + tap + bf16 copy
           + tr * Wt * cout_p * 4                              # projected f32 tile
           + win * wp * (4 + cin_p * 2))                       # mask + xw slice
    vmem_limit = int(min(max(int((blk + tmp) * 1.25), 32 * 2 ** 20),
                         48 * 2 ** 20))

    kernel = functools.partial(_fused_kernel, stride=stride, TR=tr, H=H, W=W,
                               Wt=Wt, has_expand=has_expand, use_res=use_res)

    def run(in_specs):
        return pl.pallas_call(
            kernel,
            out_shape=jax.ShapeDtypeStruct((N, hout_p, Wt, cout_p),
                                           jnp.bfloat16),
            grid_spec=pltpu.PrefetchScalarGridSpec(
                num_scalar_prefetch=0,
                grid=(N, tiles),
                in_specs=in_specs,
                out_specs=pl.BlockSpec((1, tr, Wt, cout_p),
                                       lambda n, i: (n, i, 0, 0))),
            compiler_params=pltpu.CompilerParams(
                # batch axis parallel (v7x megacore); row-tile axis sequential
                # so both cores don't re-DMA the same per-batch input block.
                dimension_semantics=("parallel", "arbitrary"),
                vmem_limit_bytes=vmem_limit),
        )(*args)

    single_buf = _single_buffer_supported()
    try:
        out = run(build_specs(single_buf))
    except Exception:
        if not single_buf:
            raise
        out = run(build_specs(False))      # safe fallback: default buffering

    if padded_nhwc_output:
        # For chaining blocks: keep the lane-dense padded NHWC bf16 layout.
        return out                          # (N, hout_p, Wt, cout_p) bf16
    # Drop spatial/channel padding and return NCHW (bf16 activations).
    return jnp.transpose(out[:, :hout, :wout, :oup], (0, 3, 1, 2))


# ---------------------------------------------------------------------------
# Deterministic parameters (shapes match the nn.Module __init__), BN as
# per-channel scale/bias from running stats.
# ---------------------------------------------------------------------------
def make_params(key, inp, oup, expand_ratio, eps=1e-5):
    hidden = int(inp * expand_ratio)
    ks = jax.random.split(key, 16)

    def bn_fold(kg, kb, km, kv, c):
        gamma = jax.random.uniform(kg, (c,), minval=0.5, maxval=1.5)
        beta = 0.1 * jax.random.normal(kb, (c,))
        rmean = 0.1 * jax.random.normal(km, (c,))
        rvar = jax.random.uniform(kv, (c,), minval=0.5, maxval=1.5)
        scale = gamma / jnp.sqrt(rvar + eps)
        bias = beta - rmean * scale
        return scale.astype(jnp.float32), bias.astype(jnp.float32)

    params = {}
    if expand_ratio != 1:
        # PyTorch Conv2d weight (hidden, inp, 1, 1) -> (inp, hidden)
        params["w1"] = 0.2 * jax.random.normal(ks[0], (inp, hidden), jnp.float32)
        params["s1"], params["b1"] = bn_fold(ks[1], ks[2], ks[3], ks[4], hidden)
    # depthwise weight (hidden, 1, 3, 3) -> (9, hidden) [taps x channels]
    params["wdw"] = 0.2 * jax.random.normal(ks[5], (9, hidden), jnp.float32)
    params["s2"], params["b2"] = bn_fold(ks[6], ks[7], ks[8], ks[9], hidden)
    # projection weight (oup, hidden, 1, 1) -> (hidden, oup)
    params["w3"] = 0.2 * jax.random.normal(ks[10], (hidden, oup), jnp.float32)
    params["s3"], params["b3"] = bn_fold(ks[11], ks[12], ks[13], ks[14], oup)
    return params


# ---------------------------------------------------------------------------
# Pure-JAX reference mirroring the kernel's precision/folding choices
# ---------------------------------------------------------------------------
def reference(x_nchw, params, *, stride, expand_ratio, oup):
    f32 = jnp.float32
    p = fold_bn(params, expand_ratio=expand_ratio)
    x = jnp.transpose(x_nchw, (0, 2, 3, 1)).astype(jnp.bfloat16).astype(f32)
    N, H, W, inp = x.shape
    hidden = int(inp * expand_ratio)
    dn = ("NHWC", "HWIO", "NHWC")
    if expand_ratio != 1:
        w1 = p["w1"].astype(f32)
        h = lax.conv_general_dilated(x, w1.reshape(1, 1, inp, hidden),
                                     (1, 1), "VALID", dimension_numbers=dn)
        h = jnp.clip(h + p["b1"], 0.0, 6.0)
    else:
        h = x
    dwk = p["wdw"].reshape(3, 3, hidden)[:, :, None, :]
    h = lax.conv_general_dilated(h, dwk, (stride, stride), ((1, 1), (1, 1)),
                                 dimension_numbers=dn,
                                 feature_group_count=hidden)
    h = jnp.clip(h + p["b2"], 0.0, 6.0)
    h = h.astype(jnp.bfloat16).astype(f32)
    w3 = p["w3"].astype(f32)
    y = lax.conv_general_dilated(h, w3.reshape(1, 1, hidden, oup),
                                 (1, 1), "VALID", dimension_numbers=dn)
    y = y + p["b3"]
    if stride == 1 and inp == oup:
        y = y + x
    return jnp.transpose(y, (0, 3, 1, 2))


if __name__ == "__main__":
    key = jax.random.PRNGKey(0)
    configs = [
        # (N, inp, oup, H, W, stride, expand_ratio)
        (2, 8, 8, 16, 16, 1, 4),    # expand branch + residual connection
        (2, 8, 16, 16, 16, 1, 1),   # expand_ratio == 1 branch (no expand/res)
        (2, 8, 16, 16, 16, 2, 4),   # stride-2 downsampling block
    ]
    for (N, inp, oup, H, W, stride, expand_ratio) in configs:
        key, kx, kp = jax.random.split(key, 3)
        x = jax.random.normal(kx, (N, inp, H, W), jnp.float32)
        params = make_params(kp, inp, oup, expand_ratio)

        out = inverted_residual(x, params, stride=stride,
                                expand_ratio=expand_ratio, oup=oup)
        out = jax.block_until_ready(out)

        ref = reference(x, params, stride=stride,
                        expand_ratio=expand_ratio, oup=oup)
        hout = (H - 1) // stride + 1
        wout = (W - 1) // stride + 1
        assert out.shape == ref.shape == (N, oup, hout, wout), out.shape
        out_f = out.astype(jnp.float32)
        ref_b = ref.astype(jnp.bfloat16).astype(jnp.float32)  # kernel emits bf16
        err = float(jnp.max(jnp.abs(out_f - ref_b)))
        assert jnp.allclose(out_f, ref_b, atol=2e-2, rtol=2e-2), err

    print("KERNEL_OK")
</pallas_src>

<mosaic_0001>
module attributes {stable_mosaic.version = 11 : i64} {
  func.func @_probe_kernel(%arg0: i32, %arg1: memref<8x128xf32, #tpu.memory_space<vmem>>, %arg2: memref<8x128xf32, #tpu.memory_space<vmem>>, %arg3: memref<8x128xf32, #tpu.memory_space<vmem>>) attributes {dimension_semantics = [#tpu.dimension_semantics<arbitrary>], iteration_bounds = array<i64: 2>, scalar_prefetch = 0 : i64, scratch_operands = 0 : i64, tpu.core_type = #tpu.core_type<tc>, window_params = [{pipeline_mode = #tpu.pipeline_mode<synchronous>, transform_indices = @transform_0, window_bounds = array<i64: 8, 128>}, {transform_indices = @transform_1, window_bounds = array<i64: 8, 128>}, {transform_indices = @transform_2, window_bounds = array<i64: 8, 128>}]} {
    %c0 = arith.constant 0 : index
    %c0_0 = arith.constant 0 : index
    %0 = vector.load %arg2[%c0, %c0_0] : memref<8x128xf32, #tpu.memory_space<vmem>>, vector<8x128xf32>
    %c0_1 = arith.constant 0 : index
    %c0_2 = arith.constant 0 : index
    %1 = vector.load %arg1[%c0_1, %c0_2] : memref<8x128xf32, #tpu.memory_space<vmem>>, vector<8x128xf32>
    %2 = arith.addf %0, %1 : vector<8x128xf32>
    %c0_3 = arith.constant 0 : index
    %c0_4 = arith.constant 0 : index
    %3 = vector.load %arg3[%c0_3, %c0_4] : memref<8x128xf32, #tpu.memory_space<vmem>>, vector<8x128xf32>
    tpu.vector_store %arg3[%c0_3, %c0_4], %2 {strides = array<i32>} : memref<8x128xf32, #tpu.memory_space<vmem>>, vector<8x128xf32>,
    return
  }
  func.func @transform_0(%arg0: i32) -> (i32, i32) {
    %c0_i32 = arith.constant 0 : i32
    %c0_i32_0 = arith.constant 0 : i32
    %c0_i32_1 = arith.constant 0 : i32
    return %c0_i32, %c0_i32_0 : i32, i32
  }
  func.func @transform_1(%arg0: i32) -> (i32, i32) {
    %c0_i32 = arith.constant 0 : i32
    %c0_i32_0 = arith.constant 0 : i32
    return %arg0, %c0_i32 : i32, i32
  }
  func.func @transform_2(%arg0: i32) -> (i32, i32) {
    %c0_i32 = arith.constant 0 : i32
    %c0_i32_0 = arith.constant 0 : i32
    return %arg0, %c0_i32 : i32, i32
  }
}

module attributes {stable_mosaic.version = 11 : i64} {
  func.func @_fused_kernel(%arg0: i32, %arg1: i32, %arg2: memref<1x18x24x128xbf16, #tpu.memory_space<vmem>>, %arg3: memref<128x128xbf16, #tpu.memory_space<vmem>>, %arg4: memref<1x128xf32, #tpu.memory_space<vmem>>, %arg5: memref<9x128xf32, #tpu.memory_space<vmem>>, %arg6: memref<1x128xf32, #tpu.memory_space<vmem>>, %arg7: memref<128x128xbf16, #tpu.memory_space<vmem>>, %arg8: memref<1x128xf32, #tpu.memory_space<vmem>>, %arg9: memref<1x16x16x128xbf16, #tpu.memory_space<vmem>>) attributes {dimension_semantics = [#tpu.dimension_semantics<parallel>, #tpu.dimension_semantics<arbitrary>], iteration_bounds = array<i64: 2, 1>, scalar_prefetch = 0 : i64, scratch_operands = 0 : i64, tpu.core_type = #tpu.core_type<tc>, window_params = [{transform_indices = @transform_0, window_bounds = array<i64: 1, 18, 24, 128>}, {pipeline_mode = #tpu.pipeline_mode<synchronous>, transform_indices = @transform_1, window_bounds = array<i64: 128, 128>}, {pipeline_mode = #tpu.pipeline_mode<synchronous>, transform_indices = @transform_2, window_bounds = array<i64: 1, 128>}, {pipeline_mode = #tpu.pipeline_mode<synchronous>, transform_indices = @transform_3, window_bounds = array<i64: 9, 128>}, {pipeline_mode = #tpu.pipeline_mode<synchronous>, transform_indices = @transform_4, window_bounds = array<i64: 1, 128>}, {pipeline_mode = #tpu.pipeline_mode<synchronous>, transform_indices = @transform_5, window_bounds = array<i64: 128, 128>}, {pipeline_mode = #tpu.pipeline_mode<synchronous>, transform_indices = @transform_6, window_bounds = array<i64: 1, 128>}, {transform_indices = @transform_7, window_bounds = array<i64: 1, 16, 16, 128>}]} {
    %c16_i32 = arith.constant 16 : i32
    %0 = arith.muli %arg1, %c16_i32 : i32
    %1 = tpu.assume_multiple %0, 16 : i32
    %c0 = arith.constant 0 : index
    %2 = arith.index_cast %1 : i32 to index
    %c0_0 = arith.constant 0 : index
    %c0_1 = arith.constant 0 : index
    %3 = vector.load %arg2[%c0, %2, %c0_0, %c0_1] : memref<1x18x24x128xbf16, #tpu.memory_space<vmem>>, vector<1x18x24x128xbf16>
    %4 = vector.shape_cast %3 : vector<1x18x24x128xbf16> to vector<18x24x128xbf16>
    %5 = vector.shape_cast %4 : vector<18x24x128xbf16> to vector<432x128xbf16>
    %c0_2 = arith.constant 0 : index
    %c0_3 = arith.constant 0 : index
    %6 = vector.load %arg3[%c0_2, %c0_3] : memref<128x128xbf16, #tpu.memory_space<vmem>>, vector<128x128xbf16>
    %cst = arith.constant dense<0.000000e+00> : vector<432x128xf32>
    %7 = tpu.matmul %5, %6, %cst {dimension_numbers = #tpu.dot_dimension_numbers<[1], [0], [0], [1], [0, 0, 1, 1], [], []>} : vector<432x128xbf16>, vector<128x128xbf16>, vector<432x128xf32> -> vector<432x128xf32>
    %c0_4 = arith.constant 0 : index
    %c0_5 = arith.constant 0 : index
    %8 = vector.load %arg4[%c0_4, %c0_5] : memref<1x128xf32, #tpu.memory_space<vmem>>, vector<1x128xf32>
    %9 = vector.broadcast %8 : vector<1x128xf32> to vector<432x128xf32>
    %10 = arith.addf %7, %9 : vector<432x128xf32>
    %cst_6 = arith.constant 0.000000e+00 : f32
    %cst_7 = arith.constant 6.000000e+00 : f32
    %11 = vector.broadcast %cst_6 : f32 to vector<432x128xf32>
    %12 = arith.maximumf %11, %10 : vector<432x128xf32>
    %13 = vector.broadcast %cst_7 : f32 to vector<432x128xf32>
    %14 = arith.minimumf %13, %12 : vector<432x128xf32>
    %15 = vector.shape_cast %14 : vector<432x128xf32> to vector<18x24x128xf32>
    %16 = tpu.iota {dimensions = array<i32: 0>} : vector<18x24xi32>
    %17 = vector.broadcast %0 : i32 to vector<18x24xi32>
    %18 = arith.addi %16, %17 : vector<18x24xi32>
    %19 = tpu.iota {dimensions = array<i32: 1>} : vector<18x24xi32>
    %c1_i32 = arith.constant 1 : i32
    %20 = vector.broadcast %c1_i32 : i32 to vector<18x24xi32>
    %21 = arith.cmpi sge, %18, %20 : vector<18x24xi32>
    %c16_i32_8 = arith.constant 16 : i32
    %22 = vector.broadcast %c16_i32_8 : i32 to vector<18x24xi32>
    %23 = arith.cmpi sle, %18, %22 : vector<18x24xi32>
    %24 = arith.andi %21, %23 : vector<18x24xi1>
    %c1_i32_9 = arith.constant 1 : i32
    %25 = vector.broadcast %c1_i32_9 : i32 to vector<18x24xi32>
    %26 = arith.cmpi sge, %19, %25 : vector<18x24xi32>
    %27 = arith.andi %24, %26 : vector<18x24xi1>
    %c16_i32_10 = arith.constant 16 : i32
    %28 = vector.broadcast %c16_i32_10 : i32 to vector<18x24xi32>
    %29 = arith.cmpi sle, %19, %28 : vector<18x24xi32>
    %30 = arith.andi %27, %29 : vector<18x24xi1>
    %31 = arith.extui %30 : vector<18x24xi1> to vector<18x24xi32>
    %32 = arith.sitofp %31 : vector<18x24xi32> to vector<18x24xf32>
    %33 = vector.shape_cast %32 : vector<18x24xf32> to vector<18x24x1xf32>
    %34 = vector.broadcast %33 : vector<18x24x1xf32> to vector<18x24x128xf32>
    %35 = arith.mulf %15, %34 : vector<18x24x128xf32>
    %c0_11 = arith.constant 0 : index
    %c0_12 = arith.constant 0 : index
    %36 = vector.load %arg5[%c0_11, %c0_12] : memref<9x128xf32, #tpu.memory_space<vmem>>, vector<9x128xf32>
    %cst_13 = arith.constant 0.000000e+00 : f32
    %37 = vector.broadcast %cst_13 : f32 to vector<16x16x128xf32>
    %c23_i32 = arith.constant 23 : i32
    %38 = tpu.dynamic_rotate %35 by %c23_i32 dim 1 : vector<18x24x128xf32>, i32 -> vector<18x24x128xf32>
    %c22_i32 = arith.constant 22 : i32
    %39 = tpu.dynamic_rotate %35 by %c22_i32 dim 1 : vector<18x24x128xf32>, i32 -> vector<18x24x128xf32>
    %40 = vector.extract_strided_slice %35 {offsets = [0, 0, 0], sizes = [16, 16, 128], strides = [1, 1, 1]} : vector<18x24x128xf32> to vector<16x16x128xf32>
    %41 = vector.extract_strided_slice %36 {offsets = [0, 0], sizes = [1, 128], strides = [1, 1]} : vector<9x128xf32> to vector<1x128xf32>
    %42 = vector.shape_cast %41 : vector<1x128xf32> to vector<128xf32>
    %43 = vector.shape_cast %42 : vector<128xf32> to vector<1x1x128xf32>
    %44 = vector.broadcast %43 : vector<1x1x128xf32> to vector<16x16x128xf32>
    %45 = arith.mulf %40, %44 : vector<16x16x128xf32>
    %46 = arith.addf %37, %45 : vector<16x16x128xf32>
    %47 = vector.extract_strided_slice %38 {offsets = [0, 0, 0], sizes = [16, 16, 128], strides = [1, 1, 1]} : vector<18x24x128xf32> to vector<16x16x128xf32>
    %48 = vector.extract_strided_slice %36 {offsets = [1, 0], sizes = [1, 128], strides = [1, 1]} : vector<9x128xf32> to vector<1x128xf32>
    %49 = vector.shape_cast %48 : vector<1x128xf32> to vector<128xf32>
    %50 = vector.shape_cast %49 : vector<128xf32> to vector<1x1x128xf32>
    %51 = vector.broadcast %50 : vector<1x1x128xf32> to vector<16x16x128xf32>
    %52 = arith.mulf %47, %51 : vector<16x16x128xf32>
    %53 = arith.addf %46, %52 : vector<16x16x128xf32>
    %54 = vector.extract_strided_slice %39 {offsets = [0, 0, 0], sizes = [16, 16, 128], strides = [1, 1, 1]} : vector<18x24x128xf32> to vector<16x16x128xf32>
    %55 = vector.extract_strided_slice %36 {offsets = [2, 0], sizes = [1, 128], strides = [1, 1]} : vector<9x128xf32> to vector<1x128xf32>
    %56 = vector.shape_cast %55 : vector<1x128xf32> to vector<128xf32>
    %57 = vector.shape_cast %56 : vector<128xf32> to vector<1x1x128xf32>
    %58 = vector.broadcast %57 : vector<1x1x128xf32> to vector<16x16x128xf32>
    %59 = arith.mulf %54, %58 : vector<16x16x128xf32>
    %60 = arith.addf %53, %59 : vector<16x16x128xf32>
    %61 = vector.extract_strided_slice %35 {offsets = [1, 0, 0], sizes = [16, 16, 128], strides = [1, 1, 1]} : vector<18x24x128xf32> to vector<16x16x128xf32>
    %62 = vector.extract_strided_slice %36 {offsets = [3, 0], sizes = [1, 128], strides = [1, 1]} : vector<9x128xf32> to vector<1x128xf32>
    %63 = vector.shape_cast %62 : vector<1x128xf32> to vector<128xf32>
    %64 = vector.shape_cast %63 : vector<128xf32> to vector<1x1x128xf32>
    %65 = vector.broadcast %64 : vector<1x1x128xf32> to vector<16x16x128xf32>
    %66 = arith.mulf %61, %65 : vector<16x16x128xf32>
    %67 = arith.addf %60, %66 : vector<16x16x128xf32>
    %68 = vector.extract_strided_slice %38 {offsets = [1, 0, 0], sizes = [16, 16, 128], strides = [1, 1, 1]} : vector<18x24x128xf32> to vector<16x16x128xf32>
    %69 = vector.extract_strided_slice %36 {offsets = [4, 0], sizes = [1, 128], strides = [1, 1]} : vector<9x128xf32> to vector<1x128xf32>
    %70 = vector.shape_cast %69 : vector<1x128xf32> to vector<128xf32>
    %71 = vector.shape_cast %70 : vector<128xf32> to vector<1x1x128xf32>
    %72 = vector.broadcast %71 : vector<1x1x128xf32> to vector<16x16x128xf32>
    %73 = arith.mulf %68, %72 : vector<16x16x128xf32>
    %74 = arith.addf %67, %73 : vector<16x16x128xf32>
    %75 = vector.extract_strided_slice %39 {offsets = [1, 0, 0], sizes = [16, 16, 128], strides = [1, 1, 1]} : vector<18x24x128xf32> to vector<16x16x128xf32>
    %76 = vector.extract_strided_slice %36 {offsets = [5, 0], sizes = [1, 128], strides = [1, 1]} : vector<9x128xf32> to vector<1x128xf32>
    %77 = vector.shape_cast %76 : vector<1x128xf32> to vector<128xf32>
    %78 = vector.shape_cast %77 : vector<128xf32> to vector<1x1x128xf32>
    %79 = vector.broadcast %78 : vector<1x1x128xf32> to vector<16x16x128xf32>
    %80 = arith.mulf %75, %79 : vector<16x16x128xf32>
    %81 = arith.addf %74, %80 : vector<16x16x128xf32>
    %82 = vector.extract_strided_slice %35 {offsets = [2, 0, 0], sizes = [16, 16, 128], strides = [1, 1, 1]} : vector<18x24x128xf32> to vector<16x16x128xf32>
    %83 = vector.extract_strided_slice %36 {offsets = [6, 0], sizes = [1, 128], strides = [1, 1]} : vector<9x128xf32> to vector<1x128xf32>
    %84 = vector.shape_cast %83 : vector<1x128xf32> to vector<128xf32>
    %85 = vector.shape_cast %84 : vector<128xf32> to vector<1x1x128xf32>
    %86 = vector.broadcast %85 : vector<1x1x128xf32> to vector<16x16x128xf32>
    %87 = arith.mulf %82, %86 : vector<16x16x128xf32>
    %88 = arith.addf %81, %87 : vector<16x16x128xf32>
    %89 = vector.extract_strided_slice %38 {offsets = [2, 0, 0], sizes = [16, 16, 128], strides = [1, 1, 1]} : vector<18x24x128xf32> to vector<16x16x128xf32>
    %90 = vector.extract_strided_slice %36 {offsets = [7, 0], sizes = [1, 128], strides = [1, 1]} : vector<9x128xf32> to vector<1x128xf32>
    %91 = vector.shape_cast %90 : vector<1x128xf32> to vector<128xf32>
    %92 = vector.shape_cast %91 : vector<128xf32> to vector<1x1x128xf32>
    %93 = vector.broadcast %92 : vector<1x1x128xf32> to vector<16x16x128xf32>
    %94 = arith.mulf %89, %93 : vector<16x16x128xf32>
    %95 = arith.addf %88, %94 : vector<16x16x128xf32>
    %96 = vector.extract_strided_slice %39 {offsets = [2, 0, 0], sizes = [16, 16, 128], strides = [1, 1, 1]} : vector<18x24x128xf32> to vector<16x16x128xf32>
    %97 = vector.extract_strided_slice %36 {offsets = [8, 0], sizes = [1, 128], strides = [1, 1]} : vector<9x128xf32> to vector<1x128xf32>
    %98 = vector.shape_cast %97 : vector<1x128xf32> to vector<128xf32>
    %99 = vector.shape_cast %98 : vector<128xf32> to vector<1x1x128xf32>
    %100 = vector.broadcast %99 : vector<1x1x128xf32> to vector<16x16x128xf32>
    %101 = arith.mulf %96, %100 : vector<16x16x128xf32>
    %102 = arith.addf %95, %101 : vector<16x16x128xf32>
    %c0_14 = arith.constant 0 : index
    %c0_15 = arith.constant 0 : index
    %103 = vector.load %arg6[%c0_14, %c0_15] : memref<1x128xf32, #tpu.memory_space<vmem>>, vector<1x128xf32>
    %104 = vector.shape_cast %103 : vector<1x128xf32> to vector<1x1x128xf32>
    %105 = vector.broadcast %104 : vector<1x1x128xf32> to vector<16x16x128xf32>
    %106 = arith.addf %102, %105 : vector<16x16x128xf32>
    %cst_16 = arith.constant 0.000000e+00 : f32
    %cst_17 = arith.constant 6.000000e+00 : f32
    %107 = vector.broadcast %cst_16 : f32 to vector<16x16x128xf32>
    %108 = arith.maximumf %107, %106 : vector<16x16x128xf32>
    %109 = vector.broadcast %cst_17 : f32 to vector<16x16x128xf32>
    %110 = arith.minimumf %109, %108 : vector<16x16x128xf32>
    %111 = vector.shape_cast %110 : vector<16x16x128xf32> to vector<256x128xf32>
    %112 = arith.truncf %111 : vector<256x128xf32> to vector<256x128xbf16>
    %c0_18 = arith.constant 0 : index
    %c0_19 = arith.constant 0 : index
    %113 = vector.load %arg7[%c0_18, %c0_19] : memref<128x128xbf16, #tpu.memory_space<vmem>>, vector<128x128xbf16>
    %cst_20 = arith.constant dense<0.000000e+00> : vector<256x128xf32>
    %114 = tpu.matmul %112, %113, %cst_20 {dimension_numbers = #tpu.dot_dimension_numbers<[1], [0], [0], [1], [0, 0, 1, 1], [], []>} : vector<256x128xbf16>, vector<128x128xbf16>, vector<256x128xf32> -> vector<256x128xf32>
    %c0_21 = arith.constant 0 : index
    %c0_22 = arith.constant 0 : index
    %115 = vector.load %arg8[%c0_21, %c0_22] : memref<1x128xf32, #tpu.memory_space<vmem>>, vector<1x128xf32>
    %116 = vector.broadcast %115 : vector<1x128xf32> to vector<256x128xf32>
    %117 = arith.addf %114, %116 : vector<256x128xf32>
    %118 = vector.shape_cast %117 : vector<256x128xf32> to vector<16x16x128xf32>
    %119 = vector.extract_strided_slice %4 {offsets = [1, 1, 0], sizes = [16, 16, 128], strides = [1, 1, 1]} : vector<18x24x128xbf16> to vector<16x16x128xbf16>
    %120 = arith.extf %119 : vector<16x16x128xbf16> to vector<16x16x128xf32>
    %121 = arith.addf %118, %120 : vector<16x16x128xf32>
    %122 = arith.truncf %121 : vector<16x16x128xf32> to vector<16x16x128xbf16>
    %c0_23 = arith.constant 0 : index
    %c0_24 = arith.constant 0 : index
    %c0_25 = arith.constant 0 : index
    %c0_26 = arith.constant 0 : index
    %123 = vector.load %arg9[%c0_23, %c0_24, %c0_25, %c0_26] : memref<1x16x16x128xbf16, #tpu.memory_space<vmem>>, vector<1x16x16x128xbf16>
    %124 = vector.shape_cast %123 : vector<1x16x16x128xbf16> to vector<16x16x128xbf16>
    %125 = vector.shape_cast %122 : vector<16x16x128xbf16> to vector<1x16x16x128xbf16>
    tpu.vector_store %arg9[%c0_23, %c0_24, %c0_25, %c0_26], %125 {strides = array<i32>} : memref<1x16x16x128xbf16, #tpu.memory_space<vmem>>, vector<1x16x16x128xbf16>,
    return
  }
  func.func @transform_0(%arg0: i32, %arg1: i32) -> (i32, i32, i32, i32) {
    %c0_i32 = arith.constant 0 : i32
    %c0_i32_0 = arith.constant 0 : i32
    %c0_i32_1 = arith.constant 0 : i32
    %c0_i32_2 = arith.constant 0 : i32
    return %arg0, %c0_i32, %c0_i32_0, %c0_i32_1 : i32, i32, i32, i32
  }
  func.func @transform_1(%arg0: i32, %arg1: i32) -> (i32, i32) {
    %c0_i32 = arith.constant 0 : i32
    %c0_i32_0 = arith.constant 0 : i32
    %c0_i32_1 = arith.constant 0 : i32
    return %c0_i32, %c0_i32_0 : i32, i32
  }
  func.func @transform_2(%arg0: i32, %arg1: i32) -> (i32, i32) {
    %c0_i32 = arith.constant 0 : i32
    %c0_i32_0 = arith.constant 0 : i32
    %c0_i32_1 = arith.constant 0 : i32
    return %c0_i32, %c0_i32_0 : i32, i32
  }
  func.func @transform_3(%arg0: i32, %arg1: i32) -> (i32, i32) {
    %c0_i32 = arith.constant 0 : i32
    %c0_i32_0 = arith.constant 0 : i32
    %c0_i32_1 = arith.constant 0 : i32
    return %c0_i32, %c0_i32_0 : i32, i32
  }
  func.func @transform_4(%arg0: i32, %arg1: i32) -> (i32, i32) {
    %c0_i32 = arith.constant 0 : i32
    %c0_i32_0 = arith.constant 0 : i32
    %c0_i32_1 = arith.constant 0 : i32
    return %c0_i32, %c0_i32_0 : i32, i32
  }
  func.func @transform_5(%arg0: i32, %arg1: i32) -> (i32, i32) {
    %c0_i32 = arith.constant 0 : i32
    %c0_i32_0 = arith.constant 0 : i32
    %c0_i32_1 = arith.constant 0 : i32
    return %c0_i32, %c0_i32_0 : i32, i32
  }
  func.func @transform_6(%arg0: i32, %arg1: i32) -> (i32, i32) {
    %c0_i32 = arith.constant 0 : i32
    %c0_i32_0 = arith.constant 0 : i32
    %c0_i32_1 = arith.constant 0 : i32
    return %c0_i32, %c0_i32_0 : i32, i32
  }
  func.func @transform_7(%arg0: i32, %arg1: i32) -> (i32, i32, i32, i32) {
    %c0_i32 = arith.constant 0 : i32
    %c0_i32_0 = arith.constant 0 : i32
    %c0_i32_1 = arith.constant 0 : i32
    return %arg0, %arg1, %c0_i32, %c0_i32_0 : i32, i32, i32, i32
  }
}

</mosaic_0001>

<llo_original>
// kernel: tpu_custom_call.1
$region0: #{tpu_custom_call.1}
  #allocation0 [shape = 'u32[]', space=smem, size = 0x4, offset = 0x4, fixed_abs, tag = 'smem constant byte address 0x4 - core index']
  #allocation1 [shape = 'u32[144,128]{1,0:T(1,128)}', space=vmem, size = 0x12000, scoped, tag = 'internal scratch']
  %s0 = inlined_call_operand.hbm [shape: f32[8,128], index: 0, kind: input, shape index: {}]
  %s1 = inlined_call_operand.hbm [shape: f32[16,128], index: 1, kind: input, shape index: {}]
  %s2 = inlined_call_operand.hbm [shape: f32[16,128], index: 2, kind: output, shape index: {}]
  %s3 = sld [smem:[#allocation0]]
  $region49: #{tpu_custom_call.1} parent=0
    _
  %s5 = ssub.s32 1, %s3
  %s6 = scalar_select 0, %s5, %s3
  $region1: #{tpu_custom_call.1} parent=0
    #allocation2 [shape = 'u8[4096]{0}', space=vmem, size = 0x1000, scoped, tag = 'input window, operand 0, single buffered']
    #allocation3 [shape = 's32[2]{0}', space=sflag, size = 0x8, scoped, tag = 'scoped memory for tpu_custom_call.1']
    #allocation4 [shape = 's32[2]{0}', space=sflag, size = 0x8, scoped, tag = 'scoped memory for tpu_custom_call.1']
    #allocation5 [shape = 'u8[8192]{0}', space=vmem, size = 0x2000, scoped, tag = 'input window, operand 1']
    #allocation6 [shape = 's32[2]{0}', space=sflag, size = 0x8, scoped, tag = 'scoped memory for tpu_custom_call.1']
    #allocation7 [shape = 'u8[8192]{0}', space=vmem, size = 0x2000, scoped, tag = 'output window, operand 0']
    %7 = vsyncpa [#allocation3], 0
    %8 = vsyncpa [#allocation6], 0
    %s9 = scalar_lea.sflag [#allocation6], 1
    %10 = vsyncpa %s9, 0
    %11 = vsyncpa [#allocation4], 0
    %s12 = scalar_lea.sflag [#allocation4], 1
    %13 = vsyncpa %s12, 0
    loop: start=0, step=1, limit=4
    $region2: #{tpu_custom_call.1} parent=1 // loop_pre_header
      _
    $region3: #{tpu_custom_call.1} parent=1 // loop_header
      %s15 = sphi 0, %s19
      %p16 = scmp.ge.s32.totalorder %s15, 4
      %s23 = sphi 0, %s23
      %s25 = sphi 0, %s23
      %s26 = sphi 0, %s25
      %s40 = sphi 0, %s26
      %s46 = sphi 0, %s48
      %s49 = sphi 0, %s46
      %s50 = sphi 0, %s49
      %s66 = sphi 0, %s50
      %s72 = sphi 0, %s74
      %s75 = sphi 0, %s72
      %s76 = sphi 0, %s75
      %s92 = sphi 0, %s76
    $region4: #{tpu_custom_call.1} parent=1 // loop_header_branch
      %18 = sbr.rel (%p16) target = $region8
    $region5: #{tpu_custom_call.1} parent=1 // loop_body
      %s20 = ssub.s32 %s15, 1
      %s21 = ssub.s32 %s15, 2
      %s22 = sadd.s32 %s15, 1
      %s24 = sadd.s32 %s23, 1
      %p27 = scmp.eq.s32.totalorder %s15, 1
      %p28 = scmp.ne.s32.totalorder %s23, %s25
      %p29 = scmp.eq.s32.totalorder %s15, 0
      %p30 = por %p28, %p29
      %p31 = scmp.ne.s32.totalorder %s23, %s25
      %p32 = scmp.eq.s32.totalorder %s20, 1
      %p33 = por %p31, %p32
      %p34 = scmp.ne.s32.totalorder %s25, %s26
      %p35 = scmp.eq.s32.totalorder %s20, 0
      %p36 = por %p34, %p35
      %p37 = scmp.ne.s32.totalorder %s25, %s26
      %p38 = scmp.eq.s32.totalorder %s21, 1
      %p39 = por %p37, %p38
      %p41 = scmp.ne.s32.totalorder %s26, %s40
      %p42 = scmp.eq.s32.totalorder %s21, 0
      %p43 = por %p41, %p42
      %s44 = ssub.s32 %s15, %s22
      %p45 = scmp.eq.s32.totalorder %s44, 0
      %s47 = sadd.s32 %s46, 1
      %s48 = scalar_select %p45, %s46, %s47
      %p51 = pneg %p45
      %p52 = scmp.eq.s32.totalorder %s15, 1
      %p53 = por %p51, %p52
      %p54 = scmp.ne.s32.totalorder %s46, %s49
      %p55 = scmp.eq.s32.totalorder %s15, 0
      %p56 = por %p54, %p55
      %p57 = scmp.ne.s32.totalorder %s46, %s49
      %p58 = scmp.eq.s32.totalorder %s20, 1
      %p59 = por %p57, %p58
      %p60 = scmp.ne.s32.totalorder %s49, %s50
      %p61 = scmp.eq.s32.totalorder %s20, 0
      %p62 = por %p60, %p61
      %p63 = scmp.ne.s32.totalorder %s49, %s50
      %p64 = scmp.eq.s32.totalorder %s21, 1
      %p65 = por %p63, %p64
      %p67 = scmp.ne.s32.totalorder %s50, %s66
      %p68 = scmp.eq.s32.totalorder %s21, 0
      %p69 = por %p67, %p68
      %s70 = ssub.s32 %s15, %s22
      %p71 = scmp.eq.s32.totalorder %s70, 0
      %s73 = sadd.s32 %s72, 1
      %s74 = scalar_select %p71, %s72, %s73
      %p77 = pneg %p71
      %p78 = scmp.eq.s32.totalorder %s15, 1
      %p79 = por %p77, %p78
      %p80 = scmp.ne.s32.totalorder %s72, %s75
      %p81 = scmp.eq.s32.totalorder %s15, 0
      %p82 = por %p80, %p81
      %p83 = scmp.ne.s32.totalorder %s72, %s75
      %p84 = scmp.eq.s32.totalorder %s20, 1
      %p85 = por %p83, %p84
      %p86 = scmp.ne.s32.totalorder %s75, %s76
      %p87 = scmp.eq.s32.totalorder %s20, 0
      %p88 = por %p86, %p87
      %p89 = scmp.ne.s32.totalorder %s75, %s76
      %p90 = scmp.eq.s32.totalorder %s21, 1
      %p91 = por %p89, %p90
      %p93 = scmp.ne.s32.totalorder %s76, %s92
      %p94 = scmp.eq.s32.totalorder %s21, 0
      %p95 = por %p93, %p94
      %p96 = scmp.le.s32.totalorder 1, %s15
      %p97 = scmp.lt.s32.totalorder %s15, 3
      %p98 = pnand %p96, %p97
      %p99 = pneg %p98
      // Predicated region
      $region9: #{tpu_custom_call.1} parent=5 // pred_check
        _
      $region10: #{tpu_custom_call.1} parent=5 // pred_check_branch
        %101 = sbr.rel (%p98) target = $region12
      $region11: #{tpu_custom_call.1} parent=5 // pred_region
        %s102 = ssub.s32 %s15, 1
        // Predicated region
        $region13: #{tpu_custom_call.1} parent=11 // pred_check
          %p103 = pneg %p36
        $region14: #{tpu_custom_call.1} parent=11 // pred_check_branch
          %105 = sbr.rel (%p103) target = $region16
        $region15: #{tpu_custom_call.1} parent=11 // pred_region
          %s107 = ssub.s32 128, 128
          %108 = vsyncadd [#allocation3], %s107
          %s110 = sshll.u32 [#allocation2], 4
          %s111 = int_to_ptr.vmem [resolvable:$true] %s110
          %113 = dma.hbm_to_vmem [thread:$0]  %s0, 128, %s111, [#allocation3]
        $region16: #{tpu_custom_call.1} parent=11 // pred_fallthru
          _
      $region12: #{tpu_custom_call.1} parent=5 // pred_fallthru
        _
      %p114 = scmp.lt.s32.totalorder %s15, 2
      // Predicated region
      $region17: #{tpu_custom_call.1} parent=5 // pred_check
        %p115 = pneg %p114
      $region18: #{tpu_custom_call.1} parent=5 // pred_check_branch
        %117 = sbr.rel (%p115) target = $region20
      $region19: #{tpu_custom_call.1} parent=5 // pred_region
        // Predicated region
        $region21: #{tpu_custom_call.1} parent=19 // pred_check
          %p118 = pneg %p56
        $region22: #{tpu_custom_call.1} parent=19 // pred_check_branch
          %120 = sbr.rel (%p118) target = $region24
        $region23: #{tpu_custom_call.1} parent=19 // pred_region
          %s121 = sand.u32 %s46, 1
          %s122 = scalar_lea.sflag [#allocation6], %s121
          %s123 = sand.u32 %s46, 1
          %s124 = smul.addr %s123, 8
          %s125 = scalar_lea.vmem [#allocation5], %s124
          %s127 = ssub.s32 128, 128
          %128 = vsyncadd %s122, %s127
          %s129 = smul.addr %s15, 128
          %s130 = scalar_lea.hbm %s1, %s129
          %s132 = sshll.u32 %s125, 4
          %s133 = int_to_ptr.vmem [resolvable:$true] %s132
          %135 = dma.hbm_to_vmem [thread:$0]  %s130, 128, %s133, %s122
        $region24: #{tpu_custom_call.1} parent=19 // pred_fallthru
          _
      $region20: #{tpu_custom_call.1} parent=5 // pred_fallthru
        _
      %p136 = scmp.le.s32.totalorder 1, %s15
      %p137 = scmp.lt.s32.totalorder %s15, 3
      %p138 = pnand %p136, %p137
      %p139 = pneg %p138
      // Predicated region
      $region25: #{tpu_custom_call.1} parent=5 // pred_check
        _
      $region26: #{tpu_custom_call.1} parent=5 // pred_check_branch
        %141 = sbr.rel (%p138) target = $region28
      $region27: #{tpu_custom_call.1} parent=5 // pred_region
        %s142 = ssub.s32 %s15, 1
        // Predicated region
        $region29: #{tpu_custom_call.1} parent=27 // pred_check
          %p143 = pneg %p36
        $region30: #{tpu_custom_call.1} parent=27 // pred_check_branch
          %145 = sbr.rel (%p143) target = $region32
        $region31: #{tpu_custom_call.1} parent=27 // pred_region
          %146 = dma.done [#allocation3], 128
        $region32: #{tpu_custom_call.1} parent=27 // pred_fallthru
          _
        %s147 = sand.u32 %s49, 1
        %s148 = scalar_lea.sflag [#allocation6], %s147
        %s149 = sand.u32 %s49, 1
        %s150 = smul.addr %s149, 8
        %s151 = scalar_lea.vmem [#allocation5], %s150
        // Predicated region
        $region33: #{tpu_custom_call.1} parent=27 // pred_check
          %p152 = pneg %p62
        $region34: #{tpu_custom_call.1} parent=27 // pred_check_branch
          %154 = sbr.rel (%p152) target = $region36
        $region35: #{tpu_custom_call.1} parent=27 // pred_region
          %155 = dma.done %s148, 128
        $region36: #{tpu_custom_call.1} parent=27 // pred_fallthru
          _
        %p156 = pneg %p36
        %p157 = pneg %p33
        %s158 = sand.u32 %s49, 1
        %s159 = scalar_lea.sflag [#allocation6], %s158
        %s160 = sand.u32 %s49, 1
        %s161 = smul.addr %s160, 8
        %s162 = scalar_lea.vmem [#allocation5], %s161
        %p163 = pneg %p62
        %p164 = pneg %p59
        %p165 = pneg %p88
        %p166 = pneg %p85
        %s167 = sand.u32 %s75, 1
        %s168 = scalar_lea.sflag [#allocation4], %s167
        %s169 = sand.u32 %s75, 1
        %s170 = smul.addr %s169, 8
        %s171 = scalar_lea.vmem [#allocation7], %s170
        %v172 = vld [vmem:[%s151] sm:$0xff]
        %v173 = vld [vmem:[#allocation2] sm:$0xff]
        %v174 = vadd.f32 %v172, %v173
        %175 = vst [vmem:[%s171] sm:$0xff] %v174
        %s176 = sand.u32 %s75, 1
        %s177 = scalar_lea.sflag [#allocation4], %s176
        %s178 = sand.u32 %s75, 1
        %s179 = smul.addr %s178, 8
        %s180 = scalar_lea.vmem [#allocation7], %s179
        // Predicated region
        $region37: #{tpu_custom_call.1} parent=27 // pred_check
          %p181 = pneg %p85
        $region38: #{tpu_custom_call.1} parent=27 // pred_check_branch
          %183 = sbr.rel (%p181) target = $region40
        $region39: #{tpu_custom_call.1} parent=27 // pred_region
          %s185 = ssub.s32 128, 128
          %186 = vsyncadd %s177, %s185
          %s187 = smul.addr %s20, 128
          %s188 = scalar_lea.hbm %s2, %s187
          %s190 = sshll.u32 %s180, 4
          %s191 = int_to_ptr.vmem [resolvable:$true] %s190
          %193 = dma.vmem_to_hbm [thread:$0]  %s191, 128, %s188, %s177
        $region40: #{tpu_custom_call.1} parent=27 // pred_fallthru
          _
      $region28: #{tpu_custom_call.1} parent=5 // pred_fallthru
        _
      %p194 = scmp.le.s32.totalorder 2, %s15
      // Predicated region
      $region41: #{tpu_custom_call.1} parent=5 // pred_check
        %p195 = pneg %p194
      $region42: #{tpu_custom_call.1} parent=5 // pred_check_branch
        %197 = sbr.rel (%p195) target = $region44
      $region43: #{tpu_custom_call.1} parent=5 // pred_region
        %s198 = ssub.s32 %s15, 2
        // Predicated region
        $region45: #{tpu_custom_call.1} parent=43 // pred_check
          %p199 = pneg %p91
        $region46: #{tpu_custom_call.1} parent=43 // pred_check_branch
          %201 = sbr.rel (%p199) target = $region48
        $region47: #{tpu_custom_call.1} parent=43 // pred_region
          %s202 = sand.u32 %s76, 1
          %s203 = scalar_lea.sflag [#allocation4], %s202
          %s204 = sand.u32 %s76, 1
          %s205 = smul.addr %s204, 8
          %s206 = scalar_lea.vmem [#allocation7], %s205
          %207 = dma.done %s203, 128
        $region48: #{tpu_custom_call.1} parent=43 // pred_fallthru
          _
      $region44: #{tpu_custom_call.1} parent=5 // pred_fallthru
        _
    $region6: #{tpu_custom_call.1} parent=1 // loop_footer
      %s19 = sadd.s32 1, %s15
    $region7: #{tpu_custom_call.1} parent=1 // loop_footer_branch
      %14 = sbr.rel target = $region3
    $region8: #{tpu_custom_call.1} parent=1 // loop_exit
      _
    %208 = vsyncpa [#allocation3], 1
    %s209 = scalar_lea.sflag [#allocation3], 1
    %210 = vsyncpa %s209, 1
    %211 = vsyncpa [#allocation6], 1
    %s212 = scalar_lea.sflag [#allocation6], 1
    %213 = vsyncpa %s212, 1
    %214 = vsyncpa [#allocation4], 1
    %s215 = scalar_lea.sflag [#allocation4], 1
    %216 = vsyncpa %s215, 1

// kernel: tpu_custom_call.1
$region0: #{tpu_custom_call.1}
  #allocation0 [shape = 'u32[]', space=smem, size = 0x4, offset = 0x4, fixed_abs, tag = 'smem constant byte address 0x4 - core index']
  #allocation1 [shape = 'u32[144,128]{1,0:T(1,128)}', space=vmem, size = 0x12000, scoped, tag = 'internal scratch']
  %s0 = inlined_call_operand.hbm [shape: bf16[2,18,24,128], index: 0, kind: input, shape index: {}]
  %s1 = inlined_call_operand.hbm [shape: bf16[128,128], index: 1, kind: input, shape index: {}]
  %s2 = inlined_call_operand.vmem [shape: f32[1,128], index: 2, kind: input, shape index: {}]
  %s3 = inlined_call_operand.hbm [shape: f32[9,128], index: 3, kind: input, shape index: {}]
  %s4 = inlined_call_operand.vmem [shape: f32[1,128], index: 4, kind: input, shape index: {}]
  %s5 = inlined_call_operand.hbm [shape: bf16[128,128], index: 5, kind: input, shape index: {}]
  %s6 = inlined_call_operand.vmem [shape: f32[1,128], index: 6, kind: input, shape index: {}]
  %s7 = inlined_call_operand.hbm [shape: bf16[2,16,16,128], index: 7, kind: output, shape index: {}]
  %s8 = sld [smem:[#allocation0]]
  $region77: #{tpu_custom_call.1} parent=0
    _
  %s10 = ssub.s32 1, %s8
  %s11 = scalar_select 0, %s10, %s8
  $region1: #{tpu_custom_call.1} parent=0
    #allocation2 [shape = 'u8[221184]{0}', space=vmem, size = 0x36000, scoped, tag = 'input window, operand 0']
    #allocation3 [shape = 's32[2]{0}', space=sflag, size = 0x8, scoped, tag = 'scoped memory for tpu_custom_call.1']
    #allocation4 [shape = 's32[2]{0}', space=sflag, size = 0x8, scoped, tag = 'scoped memory for tpu_custom_call.1']
    #allocation5 [shape = 'u8[32768]{0}', space=vmem, size = 0x8000, scoped, tag = 'input window, operand 1, single buffered']
    #allocation6 [shape = 's32[1]{0}', space=sflag, size = 0x4, scoped, tag = 'scoped memory for tpu_custom_call.1']
    #allocation7 [shape = 'u8[8192]{0}', space=vmem, size = 0x2000, scoped, tag = 'input window, operand 3, single buffered']
    #allocation8 [shape = 'u8[32768]{0}', space=vmem, size = 0x8000, scoped, tag = 'input window, operand 5, single buffered']
    #allocation9 [shape = 's32[1]{0}', space=sflag, size = 0x4, scoped, tag = 'scoped memory for tpu_custom_call.1']
    #allocation10 [shape = 'u8[131072]{0}', space=vmem, size = 0x20000, scoped, tag = 'output window, operand 0']
    %12 = vsyncpa [#allocation3], 0
    %s13 = scalar_lea.sflag [#allocation3], 1
    %14 = vsyncpa %s13, 0
    %15 = vsyncpa [#allocation6], 0
    %16 = vsyncpa [#allocation9], 0
    %17 = vsyncpa [#allocation4], 0
    %s18 = scalar_lea.sflag [#allocation4], 1
    %19 = vsyncpa %s18, 0
    loop: start=0, step=1, limit=4
    $region2: #{tpu_custom_call.1} parent=1 // loop_pre_header
      _
    $region3: #{tpu_custom_call.1} parent=1 // loop_header
      %s21 = sphi 0, %s25
      %p22 = scmp.ge.s32.totalorder %s21, 4
      %s28 = sphi 0, %s40
      %s29 = sphi 0, %s36
      %s30 = sphi 0, %s28
      %s31 = sphi 0, %s29
      %s32 = sphi 0, %s30
      %s33 = sphi 0, %s31
      %s43 = sphi 0, %s45
      %s46 = sphi 0, %s43
      %s47 = sphi 0, %s46
      %s63 = sphi 0, %s47
      %s67 = sphi 0, %s67
      %s69 = sphi 0, %s67
      %s70 = sphi 0, %s69
      %s84 = sphi 0, %s70
      %s88 = sphi 0, %s88
      %s90 = sphi 0, %s88
      %s91 = sphi 0, %s90
      %s105 = sphi 0, %s91
      %s109 = sphi 0, %s109
      %s111 = sphi 0, %s109
      %s112 = sphi 0, %s111
      %s126 = sphi 0, %s112
      %s130 = sphi 0, %s130
      %s132 = sphi 0, %s130
      %s133 = sphi 0, %s132
      %s147 = sphi 0, %s133
      %s151 = sphi 0, %s151
      %s153 = sphi 0, %s151
      %s154 = sphi 0, %s153
      %s168 = sphi 0, %s154
      %s172 = sphi 0, %s172
      %s174 = sphi 0, %s172
      %s175 = sphi 0, %s174
      %s189 = sphi 0, %s175
      %s197 = sphi 0, %s199
      %s200 = sphi 0, %s197
      %s201 = sphi 0, %s200
      %s217 = sphi 0, %s201
    $region4: #{tpu_custom_call.1} parent=1 // loop_header_branch
      %24 = sbr.rel (%p22) target = $region8
    $region5: #{tpu_custom_call.1} parent=1 // loop_body
      %s26 = ssub.s32 %s21, 1
      %s27 = ssub.s32 %s21, 2
      %s34 = sadd.s32 1, %s29
      %p35 = scmp.ge.s32.totalorder %s34, 1
      %s36 = scalar_select %p35, 0, %s34
      %s37 = sadd.s32 1, %s28
      %s38 = scalar_select %p35, %s37, %s28
      %p39 = scmp.ge.s32.totalorder %s38, 2
      %s40 = scalar_select %p39, 0, %s38
      %s41 = ssub.s32 %s28, %s40
      %p42 = scmp.eq.s32.totalorder %s41, 0
      %s44 = sadd.s32 %s43, 1
      %s45 = scalar_select %p42, %s43, %s44
      %p48 = pneg %p42
      %p49 = scmp.eq.s32.totalorder %s21, 1
      %p50 = por %p48, %p49
      %p51 = scmp.ne.s32.totalorder %s43, %s46
      %p52 = scmp.eq.s32.totalorder %s21, 0
      %p53 = por %p51, %p52
      %p54 = scmp.ne.s32.totalorder %s43, %s46
      %p55 = scmp.eq.s32.totalorder %s26, 1
      %p56 = por %p54, %p55
      %p57 = scmp.ne.s32.totalorder %s46, %s47
      %p58 = scmp.eq.s32.totalorder %s26, 0
      %p59 = por %p57, %p58
      %p60 = scmp.ne.s32.totalorder %s46, %s47
      %p61 = scmp.eq.s32.totalorder %s27, 1
      %p62 = por %p60, %p61
      %p64 = scmp.ne.s32.totalorder %s47, %s63
      %p65 = scmp.eq.s32.totalorder %s27, 0
      %p66 = por %p64, %p65
      %s68 = sadd.s32 %s67, 1
      %p71 = scmp.eq.s32.totalorder %s21, 1
      %p72 = scmp.ne.s32.totalorder %s67, %s69
      %p73 = scmp.eq.s32.totalorder %s21, 0
      %p74 = por %p72, %p73
      %p75 = scmp.ne.s32.totalorder %s67, %s69
      %p76 = scmp.eq.s32.totalorder %s26, 1
      %p77 = por %p75, %p76
      %p78 = scmp.ne.s32.totalorder %s69, %s70
      %p79 = scmp.eq.s32.totalorder %s26, 0
      %p80 = por %p78, %p79
      %p81 = scmp.ne.s32.totalorder %s69, %s70
      %p82 = scmp.eq.s32.totalorder %s27, 1
      %p83 = por %p81, %p82
      %p85 = scmp.ne.s32.totalorder %s70, %s84
      %p86 = scmp.eq.s32.totalorder %s27, 0
      %p87 = por %p85, %p86
      %s89 = sadd.s32 %s88, 1
      %p92 = scmp.eq.s32.totalorder %s21, 1
      %p93 = scmp.ne.s32.totalorder %s88, %s90
      %p94 = scmp.eq.s32.totalorder %s21, 0
      %p95 = por %p93, %p94
      %p96 = scmp.ne.s32.totalorder %s88, %s90
      %p97 = scmp.eq.s32.totalorder %s26, 1
      %p98 = por %p96, %p97
      %p99 = scmp.ne.s32.totalorder %s90, %s91
      %p100 = scmp.eq.s32.totalorder %s26, 0
      %p101 = por %p99, %p100
      %p102 = scmp.ne.s32.totalorder %s90, %s91
      %p103 = scmp.eq.s32.totalorder %s27, 1
      %p104 = por %p102, %p103
      %p106 = scmp.ne.s32.totalorder %s91, %s105
      %p107 = scmp.eq.s32.totalorder %s27, 0
      %p108 = por %p106, %p107
      %s110 = sadd.s32 %s109, 1
      %p113 = scmp.eq.s32.totalorder %s21, 1
      %p114 = scmp.ne.s32.totalorder %s109, %s111
      %p115 = scmp.eq.s32.totalorder %s21, 0
      %p116 = por %p114, %p115
      %p117 = scmp.ne.s32.totalorder %s109, %s111
      %p118 = scmp.eq.s32.totalorder %s26, 1
      %p119 = por %p117, %p118
      %p120 = scmp.ne.s32.totalorder %s111, %s112
      %p121 = scmp.eq.s32.totalorder %s26, 0
      %p122 = por %p120, %p121
      %p123 = scmp.ne.s32.totalorder %s111, %s112
      %p124 = scmp.eq.s32.totalorder %s27, 1
      %p125 = por %p123, %p124
      %p127 = scmp.ne.s32.totalorder %s112, %s126
      %p128 = scmp.eq.s32.totalorder %s27, 0
      %p129 = por %p127, %p128
      %s131 = sadd.s32 %s130, 1
      %p134 = scmp.eq.s32.totalorder %s21, 1
      %p135 = scmp.ne.s32.totalorder %s130, %s132
      %p136 = scmp.eq.s32.totalorder %s21, 0
      %p137 = por %p135, %p136
      %p138 = scmp.ne.s32.totalorder %s130, %s132
      %p139 = scmp.eq.s32.totalorder %s26, 1
      %p140 = por %p138, %p139
      %p141 = scmp.ne.s32.totalorder %s132, %s133
      %p142 = scmp.eq.s32.totalorder %s26, 0
      %p143 = por %p141, %p142
      %p144 = scmp.ne.s32.totalorder %s132, %s133
      %p145 = scmp.eq.s32.totalorder %s27, 1
      %p146 = por %p144, %p145
      %p148 = scmp.ne.s32.totalorder %s133, %s147
      %p149 = scmp.eq.s32.totalorder %s27, 0
      %p150 = por %p148, %p149
      %s152 = sadd.s32 %s151, 1
      %p155 = scmp.eq.s32.totalorder %s21, 1
      %p156 = scmp.ne.s32.totalorder %s151, %s153
      %p157 = scmp.eq.s32.totalorder %s21, 0
      %p158 = por %p156, %p157
      %p159 = scmp.ne.s32.totalorder %s151, %s153
      %p160 = scmp.eq.s32.totalorder %s26, 1
      %p161 = por %p159, %p160
      %p162 = scmp.ne.s32.totalorder %s153, %s154
      %p163 = scmp.eq.s32.totalorder %s26, 0
      %p164 = por %p162, %p163
      %p165 = scmp.ne.s32.totalorder %s153, %s154
      %p166 = scmp.eq.s32.totalorder %s27, 1
      %p167 = por %p165, %p166
      %p169 = scmp.ne.s32.totalorder %s154, %s168
      %p170 = scmp.eq.s32.totalorder %s27, 0
      %p171 = por %p169, %p170
      %s173 = sadd.s32 %s172, 1
      %p176 = scmp.eq.s32.totalorder %s21, 1
      %p177 = scmp.ne.s32.totalorder %s172, %s174
      %p178 = scmp.eq.s32.totalorder %s21, 0
      %p179 = por %p177, %p178
      %p180 = scmp.ne.s32.totalorder %s172, %s174
      %p181 = scmp.eq.s32.totalorder %s26, 1
      %p182 = por %p180, %p181
      %p183 = scmp.ne.s32.totalorder %s174, %s175
      %p184 = scmp.eq.s32.totalorder %s26, 0
      %p185 = por %p183, %p184
      %p186 = scmp.ne.s32.totalorder %s174, %s175
      %p187 = scmp.eq.s32.totalorder %s27, 1
      %p188 = por %p186, %p187
      %p190 = scmp.ne.s32.totalorder %s175, %s189
      %p191 = scmp.eq.s32.totalorder %s27, 0
      %p192 = por %p190, %p191
      %s193 = ssub.s32 %s28, %s40
      %s194 = ssub.s32 %s29, %s36
      %s195 = sor.u32 %s193, %s194
      %p196 = scmp.eq.s32.totalorder %s195, 0
      %s198 = sadd.s32 %s197, 1
      %s199 = scalar_select %p196, %s197, %s198
      %p202 = pneg %p196
      %p203 = scmp.eq.s32.totalorder %s21, 1
      %p204 = por %p202, %p203
      %p205 = scmp.ne.s32.totalorder %s197, %s200
      %p206 = scmp.eq.s32.totalorder %s21, 0
      %p207 = por %p205, %p206
      %p208 = scmp.ne.s32.totalorder %s197, %s200
      %p209 = scmp.eq.s32.totalorder %s26, 1
      %p210 = por %p208, %p209
      %p211 = scmp.ne.s32.totalorder %s200, %s201
      %p212 = scmp.eq.s32.totalorder %s26, 0
      %p213 = por %p211, %p212
      %p214 = scmp.ne.s32.totalorder %s200, %s201
      %p215 = scmp.eq.s32.totalorder %s27, 1
      %p216 = por %p214, %p215
      %p218 = scmp.ne.s32.totalorder %s201, %s217
      %p219 = scmp.eq.s32.totalorder %s27, 0
      %p220 = por %p218, %p219
      %p221 = scmp.le.s32.totalorder 1, %s21
      %p222 = scmp.lt.s32.totalorder %s21, 3
      %p223 = pnand %p221, %p222
      %p224 = pneg %p223
      // Predicated region
      $region9: #{tpu_custom_call.1} parent=5 // pred_check
        _
      $region10: #{tpu_custom_call.1} parent=5 // pred_check_branch
        %226 = sbr.rel (%p223) target = $region12
      $region11: #{tpu_custom_call.1} parent=5 // pred_region
        %s227 = ssub.s32 %s21, 1
        // Predicated region
        $region13: #{tpu_custom_call.1} parent=11 // pred_check
          %p228 = pneg %p80
        $region14: #{tpu_custom_call.1} parent=11 // pred_check_branch
          %230 = sbr.rel (%p228) target = $region16
        $region15: #{tpu_custom_call.1} parent=11 // pred_region
          %s232 = ssub.s32 1024, 1024
          %233 = vsyncadd [#allocation6], %s232
          %s234 = sshll.u32 [#allocation5], 4
          %s235 = int_to_ptr.vmem [resolvable:$true] %s234
          %240 = dma.hbm_to_vmem [thread:$0]  %s1, 1024, %s235, [#allocation6], 64, 64, 4
        $region16: #{tpu_custom_call.1} parent=11 // pred_fallthru
          _
        // Predicated region
        $region17: #{tpu_custom_call.1} parent=11 // pred_check
          %p241 = pneg %p101
        $region18: #{tpu_custom_call.1} parent=11 // pred_check_branch
          %243 = sbr.rel (%p241) target = $region20
        $region19: #{tpu_custom_call.1} parent=11 // pred_region
          _
        $region20: #{tpu_custom_call.1} parent=11 // pred_fallthru
          _
        // Predicated region
        $region21: #{tpu_custom_call.1} parent=11 // pred_check
          %p244 = pneg %p122
        $region22: #{tpu_custom_call.1} parent=11 // pred_check_branch
          %246 = sbr.rel (%p244) target = $region24
        $region23: #{tpu_custom_call.1} parent=11 // pred_region
          %s248 = ssub.s32 256, 256
          %249 = vsyncadd [#allocation6], %s248
          %s250 = sshll.u32 [#allocation7], 4
          %s251 = int_to_ptr.vmem [resolvable:$true] %s250
          %256 = dma.hbm_to_vmem [thread:$0]  %s3, 256, %s251, [#allocation6], 128, 128, 8
        $region24: #{tpu_custom_call.1} parent=11 // pred_fallthru
          _
        // Predicated region
        $region25: #{tpu_custom_call.1} parent=11 // pred_check
          %p257 = pneg %p143
        $region26: #{tpu_custom_call.1} parent=11 // pred_check_branch
          %259 = sbr.rel (%p257) target = $region28
        $region27: #{tpu_custom_call.1} parent=11 // pred_region
          _
        $region28: #{tpu_custom_call.1} parent=11 // pred_fallthru
          _
        // Predicated region
        $region29: #{tpu_custom_call.1} parent=11 // pred_check
          %p260 = pneg %p164
        $region30: #{tpu_custom_call.1} parent=11 // pred_check_branch
          %262 = sbr.rel (%p260) target = $region32
        $region31: #{tpu_custom_call.1} parent=11 // pred_region
          %s264 = ssub.s32 1024, 1024
          %265 = vsyncadd [#allocation9], %s264
          %s266 = sshll.u32 [#allocation8], 4
          %s267 = int_to_ptr.vmem [resolvable:$true] %s266
          %272 = dma.hbm_to_vmem [thread:$0]  %s5, 1024, %s267, [#allocation9], 64, 64, 4
        $region32: #{tpu_custom_call.1} parent=11 // pred_fallthru
          _
        // Predicated region
        $region33: #{tpu_custom_call.1} parent=11 // pred_check
          %p273 = pneg %p185
        $region34: #{tpu_custom_call.1} parent=11 // pred_check_branch
          %275 = sbr.rel (%p273) target = $region36
        $region35: #{tpu_custom_call.1} parent=11 // pred_region
          _
        $region36: #{tpu_custom_call.1} parent=11 // pred_fallthru
          _
      $region12: #{tpu_custom_call.1} parent=5 // pred_fallthru
        _
      %p276 = scmp.lt.s32.totalorder %s21, 2
      // Predicated region
      $region37: #{tpu_custom_call.1} parent=5 // pred_check
        %p277 = pneg %p276
      $region38: #{tpu_custom_call.1} parent=5 // pred_check_branch
        %279 = sbr.rel (%p277) target = $region40
      $region39: #{tpu_custom_call.1} parent=5 // pred_region
        // Predicated region
        $region41: #{tpu_custom_call.1} parent=39 // pred_check
          %p280 = pneg %p53
        $region42: #{tpu_custom_call.1} parent=39 // pred_check_branch
          %282 = sbr.rel (%p280) target = $region44
        $region43: #{tpu_custom_call.1} parent=39 // pred_region
          %s283 = sand.u32 %s43, 1
          %s284 = scalar_lea.sflag [#allocation3], %s283
          %s285 = sand.u32 %s43, 1
          %s286 = smul.addr %s285, 216
          %s287 = scalar_lea.vmem [#allocation2], %s286
          %s289 = ssub.s32 3456, 3456
          %290 = vsyncadd %s284, %s289
          %s291 = smul.addr %s28, 54
          %s292 = smul.addr %s291, 64
          %s293 = scalar_lea.hbm %s0, %s292
          %s294 = sshll.u32 %s287, 4
          %s295 = int_to_ptr.vmem [resolvable:$true] %s294
          %300 = dma.hbm_to_vmem [thread:$0]  %s293, 3456, %s295, %s284, 64, 64, 4
        $region44: #{tpu_custom_call.1} parent=39 // pred_fallthru
          _
      $region40: #{tpu_custom_call.1} parent=5 // pred_fallthru
        _
      %p301 = scmp.le.s32.totalorder 1, %s21
      %p302 = scmp.lt.s32.totalorder %s21, 3
      %p303 = pnand %p301, %p302
      %p304 = pneg %p303
      // Predicated region
      $region45: #{tpu_custom_call.1} parent=5 // pred_check
        _
      $region46: #{tpu_custom_call.1} parent=5 // pred_check_branch
        %306 = sbr.rel (%p303) target = $region48
      $region47: #{tpu_custom_call.1} parent=5 // pred_region
        %s307 = ssub.s32 %s21, 1
        %s308 = sand.u32 %s46, 1
        %s309 = scalar_lea.sflag [#allocation3], %s308
        %s310 = sand.u32 %s46, 1
        %s311 = smul.addr %s310, 216
        %s312 = scalar_lea.vmem [#allocation2], %s311
        // Predicated region
        $region49: #{tpu_custom_call.1} parent=47 // pred_check
          %p313 = pneg %p59
        $region50: #{tpu_custom_call.1} parent=47 // pred_check_branch
          %315 = sbr.rel (%p313) target = $region52
        $region51: #{tpu_custom_call.1} parent=47 // pred_region
          %316 = dma.done %s309, 3456
        $region52: #{tpu_custom_call.1} parent=47 // pred_fallthru
          _
        // Predicated region
        $region53: #{tpu_custom_call.1} parent=47 // pred_check
          %p317 = pneg %p80
        $region54: #{tpu_custom_call.1} parent=47 // pred_check_branch
          %319 = sbr.rel (%p317) target = $region56
        $region55: #{tpu_custom_call.1} parent=47 // pred_region
          %320 = dma.done [#allocation6], 1024
        $region56: #{tpu_custom_call.1} parent=47 // pred_fallthru
          _
        // Predicated region
        $region57: #{tpu_custom_call.1} parent=47 // pred_check
          %p321 = pneg %p122
        $region58: #{tpu_custom_call.1} parent=47 // pred_check_branch
          %323 = sbr.rel (%p321) target = $region60
        $region59: #{tpu_custom_call.1} parent=47 // pred_region
          %324 = dma.done [#allocation6], 256
        $region60: #{tpu_custom_call.1} parent=47 // pred_fallthru
          _
        // Predicated region
        $region61: #{tpu_custom_call.1} parent=47 // pred_check
          %p325 = pneg %p164
        $region62: #{tpu_custom_call.1} parent=47 // pred_check_branch
          %327 = sbr.rel (%p325) target = $region64
        $region63: #{tpu_custom_call.1} parent=47 // pred_region
          %328 = dma.done [#allocation9], 1024
        $region64: #{tpu_custom_call.1} parent=47 // pred_fallthru
          _
        %s329 = sand.u32 %s46, 1
        %s330 = scalar_lea.sflag [#allocation3], %s329
        %s331 = sand.u32 %s46, 1
        %s332 = smul.addr %s331, 216
        %s333 = scalar_lea.vmem [#allocation2], %s332
        %p334 = pneg %p59
        %p335 = pneg %p56
        %p336 = pneg %p80
        %p337 = pneg %p77
        %p338 = pneg %p101
        %p339 = pneg %p98
        %p340 = pneg %p122
        %p341 = pneg %p119
        %p342 = pneg %p143
        %p343 = pneg %p140
        %p344 = pneg %p164
        %p345 = pneg %p161
        %p346 = pneg %p185
        %p347 = pneg %p182
        %p348 = pneg %p213
        %p349 = pneg %p210
        %s350 = sand.u32 %s200, 1
        %s351 = scalar_lea.sflag [#allocation4], %s350
        %s352 = sand.u32 %s200, 1
        %s353 = smul.addr %s352, 128
        %s354 = scalar_lea.vmem [#allocation10], %s353
        %s355 = smul.u32 16, %s31
        %s357 = smul.u32 %s31, 16
        %s358 = smul.u32 %s357, 3
        %s359 = smul.addr %s358, 4
        %s360 = scalar_lea.vmem %s312, %s359 [#allocation2]
        %v361 = vld [vmem:[%s360] sm:$0xf]
        %v362 = vld [vmem:[%s360 + $0x4] sm:$0xf]
        %v363 = vld [vmem:[%s360 + $0x8] sm:$0xf]
        %v364 = vld [vmem:[%s360 + $0xc] sm:$0xf]
        %v365 = vld [vmem:[%s360 + $0x10] sm:$0xf]
        %v366 = vld [vmem:[%s360 + $0x14] sm:$0xf]
        %v367 = vld [vmem:[%s360 + $0x18] sm:$0xf]
        %v368 = vld [vmem:[%s360 + $0x1c] sm:$0xf]
        %v369 = vld [vmem:[%s360 + $0x20] sm:$0xf]
        %v370 = vld [vmem:[%s360 + $0x24] sm:$0xf]
        %v371 = vld [vmem:[%s360 + $0x28] sm:$0xf]
        %v372 = vld [vmem:[%s360 + $0x2c] sm:$0xf]
        %v373 = vld [vmem:[%s360 + $0x30] sm:$0xf]
        %v374 = vld [vmem:[%s360 + $0x34] sm:$0xf]
        %v375 = vld [vmem:[%s360 + $0x38] sm:$0xf]
        %v376 = vld [vmem:[%s360 + $0x3c] sm:$0xf]
        %v377 = vld [vmem:[%s360 + $0x40] sm:$0xf]
        %v378 = vld [vmem:[%s360 + $0x44] sm:$0xf]
        %v379 = vld [vmem:[%s360 + $0x48] sm:$0xf]
        %v380 = vld [vmem:[%s360 + $0x4c] sm:$0xf]
        %v381 = vld [vmem:[%s360 + $0x50] sm:$0xf]
        %v382 = vld [vmem:[%s360 + $0x54] sm:$0xf]
        %v383 = vld [vmem:[%s360 + $0x58] sm:$0xf]
        %v384 = vld [vmem:[%s360 + $0x5c] sm:$0xf]
        %v385 = vld [vmem:[%s360 + $0x60] sm:$0xf]
        %v386 = vld [vmem:[%s360 + $0x64] sm:$0xf]
        %v387 = vld [vmem:[%s360 + $0x68] sm:$0xf]
        %v388 = vld [vmem:[%s360 + $0x6c] sm:$0xf]
        %v389 = vld [vmem:[%s360 + $0x70] sm:$0xf]
        %v390 = vld [vmem:[%s360 + $0x74] sm:$0xf]
        %v391 = vld [vmem:[%s360 + $0x78] sm:$0xf]
        %v392 = vld [vmem:[%s360 + $0x7c] sm:$0xf]
        %v393 = vld [vmem:[%s360 + $0x80] sm:$0xf]
        %v394 = vld [vmem:[%s360 + $0x84] sm:$0xf]
        %v395 = vld [vmem:[%s360 + $0x88] sm:$0xf]
        %v396 = vld [vmem:[%s360 + $0x8c] sm:$0xf]
        %v397 = vld [vmem:[%s360 + $0x90] sm:$0xf]
        %v398 = vld [vmem:[%s360 + $0x94] sm:$0xf]
        %v399 = vld [vmem:[%s360 + $0x98] sm:$0xf]
        %v400 = vld [vmem:[%s360 + $0x9c] sm:$0xf]
        %v401 = vld [vmem:[%s360 + $0xa0] sm:$0xf]
        %v402 = vld [vmem:[%s360 + $0xa4] sm:$0xf]
        %v403 = vld [vmem:[%s360 + $0xa8] sm:$0xf]
        %v404 = vld [vmem:[%s360 + $0xac] sm:$0xf]
        %v405 = vld [vmem:[%s360 + $0xb0] sm:$0xf]
        %v406 = vld [vmem:[%s360 + $0xb4] sm:$0xf]
        %v407 = vld [vmem:[%s360 + $0xb8] sm:$0xf]
        %v408 = vld [vmem:[%s360 + $0xbc] sm:$0xf]
        %v409 = vld [vmem:[%s360 + $0xc0] sm:$0xf]
        %v410 = vld [vmem:[%s360 + $0xc4] sm:$0xf]
        %v411 = vld [vmem:[%s360 + $0xc8] sm:$0xf]
        %v412 = vld [vmem:[%s360 + $0xcc] sm:$0xf]
        %v413 = vld [vmem:[%s360 + $0xd0] sm:$0xf]
        %v414 = vld [vmem:[%s360 + $0xd4] sm:$0xf]
        %v415 = vld [vmem:[#allocation5] sm:$0xf]
        %v416 = vld [vmem:[#allocation5 + $0x4] sm:$0xf]
        %v417 = vld [vmem:[#allocation5 + $0x8] sm:$0xf]
        %v418 = vld [vmem:[#allocation5 + $0xc] sm:$0xf]
        %v419 = vld [vmem:[#allocation5 + $0x10] sm:$0xf]
        %v420 = vld [vmem:[#allocation5 + $0x14] sm:$0xf]
        %v421 = vld [vmem:[#allocation5 + $0x18] sm:$0xf]
        %v422 = vld [vmem:[#allocation5 + $0x1c] sm:$0xf]
        %v423 = vld [vmem:[#allocation5 + $0x20] sm:$0xf]
        %v424 = vld [vmem:[#allocation5 + $0x24] sm:$0xf]
        %v425 = vld [vmem:[#allocation5 + $0x28] sm:$0xf]
        %v426 = vld [vmem:[#allocation5 + $0x2c] sm:$0xf]
        %v427 = vld [vmem:[#allocation5 + $0x30] sm:$0xf]
        %v428 = vld [vmem:[#allocation5 + $0x34] sm:$0xf]
        %v429 = vld [vmem:[#allocation5 + $0x38] sm:$0xf]
        %v430 = vld [vmem:[#allocation5 + $0x3c] sm:$0xf]
        %v431 = vld [vmem:[%s2] sm:$0x1]
        %v433 = vlaneseq
        %v434 = vshrl.u32 %v433, 7
        %v435 = vsub.s32 0, %v434
        %v436 = vrot.slane %v431, %v435
        %v492 = vunpack.c.l.b16 %v361
        %v493 = vunpack.c.l.b16 %v362
        %v494 = vunpack.c.l.b16 %v363
        %v495 = vunpack.c.l.b16 %v364
        %v496 = vunpack.c.l.b16 %v365
        %v497 = vunpack.c.l.b16 %v366
        %v498 = vunpack.c.l.b16 %v367
        %v499 = vunpack.c.l.b16 %v368
        %v500 = vunpack.c.l.b16 %v369
        %v501 = vunpack.c.l.b16 %v370
        %v502 = vunpack.c.l.b16 %v371
        %v503 = vunpack.c.l.b16 %v372
        %v504 = vunpack.c.l.b16 %v373
        %v505 = vunpack.c.l.b16 %v374
        %v506 = vunpack.c.l.b16 %v375
        %v507 = vunpack.c.l.b16 %v376
        %v508 = vunpack.c.l.b16 %v377
        %v509 = vunpack.c.l.b16 %v378
        %v510 = vunpack.c.l.b16 %v379
        %v511 = vunpack.c.l.b16 %v380
        %v512 = vunpack.c.l.b16 %v381
        %v513 = vunpack.c.l.b16 %v382
        %v514 = vunpack.c.l.b16 %v383
        %v515 = vunpack.c.l.b16 %v384
        %v516 = vunpack.c.l.b16 %v385
        %v517 = vunpack.c.l.b16 %v386
        %v518 = vunpack.c.l.b16 %v387
        %v519 = vunpack.c.l.b16 %v388
        %v520 = vunpack.c.l.b16 %v389
        %v521 = vunpack.c.l.b16 %v390
        %v522 = vunpack.c.l.b16 %v391
        %v523 = vunpack.c.l.b16 %v392
        %v524 = vunpack.c.l.b16 %v393
        %v525 = vunpack.c.l.b16 %v394
        %v526 = vunpack.c.l.b16 %v395
        %v527 = vunpack.c.l.b16 %v396
        %v528 = vunpack.c.l.b16 %v397
        %v529 = vunpack.c.l.b16 %v398
        %v530 = vunpack.c.l.b16 %v399
        %v531 = vunpack.c.l.b16 %v400
        %v532 = vunpack.c.l.b16 %v401
        %v533 = vunpack.c.l.b16 %v402
        %v534 = vunpack.c.l.b16 %v403
        %v535 = vunpack.c.l.b16 %v404
        %v536 = vunpack.c.l.b16 %v405
        %v537 = vunpack.c.l.b16 %v406
        %v538 = vunpack.c.l.b16 %v407
        %v539 = vunpack.c.l.b16 %v408
        %v540 = vunpack.c.l.b16 %v409
        %v541 = vunpack.c.l.b16 %v410
        %v542 = vunpack.c.l.b16 %v411
        %v543 = vunpack.c.l.b16 %v412
        %v544 = vunpack.c.l.b16 %v413
        %v545 = vunpack.c.l.b16 %v414
        %v546 = vpack.c.b16 %v493, %v492
        %v547 = vpack.c.b16 %v495, %v494
        %v548 = vpack.c.b16 %v497, %v496
        %v549 = vpack.c.b16 %v499, %v498
        %v550 = vpack.c.b16 %v501, %v500
        %v551 = vpack.c.b16 %v503, %v502
        %v552 = vpack.c.b16 %v505, %v504
        %v553 = vpack.c.b16 %v507, %v506
        %v554 = vpack.c.b16 %v509, %v508
        %v555 = vpack.c.b16 %v511, %v510
        %v556 = vpack.c.b16 %v513, %v512
        %v557 = vpack.c.b16 %v515, %v514
        %v558 = vpack.c.b16 %v517, %v516
        %v559 = vpack.c.b16 %v519, %v518
        %v560 = vpack.c.b16 %v521, %v520
        %v561 = vpack.c.b16 %v523, %v522
        %v562 = vpack.c.b16 %v525, %v524
        %v563 = vpack.c.b16 %v527, %v526
        %v564 = vpack.c.b16 %v529, %v528
        %v565 = vpack.c.b16 %v531, %v530
        %v566 = vpack.c.b16 %v533, %v532
        %v567 = vpack.c.b16 %v535, %v534
        %v568 = vpack.c.b16 %v537, %v536
        %v569 = vpack.c.b16 %v539, %v538
        %v570 = vpack.c.b16 %v541, %v540
        %v571 = vpack.c.b16 %v543, %v542
        %v572 = vpack.c.b16 %v545, %v544
        %v616 = vunpack.c.l.b16 %v415
        %v617 = vunpack.c.l.b16 %v416
        %v618 = vunpack.c.l.b16 %v417
        %v619 = vunpack.c.l.b16 %v418
        %v620 = vunpack.c.l.b16 %v419
        %v621 = vunpack.c.l.b16 %v420
        %v622 = vunpack.c.l.b16 %v421
        %v623 = vunpack.c.l.b16 %v422
        %v624 = vunpack.c.l.b16 %v423
        %v625 = vunpack.c.l.b16 %v424
        %v626 = vunpack.c.l.b16 %v425
        %v627 = vunpack.c.l.b16 %v426
        %v628 = vunpack.c.l.b16 %v427
        %v629 = vunpack.c.l.b16 %v428
        %v630 = vunpack.c.l.b16 %v429
        %v631 = vunpack.c.l.b16 %v430
        %v632 = vpack.c.b16 %v617, %v616
        %v633 = vpack.c.b16 %v619, %v618
        %v634 = vpack.c.b16 %v621, %v620
        %v635 = vpack.c.b16 %v623, %v622
        %v636 = vpack.c.b16 %v625, %v624
        %v637 = vpack.c.b16 %v627, %v626
        %v638 = vpack.c.b16 %v629, %v628
        %v639 = vpack.c.b16 %v631, %v630
        %648 = vmatprep.subr.bf16.mxu0 0
        %649 = vmatpush1.bf16.msra.mxu0 %v632
        %650 = vmatprep.subr.bf16.mxu0 0
        %651 = vmatpush1.bf16.msra.mxu0 %v633
        %652 = vmatprep.subr.bf16.mxu0 0
        %653 = vmatpush1.bf16.msra.mxu0 %v634
        %654 = vmatprep.subr.bf16.mxu0 0
        %655 = vmatpush1.bf16.msra.mxu0 %v635
        %656 = vmatprep.subr.bf16.mxu0 0
        %657 = vmatpush1.bf16.msra.mxu0 %v636
        %658 = vmatprep.subr.bf16.mxu0 0
        %659 = vmatpush1.bf16.msra.mxu0 %v637
        %660 = vmatprep.subr.bf16.mxu0 0
        %661 = vmatpush1.bf16.msra.mxu0 %v638
        %662 = vmatprep.subr.bf16.mxu0 0
        %663 = vmatpush1.bf16.msra.mxu0 %v639
        %664 = vmatprep.subr.bf16.mxu0 0
        %665 = vmatpush1.bf16.msra.mxu0 0
        %666 = vmatprep.subr.bf16.mxu0 0
        %667 = vmatpush1.bf16.msra.mxu0 0
        %668 = vmatprep.subr.bf16.mxu0 0
        %669 = vmatpush1.bf16.msra.mxu0 0
        %670 = vmatprep.subr.bf16.mxu0 0
        %671 = vmatpush1.bf16.msra.mxu0 0
        %672 = vmatprep.subr.bf16.mxu0 0
        %673 = vmatpush1.bf16.msra.mxu0 0
        %674 = vmatprep.subr.bf16.mxu0 0
        %675 = vmatpush1.bf16.msra.mxu0 0
        %676 = vmatprep.subr.bf16.mxu0 0
        %677 = vmatpush1.bf16.msra.mxu0 0
        %678 = vmatprep.subr.bf16.mxu0 0
        %679 = vmatpush1.bf16.msra.mxu0 0
        %680 = vmatprep.mubr.bf16.mxu0 0
        %681 = vmatmul.mubr.bf16.gmra.mrb[0].mxu0 %v546
        %v682 = vpop.f32.mrb[0].mxu0
        %v683 = vadd.f32 %v436, %v682
        %v684 = vpop.f32.mrb[0].mxu0
        %v685 = vpop.f32.mrb[0].mxu0
        %v686 = vadd.f32 %v436, %v685
        %v687 = vpop.f32.mrb[0].mxu0
        %688 = vmatprep.mubr.bf16.mxu0 0
        %689 = vmatmul.mubr.bf16.gmra.mrb[0].mxu0 %v547
        %v690 = vpop.f32.mrb[0].mxu0
        %v691 = vadd.f32 %v436, %v690
        %v692 = vpop.f32.mrb[0].mxu0
        %v693 = vpop.f32.mrb[0].mxu0
        %v694 = vadd.f32 %v436, %v693
        %v695 = vpop.f32.mrb[0].mxu0
        %696 = vmatprep.mubr.bf16.mxu0 0
        %697 = vmatmul.mubr.bf16.gmra.mrb[0].mxu0 %v548
        %v698 = vpop.f32.mrb[0].mxu0
        %v699 = vadd.f32 %v436, %v698
        %v700 = vpop.f32.mrb[0].mxu0
        %v701 = vpop.f32.mrb[0].mxu0
        %v702 = vadd.f32 %v436, %v701
        %v703 = vpop.f32.mrb[0].mxu0
        %704 = vmatprep.mubr.bf16.mxu0 0
        %705 = vmatmul.mubr.bf16.gmra.mrb[0].mxu0 %v549
        %v706 = vpop.f32.mrb[0].mxu0
        %v707 = vadd.f32 %v436, %v706
        %v708 = vpop.f32.mrb[0].mxu0
        %v709 = vpop.f32.mrb[0].mxu0
        %v710 = vadd.f32 %v436, %v709
        %v711 = vpop.f32.mrb[0].mxu0
        %712 = vmatprep.mubr.bf16.mxu0 0
        %713 = vmatmul.mubr.bf16.gmra.mrb[0].mxu0 %v550
        %v714 = vpop.f32.mrb[0].mxu0
        %v715 = vadd.f32 %v436, %v714
        %v716 = vpop.f32.mrb[0].mxu0
        %v717 = vpop.f32.mrb[0].mxu0
        %v718 = vadd.f32 %v436, %v717
        %v719 = vpop.f32.mrb[0].mxu0
        %720 = vmatprep.mubr.bf16.mxu0 0
        %721 = vmatmul.mubr.bf16.gmra.mrb[0].mxu0 %v551
        %v722 = vpop.f32.mrb[0].mxu0
        %v723 = vadd.f32 %v436, %v722
        %v724 = vpop.f32.mrb[0].mxu0
        %v725 = vpop.f32.mrb[0].mxu0
        %v726 = vadd.f32 %v436, %v725
        %v727 = vpop.f32.mrb[0].mxu0
        %728 = vmatprep.mubr.bf16.mxu0 0
        %729 = vmatmul.mubr.bf16.gmra.mrb[0].mxu0 %v552
        %v730 = vpop.f32.mrb[0].mxu0
        %v731 = vadd.f32 %v436, %v730
        %v732 = vpop.f32.mrb[0].mxu0
        %v733 = vpop.f32.mrb[0].mxu0
        %v734 = vadd.f32 %v436, %v733
        %v735 = vpop.f32.mrb[0].mxu0
        %736 = vmatprep.mubr.bf16.mxu0 0
        %737 = vmatmul.mubr.bf16.gmra.mrb[0].mxu0 %v553
        %v738 = vpop.f32.mrb[0].mxu0
        %v739 = vadd.f32 %v436, %v738
        %v740 = vpop.f32.mrb[0].mxu0
        %v741 = vpop.f32.mrb[0].mxu0
        %v742 = vadd.f32 %v436, %v741
        %v743 = vpop.f32.mrb[0].mxu0
        %744 = vmatprep.mubr.bf16.mxu0 0
        %745 = vmatmul.mubr.bf16.gmra.mrb[0].mxu0 %v554
        %v746 = vpop.f32.mrb[0].mxu0
        %v747 = vadd.f32 %v436, %v746
        %v748 = vpop.f32.mrb[0].mxu0
        %v749 = vpop.f32.mrb[0].mxu0
        %v750 = vadd.f32 %v436, %v749
        %v751 = vpop.f32.mrb[0].mxu0
        %752 = vmatprep.mubr.bf16.mxu0 0
        %753 = vmatmul.mubr.bf16.gmra.mrb[0].mxu0 %v555
        %v754 = vpop.f32.mrb[0].mxu0
        %v755 = vadd.f32 %v436, %v754
        %v756 = vpop.f32.mrb[0].mxu0
        %v757 = vpop.f32.mrb[0].mxu0
        %v758 = vadd.f32 %v436, %v757
        %v759 = vpop.f32.mrb[0].mxu0
        %760 = vmatprep.mubr.bf16.mxu0 0
        %761 = vmatmul.mubr.bf16.gmra.mrb[0].mxu0 %v556
        %v762 = vpop.f32.mrb[0].mxu0
        %v763 = vadd.f32 %v436, %v762
        %v764 = vpop.f32.mrb[0].mxu0
        %v765 = vpop.f32.mrb[0].mxu0
        %v766 = vadd.f32 %v436, %v765
        %v767 = vpop.f32.mrb[0].mxu0
        %768 = vmatprep.mubr.bf16.mxu0 0
        %769 = vmatmul.mubr.bf16.gmra.mrb[0].mxu0 %v557
        %v770 = vpop.f32.mrb[0].mxu0
        %v771 = vadd.f32 %v436, %v770
        %v772 = vpop.f32.mrb[0].mxu0
        %v773 = vpop.f32.mrb[0].mxu0
        %v774 = vadd.f32 %v436, %v773
        %v775 = vpop.f32.mrb[0].mxu0
        %776 = vmatprep.mubr.bf16.mxu0 0
        %777 = vmatmul.mubr.bf16.gmra.mrb[0].mxu0 %v558
        %v778 = vpop.f32.mrb[0].mxu0
        %v779 = vadd.f32 %v436, %v778
        %v780 = vpop.f32.mrb[0].mxu0
        %v781 = vpop.f32.mrb[0].mxu0
        %v782 = vadd.f32 %v436, %v781
        %v783 = vpop.f32.mrb[0].mxu0
        %784 = vmatprep.mubr.bf16.mxu0 0
        %785 = vmatmul.mubr.bf16.gmra.mrb[0].mxu0 %v559
        %v786 = vpop.f32.mrb[0].mxu0
        %v787 = vadd.f32 %v436, %v786
        %v788 = vpop.f32.mrb[0].mxu0
        %v789 = vpop.f32.mrb[0].mxu0
        %v790 = vadd.f32 %v436, %v789
        %v791 = vpop.f32.mrb[0].mxu0
        %792 = vmatprep.mubr.bf16.mxu0 0
        %793 = vmatmul.mubr.bf16.gmra.mrb[0].mxu0 %v560
        %v794 = vpop.f32.mrb[0].mxu0
        %v795 = vadd.f32 %v436, %v794
        %v796 = vpop.f32.mrb[0].mxu0
        %v797 = vpop.f32.mrb[0].mxu0
        %v798 = vadd.f32 %v436, %v797
        %v799 = vpop.f32.mrb[0].mxu0
        %800 = vmatprep.mubr.bf16.mxu0 0
        %801 = vmatmul.mubr.bf16.gmra.mrb[0].mxu0 %v561
        %v802 = vpop.f32.mrb[0].mxu0
        %v803 = vadd.f32 %v436, %v802
        %v804 = vpop.f32.mrb[0].mxu0
        %v805 = vpop.f32.mrb[0].mxu0
        %v806 = vadd.f32 %v436, %v805
        %v807 = vpop.f32.mrb[0].mxu0
        %808 = vmatprep.mubr.bf16.mxu0 0
        %809 = vmatmul.mubr.bf16.gmra.mrb[0].mxu0 %v562
        %v810 = vpop.f32.mrb[0].mxu0
        %v811 = vadd.f32 %v436, %v810
        %v812 = vpop.f32.mrb[0].mxu0
        %v813 = vpop.f32.mrb[0].mxu0
        %v814 = vadd.f32 %v436, %v813
        %v815 = vpop.f32.mrb[0].mxu0
        %816 = vmatprep.mubr.bf16.mxu0 0
        %817 = vmatmul.mubr.bf16.gmra.mrb[0].mxu0 %v563
        %v818 = vpop.f32.mrb[0].mxu0
        %v819 = vadd.f32 %v436, %v818
        %v820 = vpop.f32.mrb[0].mxu0
        %v821 = vpop.f32.mrb[0].mxu0
        %v822 = vadd.f32 %v436, %v821
        %v823 = vpop.f32.mrb[0].mxu0
        %824 = vmatprep.mubr.bf16.mxu0 0
        %825 = vmatmul.mubr.bf16.gmra.mrb[0].mxu0 %v564
        %v826 = vpop.f32.mrb[0].mxu0
        %v827 = vadd.f32 %v436, %v826
        %v828 = vpop.f32.mrb[0].mxu0
        %v829 = vpop.f32.mrb[0].mxu0
        %v830 = vadd.f32 %v436, %v829
        %v831 = vpop.f32.mrb[0].mxu0
        %832 = vmatprep.mubr.bf16.mxu0 0
        %833 = vmatmul.mubr.bf16.gmra.mrb[0].mxu0 %v565
        %v834 = vpop.f32.mrb[0].mxu0
        %v835 = vadd.f32 %v436, %v834
        %v836 = vpop.f32.mrb[0].mxu0
        %v837 = vpop.f32.mrb[0].mxu0
        %v838 = vadd.f32 %v436, %v837
        %v839 = vpop.f32.mrb[0].mxu0
        %840 = vmatprep.mubr.bf16.mxu0 0
        %841 = vmatmul.mubr.bf16.gmra.mrb[0].mxu0 %v566
        %v842 = vpop.f32.mrb[0].mxu0
        %v843 = vadd.f32 %v436, %v842
        %v844 = vpop.f32.mrb[0].mxu0
        %v845 = vpop.f32.mrb[0].mxu0
        %v846 = vadd.f32 %v436, %v845
        %v847 = vpop.f32.mrb[0].mxu0
        %848 = vmatprep.mubr.bf16.mxu0 0
        %849 = vmatmul.mubr.bf16.gmra.mrb[0].mxu0 %v567
        %v850 = vpop.f32.mrb[0].mxu0
        %v851 = vadd.f32 %v436, %v850
        %v852 = vpop.f32.mrb[0].mxu0
        %v853 = vpop.f32.mrb[0].mxu0
        %v854 = vadd.f32 %v436, %v853
        %v855 = vpop.f32.mrb[0].mxu0
        %856 = vmatprep.mubr.bf16.mxu0 0
        %857 = vmatmul.mubr.bf16.gmra.mrb[0].mxu0 %v568
        %v858 = vpop.f32.mrb[0].mxu0
        %v859 = vadd.f32 %v436, %v858
        %v860 = vpop.f32.mrb[0].mxu0
        %v861 = vpop.f32.mrb[0].mxu0
        %v862 = vadd.f32 %v436, %v861
        %v863 = vpop.f32.mrb[0].mxu0
        %864 = vmatprep.mubr.bf16.mxu0 0
        %865 = vmatmul.mubr.bf16.gmra.mrb[0].mxu0 %v569
        %v866 = vpop.f32.mrb[0].mxu0
        %v867 = vadd.f32 %v436, %v866
        %v868 = vpop.f32.mrb[0].mxu0
        %v869 = vpop.f32.mrb[0].mxu0
        %v870 = vadd.f32 %v436, %v869
        %v871 = vpop.f32.mrb[0].mxu0
        %872 = vmatprep.mubr.bf16.mxu0 0
        %873 = vmatmul.mubr.bf16.gmra.mrb[0].mxu0 %v570
        %v874 = vpop.f32.mrb[0].mxu0
        %v875 = vadd.f32 %v436, %v874
        %v876 = vpop.f32.mrb[0].mxu0
        %v877 = vpop.f32.mrb[0].mxu0
        %v878 = vadd.f32 %v436, %v877
        %v879 = vpop.f32.mrb[0].mxu0
        %880 = vmatprep.mubr.bf16.mxu0 0
        %881 = vmatmul.mubr.bf16.gmra.mrb[0].mxu0 %v571
        %v882 = vpop.f32.mrb[0].mxu0
        %v883 = vadd.f32 %v436, %v882
        %v884 = vpop.f32.mrb[0].mxu0
        %v885 = vpop.f32.mrb[0].mxu0
        %v886 = vadd.f32 %v436, %v885
        %v887 = vpop.f32.mrb[0].mxu0
        %888 = vmatprep.mubr.bf16.mxu0 0
        %889 = vmatmul.mubr.bf16.gmra.mrb[0].mxu0 %v572
        %v890 = vpop.f32.mrb[0].mxu0
        %v891 = vadd.f32 %v436, %v890
        %v892 = vpop.f32.mrb[0].mxu0
        %v893 = vpop.f32.mrb[0].mxu0
        %v894 = vadd.f32 %v436, %v893
        %v895 = vpop.f32.mrb[0].mxu0
        %896 = vdwg.mxu0
        %v897 = vmax.f32 %v683, 0.0
        %v898 = vmax.f32 %v686, 0.0
        %v899 = vmax.f32 %v691, 0.0
        %v900 = vmax.f32 %v694, 0.0
        %v901 = vmax.f32 %v699, 0.0
        %v902 = vmax.f32 %v702, 0.0
        %v903 = vmax.f32 %v707, 0.0
        %v904 = vmax.f32 %v710, 0.0
        %v905 = vmax.f32 %v715, 0.0
        %v906 = vmax.f32 %v718, 0.0
        %v907 = vmax.f32 %v723, 0.0
        %v908 = vmax.f32 %v726, 0.0
        %v909 = vmax.f32 %v731, 0.0
        %v910 = vmax.f32 %v734, 0.0
        %v911 = vmax.f32 %v739, 0.0
        %v912 = vmax.f32 %v742, 0.0
        %v913 = vmax.f32 %v747, 0.0
        %v914 = vmax.f32 %v750, 0.0
        %v915 = vmax.f32 %v755, 0.0
        %v916 = vmax.f32 %v758, 0.0
        %v917 = vmax.f32 %v763, 0.0
        %v918 = vmax.f32 %v766, 0.0
        %v919 = vmax.f32 %v771, 0.0
        %v920 = vmax.f32 %v774, 0.0
        %v921 = vmax.f32 %v779, 0.0
        %v922 = vmax.f32 %v782, 0.0
        %v923 = vmax.f32 %v787, 0.0
        %v924 = vmax.f32 %v790, 0.0
        %v925 = vmax.f32 %v795, 0.0
        %v926 = vmax.f32 %v798, 0.0
        %v927 = vmax.f32 %v803, 0.0
        %v928 = vmax.f32 %v806, 0.0
        %v929 = vmax.f32 %v811, 0.0
        %v930 = vmax.f32 %v814, 0.0
        %v931 = vmax.f32 %v819, 0.0
        %v932 = vmax.f32 %v822, 0.0
        %v933 = vmax.f32 %v827, 0.0
        %v934 = vmax.f32 %v830, 0.0
        %v935 = vmax.f32 %v835, 0.0
        %v936 = vmax.f32 %v838, 0.0
        %v937 = vmax.f32 %v843, 0.0
        %v938 = vmax.f32 %v846, 0.0
        %v939 = vmax.f32 %v851, 0.0
        %v940 = vmax.f32 %v854, 0.0
        %v941 = vmax.f32 %v859, 0.0
        %v942 = vmax.f32 %v862, 0.0
        %v943 = vmax.f32 %v867, 0.0
        %v944 = vmax.f32 %v870, 0.0
        %v945 = vmax.f32 %v875, 0.0
        %v946 = vmax.f32 %v878, 0.0
        %v947 = vmax.f32 %v883, 0.0
        %v948 = vmax.f32 %v886, 0.0
        %v949 = vmax.f32 %v891, 0.0
        %v950 = vmax.f32 %v894, 0.0
        %v951 = vmin.f32 %v897, 6.0
        %v952 = vmin.f32 %v898, 6.0
        %v953 = vmin.f32 %v899, 6.0
        %v954 = vmin.f32 %v900, 6.0
        %v955 = vmin.f32 %v901, 6.0
        %v956 = vmin.f32 %v902, 6.0
        %v957 = vmin.f32 %v903, 6.0
        %v958 = vmin.f32 %v904, 6.0
        %v959 = vmin.f32 %v905, 6.0
        %v960 = vmin.f32 %v906, 6.0
        %v961 = vmin.f32 %v907, 6.0
        %v962 = vmin.f32 %v908, 6.0
        %v963 = vmin.f32 %v909, 6.0
        %v964 = vmin.f32 %v910, 6.0
        %v965 = vmin.f32 %v911, 6.0
        %v966 = vmin.f32 %v912, 6.0
        %v967 = vmin.f32 %v913, 6.0
        %v968 = vmin.f32 %v914, 6.0
        %v969 = vmin.f32 %v915, 6.0
        %v970 = vmin.f32 %v916, 6.0
        %v971 = vmin.f32 %v917, 6.0
        %v972 = vmin.f32 %v918, 6.0
        %v973 = vmin.f32 %v919, 6.0
        %v974 = vmin.f32 %v920, 6.0
        %v975 = vmin.f32 %v921, 6.0
        %v976 = vmin.f32 %v922, 6.0
        %v977 = vmin.f32 %v923, 6.0
        %v978 = vmin.f32 %v924, 6.0
        %v979 = vmin.f32 %v925, 6.0
        %v980 = vmin.f32 %v926, 6.0
        %v981 = vmin.f32 %v927, 6.0
        %v982 = vmin.f32 %v928, 6.0
        %v983 = vmin.f32 %v929, 6.0
        %v984 = vmin.f32 %v930, 6.0
        %v985 = vmin.f32 %v931, 6.0
        %v986 = vmin.f32 %v932, 6.0
        %v987 = vmin.f32 %v933, 6.0
        %v988 = vmin.f32 %v934, 6.0
        %v989 = vmin.f32 %v935, 6.0
        %v990 = vmin.f32 %v936, 6.0
        %v991 = vmin.f32 %v937, 6.0
        %v992 = vmin.f32 %v938, 6.0
        %v993 = vmin.f32 %v939, 6.0
        %v994 = vmin.f32 %v940, 6.0
        %v995 = vmin.f32 %v941, 6.0
        %v996 = vmin.f32 %v942, 6.0
        %v997 = vmin.f32 %v943, 6.0
        %v998 = vmin.f32 %v944, 6.0
        %v999 = vmin.f32 %v945, 6.0
        %v1000 = vmin.f32 %v946, 6.0
        %v1001 = vmin.f32 %v947, 6.0
        %v1002 = vmin.f32 %v948, 6.0
        %v1003 = vmin.f32 %v949, 6.0
        %v1004 = vmin.f32 %v950, 6.0
        %v1005 = vlaneseq
        %v1006 = vshrl.u32 %v1005, 7
        %v1007 = vadd.s32 %v1006, 8
        %v1008 = vadd.s32 %v1006, 16
        %v1009 = vstv %s357
        %v1010 = vadd.s32 %v1006, %v1009
        %v1011 = vadd.s32 %v1007, %v1009
        %v1012 = vadd.s32 %v1008, %v1009
        %v1013 = vlaneseq
        %v1014 = vand.u32 %v1013, 127
        %vm1015 = vcmp.ge.s32.totalorder %v1010, 1
        %vm1016 = vcmp.ge.s32.totalorder %v1011, 1
        %vm1017 = vcmp.ge.s32.totalorder %v1012, 1
        %vm1018 = vcmp.le.s32.totalorder %v1010, 16
        %vm1019 = vcmp.le.s32.totalorder %v1011, 16
        %vm1020 = vcmp.le.s32.totalorder %v1012, 16
        %vm1021 = vmand %vm1015, %vm1018
        %vm1022 = vmand %vm1016, %vm1019
        %vm1023 = vmand %vm1017, %vm1020
        %vm1024 = vcmp.ge.s32.totalorder %v1014, 1
        %vm1025 = vmand %vm1021, %vm1024
        %vm1026 = vmand %vm1022, %vm1024
        %vm1027 = vmand %vm1023, %vm1024
        %vm1028 = vcmp.le.s32.totalorder %v1014, 16
        %vm1029 = vmand %vm1025, %vm1028
        %vm1030 = vmand %vm1026, %vm1028
        %vm1031 = vmand %vm1027, %vm1028
        %v1032 = vsel %vm1029, 1, 0
        %v1033 = vsel %vm1030, 1, 0
        %v1034 = vsel %vm1031, 1, 0
        %v1035 = vcvt.s32.f32 %v1032
        %v1036 = vcvt.s32.f32 %v1033
        %v1037 = vcvt.s32.f32 %v1034
        %v1038 = vlaneseq
        %v1039 = vshrl.u32 %v1038, 7
        %v1040 = vsub.s32 0, %v1039
        %v1041 = vrot.slane %v1035, %v1040
        %1043 = vbcast.lane.b32.xlu0 %v1041, 256
        %v1044 = vpop.permute.xlu0 %1043
        %s1046 = sor.u32 256, 8
        %1047 = vbcast.lane.b32.xlu0 %v1041, %s1046
        %v1048 = vpop.permute.xlu0 %1047
        %s1050 = sor.u32 256, 16
        %1051 = vbcast.lane.b32.xlu0 %v1041, %s1050
        %v1052 = vpop.permute.xlu0 %1051
        %v1053 = vlaneseq
        %v1054 = vshrl.u32 %v1053, 7
        %v1055 = vsub.s32 1, %v1054
        %v1056 = vrot.slane %v1035, %v1055
        %1058 = vbcast.lane.b32.xlu0 %v1056, 256
        %v1059 = vpop.permute.xlu0 %1058
        %s1061 = sor.u32 256, 8
        %1062 = vbcast.lane.b32.xlu0 %v1056, %s1061
        %v1063 = vpop.permute.xlu0 %1062
        %s1065 = sor.u32 256, 16
        %1066 = vbcast.lane.b32.xlu0 %v1056, %s1065
        %v1067 = vpop.permute.xlu0 %1066
        %v1068 = vlaneseq
        %v1069 = vshrl.u32 %v1068, 7
        %v1070 = vsub.s32 2, %v1069
        %v1071 = vrot.slane %v1035, %v1070
        %1073 = vbcast.lane.b32.xlu0 %v1071, 256
        %v1074 = vpop.permute.xlu0 %1073
        %s1076 = sor.u32 256, 8
        %1077 = vbcast.lane.b32.xlu0 %v1071, %s1076
        %v1078 = vpop.permute.xlu0 %1077
        %s1080 = sor.u32 256, 16
        %1081 = vbcast.lane.b32.xlu0 %v1071, %s1080
        %v1082 = vpop.permute.xlu0 %1081
        %v1083 = vlaneseq
        %v1084 = vshrl.u32 %v1083, 7
        %v1085 = vsub.s32 3, %v1084
        %v1086 = vrot.slane %v1035, %v1085
        %1088 = vbcast.lane.b32.xlu0 %v1086, 256
        %v1089 = vpop.permute.xlu0 %1088
        %s1091 = sor.u32 256, 8
        %1092 = vbcast.lane.b32.xlu0 %v1086, %s1091
        %v1093 = vpop.permute.xlu0 %1092
        %s1095 = sor.u32 256, 16
        %1096 = vbcast.lane.b32.xlu0 %v1086, %s1095
        %v1097 = vpop.permute.xlu0 %1096
        %v1098 = vlaneseq
        %v1099 = vshrl.u32 %v1098, 7
        %v1100 = vsub.s32 4, %v1099
        %v1101 = vrot.slane %v1035, %v1100
        %1103 = vbcast.lane.b32.xlu0 %v1101, 256
        %v1104 = vpop.permute.xlu0 %1103
        %s1106 = sor.u32 256, 8
        %1107 = vbcast.lane.b32.xlu0 %v1101, %s1106
        %v1108 = vpop.permute.xlu0 %1107
        %s1110 = sor.u32 256, 16
        %1111 = vbcast.lane.b32.xlu0 %v1101, %s1110
        %v1112 = vpop.permute.xlu0 %1111
        %v1113 = vlaneseq
        %v1114 = vshrl.u32 %v1113, 7
        %v1115 = vsub.s32 5, %v1114
        %v1116 = vrot.slane %v1035, %v1115
        %1118 = vbcast.lane.b32.xlu0 %v1116, 256
        %v1119 = vpop.permute.xlu0 %1118
        %s1121 = sor.u32 256, 8
        %1122 = vbcast.lane.b32.xlu0 %v1116, %s1121
        %v1123 = vpop.permute.xlu0 %1122
        %s1125 = sor.u32 256, 16
        %1126 = vbcast.lane.b32.xlu0 %v1116, %s1125
        %v1127 = vpop.permute.xlu0 %1126
        %v1128 = vlaneseq
        %v1129 = vshrl.u32 %v1128, 7
        %v1130 = vsub.s32 6, %v1129
        %v1131 = vrot.slane %v1035, %v1130
        %1133 = vbcast.lane.b32.xlu0 %v1131, 256
        %v1134 = vpop.permute.xlu0 %1133
        %s1136 = sor.u32 256, 8
        %1137 = vbcast.lane.b32.xlu0 %v1131, %s1136
        %v1138 = vpop.permute.xlu0 %1137
        %s1140 = sor.u32 256, 16
        %1141 = vbcast.lane.b32.xlu0 %v1131, %s1140
        %v1142 = vpop.permute.xlu0 %1141
        %v1143 = vlaneseq
        %v1144 = vshrl.u32 %v1143, 7
        %v1145 = vsub.s32 7, %v1144
        %v1146 = vrot.slane %v1035, %v1145
        %1148 = vbcast.lane.b32.xlu0 %v1146, 256
        %v1149 = vpop.permute.xlu0 %1148
        %s1151 = sor.u32 256, 8
        %1152 = vbcast.lane.b32.xlu0 %v1146, %s1151
        %v1153 = vpop.permute.xlu0 %1152
        %s1155 = sor.u32 256, 16
        %1156 = vbcast.lane.b32.xlu0 %v1146, %s1155
        %v1157 = vpop.permute.xlu0 %1156
        %v1158 = vlaneseq
        %v1159 = vshrl.u32 %v1158, 7
        %v1160 = vsub.s32 0, %v1159
        %v1161 = vrot.slane %v1036, %v1160
        %1163 = vbcast.lane.b32.xlu0 %v1161, 256
        %v1164 = vpop.permute.xlu0 %1163
        %s1166 = sor.u32 256, 8
        %1167 = vbcast.lane.b32.xlu0 %v1161, %s1166
        %v1168 = vpop.permute.xlu0 %1167
        %s1170 = sor.u32 256, 16
        %1171 = vbcast.lane.b32.xlu0 %v1161, %s1170
        %v1172 = vpop.permute.xlu0 %1171
        %v1173 = vlaneseq
        %v1174 = vshrl.u32 %v1173, 7
        %v1175 = vsub.s32 1, %v1174
        %v1176 = vrot.slane %v1036, %v1175
        %1178 = vbcast.lane.b32.xlu0 %v1176, 256
        %v1179 = vpop.permute.xlu0 %1178
        %s1181 = sor.u32 256, 8
        %1182 = vbcast.lane.b32.xlu0 %v1176, %s1181
        %v1183 = vpop.permute.xlu0 %1182
        %s1185 = sor.u32 256, 16
        %1186 = vbcast.lane.b32.xlu0 %v1176, %s1185
        %v1187 = vpop.permute.xlu0 %1186
        %v1188 = vlaneseq
        %v1189 = vshrl.u32 %v1188, 7
        %v1190 = vsub.s32 2, %v1189
        %v1191 = vrot.slane %v1036, %v1190
        %1193 = vbcast.lane.b32.xlu0 %v1191, 256
        %v1194 = vpop.permute.xlu0 %1193
        %s1196 = sor.u32 256, 8
        %1197 = vbcast.lane.b32.xlu0 %v1191, %s1196
        %v1198 = vpop.permute.xlu0 %1197
        %s1200 = sor.u32 256, 16
        %1201 = vbcast.lane.b32.xlu0 %v1191, %s1200
        %v1202 = vpop.permute.xlu0 %1201
        %v1203 = vlaneseq
        %v1204 = vshrl.u32 %v1203, 7
        %v1205 = vsub.s32 3, %v1204
        %v1206 = vrot.slane %v1036, %v1205
        %1208 = vbcast.lane.b32.xlu0 %v1206, 256
        %v1209 = vpop.permute.xlu0 %1208
        %s1211 = sor.u32 256, 8
        %1212 = vbcast.lane.b32.xlu0 %v1206, %s1211
        %v1213 = vpop.permute.xlu0 %1212
        %s1215 = sor.u32 256, 16
        %1216 = vbcast.lane.b32.xlu0 %v1206, %s1215
        %v1217 = vpop.permute.xlu0 %1216
        %v1218 = vlaneseq
        %v1219 = vshrl.u32 %v1218, 7
        %v1220 = vsub.s32 4, %v1219
        %v1221 = vrot.slane %v1036, %v1220
        %1223 = vbcast.lane.b32.xlu0 %v1221, 256
        %v1224 = vpop.permute.xlu0 %1223
        %s1226 = sor.u32 256, 8
        %1227 = vbcast.lane.b32.xlu0 %v1221, %s1226
        %v1228 = vpop.permute.xlu0 %1227
        %s1230 = sor.u32 256, 16
        %1231 = vbcast.lane.b32.xlu0 %v1221, %s1230
        %v1232 = vpop.permute.xlu0 %1231
        %v1233 = vlaneseq
        %v1234 = vshrl.u32 %v1233, 7
        %v1235 = vsub.s32 5, %v1234
        %v1236 = vrot.slane %v1036, %v1235
        %1238 = vbcast.lane.b32.xlu0 %v1236, 256
        %v1239 = vpop.permute.xlu0 %1238
        %s1241 = sor.u32 256, 8
        %1242 = vbcast.lane.b32.xlu0 %v1236, %s1241
        %v1243 = vpop.permute.xlu0 %1242
        %s1245 = sor.u32 256, 16
        %1246 = vbcast.lane.b32.xlu0 %v1236, %s1245
        %v1247 = vpop.permute.xlu0 %1246
        %v1248 = vlaneseq
        %v1249 = vshrl.u32 %v1248, 7
        %v1250 = vsub.s32 6, %v1249
        %v1251 = vrot.slane %v1036, %v1250
        %1253 = vbcast.lane.b32.xlu0 %v1251, 256
        %v1254 = vpop.permute.xlu0 %1253
        %s1256 = sor.u32 256, 8
        %1257 = vbcast.lane.b32.xlu0 %v1251, %s1256
        %v1258 = vpop.permute.xlu0 %1257
        %s1260 = sor.u32 256, 16
        %1261 = vbcast.lane.b32.xlu0 %v1251, %s1260
        %v1262 = vpop.permute.xlu0 %1261
        %v1263 = vlaneseq
        %v1264 = vshrl.u32 %v1263, 7
        %v1265 = vsub.s32 7, %v1264
        %v1266 = vrot.slane %v1036, %v1265
        %1268 = vbcast.lane.b32.xlu0 %v1266, 256
        %v1269 = vpop.permute.xlu0 %1268
        %s1271 = sor.u32 256, 8
        %1272 = vbcast.lane.b32.xlu0 %v1266, %s1271
        %v1273 = vpop.permute.xlu0 %1272
        %s1275 = sor.u32 256, 16
        %1276 = vbcast.lane.b32.xlu0 %v1266, %s1275
        %v1277 = vpop.permute.xlu0 %1276
        %v1278 = vlaneseq
        %v1279 = vshrl.u32 %v1278, 7
        %v1280 = vsub.s32 0, %v1279
        %v1281 = vrot.slane %v1037, %v1280
        %1283 = vbcast.lane.b32.xlu0 %v1281, 256
        %v1284 = vpop.permute.xlu0 %1283
        %s1286 = sor.u32 256, 8
        %1287 = vbcast.lane.b32.xlu0 %v1281, %s1286
        %v1288 = vpop.permute.xlu0 %1287
        %s1290 = sor.u32 256, 16
        %1291 = vbcast.lane.b32.xlu0 %v1281, %s1290
        %v1292 = vpop.permute.xlu0 %1291
        %v1293 = vlaneseq
        %v1294 = vshrl.u32 %v1293, 7
        %v1295 = vsub.s32 1, %v1294
        %v1296 = vrot.slane %v1037, %v1295
        %1298 = vbcast.lane.b32.xlu0 %v1296, 256
        %v1299 = vpop.permute.xlu0 %1298
        %s1301 = sor.u32 256, 8
        %1302 = vbcast.lane.b32.xlu0 %v1296, %s1301
        %v1303 = vpop.permute.xlu0 %1302
        %s1305 = sor.u32 256, 16
        %1306 = vbcast.lane.b32.xlu0 %v1296, %s1305
        %v1307 = vpop.permute.xlu0 %1306
        %v1308 = vmul.f32 %v951, %v1044
        %v1309 = vmul.f32 %v952, %v1048
        %v1310 = vmul.f32 %v953, %v1052
        %v1311 = vmul.f32 %v954, %v1059
        %v1312 = vmul.f32 %v955, %v1063
        %v1313 = vmul.f32 %v956, %v1067
        %v1314 = vmul.f32 %v957, %v1074
        %v1315 = vmul.f32 %v958, %v1078
        %v1316 = vmul.f32 %v959, %v1082
        %v1317 = vmul.f32 %v960, %v1089
        %v1318 = vmul.f32 %v961, %v1093
        %v1319 = vmul.f32 %v962, %v1097
        %v1320 = vmul.f32 %v963, %v1104
        %v1321 = vmul.f32 %v964, %v1108
        %v1322 = vmul.f32 %v965, %v1112
        %v1323 = vmul.f32 %v966, %v1119
        %v1324 = vmul.f32 %v967, %v1123
        %v1325 = vmul.f32 %v968, %v1127
        %v1326 = vmul.f32 %v969, %v1134
        %v1327 = vmul.f32 %v970, %v1138
        %v1328 = vmul.f32 %v971, %v1142
        %v1329 = vmul.f32 %v972, %v1149
        %v1330 = vmul.f32 %v973, %v1153
        %v1331 = vmul.f32 %v974, %v1157
        %v1332 = vmul.f32 %v975, %v1164
        %v1333 = vmul.f32 %v976, %v1168
        %v1334 = vmul.f32 %v977, %v1172
        %v1335 = vmul.f32 %v978, %v1179
        %v1336 = vmul.f32 %v979, %v1183
        %v1337 = vmul.f32 %v980, %v1187
        %v1338 = vmul.f32 %v981, %v1194
        %v1339 = vmul.f32 %v982, %v1198
        %v1340 = vmul.f32 %v983, %v1202
        %v1341 = vmul.f32 %v984, %v1209
        %v1342 = vmul.f32 %v985, %v1213
        %v1343 = vmul.f32 %v986, %v1217
        %v1344 = vmul.f32 %v987, %v1224
        %v1345 = vmul.f32 %v988, %v1228
        %v1346 = vmul.f32 %v989, %v1232
        %v1347 = vmul.f32 %v990, %v1239
        %v1348 = vmul.f32 %v991, %v1243
        %v1349 = vmul.f32 %v992, %v1247
        %v1350 = vmul.f32 %v993, %v1254
        %v1351 = vmul.f32 %v994, %v1258
        %v1352 = vmul.f32 %v995, %v1262
        %v1353 = vmul.f32 %v996, %v1269
        %v1354 = vmul.f32 %v997, %v1273
        %v1355 = vmul.f32 %v998, %v1277
        %v1356 = vmul.f32 %v999, %v1284
        %v1357 = vmul.f32 %v1000, %v1288
        %v1358 = vmul.f32 %v1001, %v1292
        %v1359 = vmul.f32 %v1002, %v1299
        %v1360 = vmul.f32 %v1003, %v1303
        %v1361 = vmul.f32 %v1004, %v1307
        %v1362 = vld [vmem:[#allocation7] sm:$0xff]
        %v1363 = vld [vmem:[#allocation7 + $0x8] sm:$0x1]
        %v1364 = vrot.slane %v1308, 1
        %v1365 = vrot.slane %v1311, 1
        %v1366 = vrot.slane %v1314, 1
        %v1367 = vrot.slane %v1317, 1
        %v1368 = vrot.slane %v1320, 1
        %v1369 = vrot.slane %v1323, 1
        %v1370 = vrot.slane %v1326, 1
        %v1371 = vrot.slane %v1329, 1
        %v1372 = vrot.slane %v1332, 1
        %v1373 = vrot.slane %v1335, 1
        %v1374 = vrot.slane %v1338, 1
        %v1375 = vrot.slane %v1341, 1
        %v1376 = vrot.slane %v1344, 1
        %v1377 = vrot.slane %v1347, 1
        %v1378 = vrot.slane %v1350, 1
        %v1379 = vrot.slane %v1353, 1
        %v1380 = vrot.slane %v1356, 1
        %v1381 = vrot.slane %v1359, 1
        %v1382 = vrot.slane %v1309, 1
        %v1383 = vrot.slane %v1312, 1
        %v1384 = vrot.slane %v1315, 1
        %v1385 = vrot.slane %v1318, 1
        %v1386 = vrot.slane %v1321, 1
        %v1387 = vrot.slane %v1324, 1
        %v1388 = vrot.slane %v1327, 1
        %v1389 = vrot.slane %v1330, 1
        %v1390 = vrot.slane %v1333, 1
        %v1391 = vrot.slane %v1336, 1
        %v1392 = vrot.slane %v1339, 1
        %v1393 = vrot.slane %v1342, 1
        %v1394 = vrot.slane %v1345, 1
        %v1395 = vrot.slane %v1348, 1
        %v1396 = vrot.slane %v1351, 1
        %v1397 = vrot.slane %v1354, 1
        %v1398 = vrot.slane %v1357, 1
        %v1399 = vrot.slane %v1360, 1
        %v1400 = vrot.slane %v1310, 1
        %v1401 = vrot.slane %v1313, 1
        %v1402 = vrot.slane %v1316, 1
        %v1403 = vrot.slane %v1319, 1
        %v1404 = vrot.slane %v1322, 1
        %v1405 = vrot.slane %v1325, 1
        %v1406 = vrot.slane %v1328, 1
        %v1407 = vrot.slane %v1331, 1
        %v1408 = vrot.slane %v1334, 1
        %v1409 = vrot.slane %v1337, 1
        %v1410 = vrot.slane %v1340, 1
        %v1411 = vrot.slane %v1343, 1
        %v1412 = vrot.slane %v1346, 1
        %v1413 = vrot.slane %v1349, 1
        %v1414 = vrot.slane %v1352, 1
        %v1415 = vrot.slane %v1355, 1
        %v1416 = vrot.slane %v1358, 1
        %v1417 = vrot.slane %v1361, 1
        %vm1418 = vcmp.lt.s32.totalorder %v1006, 7
        %v1419 = vsel %vm1418, %v1382, %v1400
        %v1420 = vsel %vm1418, %v1383, %v1401
        %v1421 = vsel %vm1418, %v1384, %v1402
        %v1422 = vsel %vm1418, %v1385, %v1403
        %v1423 = vsel %vm1418, %v1386, %v1404
        %v1424 = vsel %vm1418, %v1387, %v1405
        %v1425 = vsel %vm1418, %v1388, %v1406
        %v1426 = vsel %vm1418, %v1389, %v1407
        %v1427 = vsel %vm1418, %v1390, %v1408
        %v1428 = vsel %vm1418, %v1391, %v1409
        %v1429 = vsel %vm1418, %v1392, %v1410
        %v1430 = vsel %vm1418, %v1393, %v1411
        %v1431 = vsel %vm1418, %v1394, %v1412
        %v1432 = vsel %vm1418, %v1395, %v1413
        %v1433 = vsel %vm1418, %v1396, %v1414
        %v1434 = vsel %vm1418, %v1397, %v1415
        %v1435 = vsel %vm1418, %v1398, %v1416
        %v1436 = vsel %vm1418, %v1399, %v1417
        %v1437 = vsel %vm1418, %v1364, %v1382
        %v1438 = vsel %vm1418, %v1365, %v1383
        %v1439 = vsel %vm1418, %v1366, %v1384
        %v1440 = vsel %vm1418, %v1367, %v1385
        %v1441 = vsel %vm1418, %v1368, %v1386
        %v1442 = vsel %vm1418, %v1369, %v1387
        %v1443 = vsel %vm1418, %v1370, %v1388
        %v1444 = vsel %vm1418, %v1371, %v1389
        %v1445 = vsel %vm1418, %v1372, %v1390
        %v1446 = vsel %vm1418, %v1373, %v1391
        %v1447 = vsel %vm1418, %v1374, %v1392
        %v1448 = vsel %vm1418, %v1375, %v1393
        %v1449 = vsel %vm1418, %v1376, %v1394
        %v1450 = vsel %vm1418, %v1377, %v1395
        %v1451 = vsel %vm1418, %v1378, %v1396
        %v1452 = vsel %vm1418, %v1379, %v1397
        %v1453 = vsel %vm1418, %v1380, %v1398
        %v1454 = vsel %vm1418, %v1381, %v1399
        %v1455 = vrot.slane %v1308, 2
        %v1456 = vrot.slane %v1311, 2
        %v1457 = vrot.slane %v1314, 2
        %v1458 = vrot.slane %v1317, 2
        %v1459 = vrot.slane %v1320, 2
        %v1460 = vrot.slane %v1323, 2
        %v1461 = vrot.slane %v1326, 2
        %v1462 = vrot.slane %v1329, 2
        %v1463 = vrot.slane %v1332, 2
        %v1464 = vrot.slane %v1335, 2
        %v1465 = vrot.slane %v1338, 2
        %v1466 = vrot.slane %v1341, 2
        %v1467 = vrot.slane %v1344, 2
        %v1468 = vrot.slane %v1347, 2
        %v1469 = vrot.slane %v1350, 2
        %v1470 = vrot.slane %v1353, 2
        %v1471 = vrot.slane %v1356, 2
        %v1472 = vrot.slane %v1359, 2
        %v1473 = vrot.slane %v1309, 2
        %v1474 = vrot.slane %v1312, 2
        %v1475 = vrot.slane %v1315, 2
        %v1476 = vrot.slane %v1318, 2
        %v1477 = vrot.slane %v1321, 2
        %v1478 = vrot.slane %v1324, 2
        %v1479 = vrot.slane %v1327, 2
        %v1480 = vrot.slane %v1330, 2
        %v1481 = vrot.slane %v1333, 2
        %v1482 = vrot.slane %v1336, 2
        %v1483 = vrot.slane %v1339, 2
        %v1484 = vrot.slane %v1342, 2
        %v1485 = vrot.slane %v1345, 2
        %v1486 = vrot.slane %v1348, 2
        %v1487 = vrot.slane %v1351, 2
        %v1488 = vrot.slane %v1354, 2
        %v1489 = vrot.slane %v1357, 2
        %v1490 = vrot.slane %v1360, 2
        %v1491 = vrot.slane %v1310, 2
        %v1492 = vrot.slane %v1313, 2
        %v1493 = vrot.slane %v1316, 2
        %v1494 = vrot.slane %v1319, 2
        %v1495 = vrot.slane %v1322, 2
        %v1496 = vrot.slane %v1325, 2
        %v1497 = vrot.slane %v1328, 2
        %v1498 = vrot.slane %v1331, 2
        %v1499 = vrot.slane %v1334, 2
        %v1500 = vrot.slane %v1337, 2
        %v1501 = vrot.slane %v1340, 2
        %v1502 = vrot.slane %v1343, 2
        %v1503 = vrot.slane %v1346, 2
        %v1504 = vrot.slane %v1349, 2
        %v1505 = vrot.slane %v1352, 2
        %v1506 = vrot.slane %v1355, 2
        %v1507 = vrot.slane %v1358, 2
        %v1508 = vrot.slane %v1361, 2
        %vm1509 = vcmp.lt.s32.totalorder %v1006, 6
        %v1510 = vsel %vm1509, %v1473, %v1491
        %v1511 = vsel %vm1509, %v1474, %v1492
        %v1512 = vsel %vm1509, %v1475, %v1493
        %v1513 = vsel %vm1509, %v1476, %v1494
        %v1514 = vsel %vm1509, %v1477, %v1495
        %v1515 = vsel %vm1509, %v1478, %v1496
        %v1516 = vsel %vm1509, %v1479, %v1497
        %v1517 = vsel %vm1509, %v1480, %v1498
        %v1518 = vsel %vm1509, %v1481, %v1499
        %v1519 = vsel %vm1509, %v1482, %v1500
        %v1520 = vsel %vm1509, %v1483, %v1501
        %v1521 = vsel %vm1509, %v1484, %v1502
        %v1522 = vsel %vm1509, %v1485, %v1503
        %v1523 = vsel %vm1509, %v1486, %v1504
        %v1524 = vsel %vm1509, %v1487, %v1505
        %v1525 = vsel %vm1509, %v1488, %v1506
        %v1526 = vsel %vm1509, %v1489, %v1507
        %v1527 = vsel %vm1509, %v1490, %v1508
        %v1528 = vsel %vm1509, %v1455, %v1473
        %v1529 = vsel %vm1509, %v1456, %v1474
        %v1530 = vsel %vm1509, %v1457, %v1475
        %v1531 = vsel %vm1509, %v1458, %v1476
        %v1532 = vsel %vm1509, %v1459, %v1477
        %v1533 = vsel %vm1509, %v1460, %v1478
        %v1534 = vsel %vm1509, %v1461, %v1479
        %v1535 = vsel %vm1509, %v1462, %v1480
        %v1536 = vsel %vm1509, %v1463, %v1481
        %v1537 = vsel %vm1509, %v1464, %v1482
        %v1538 = vsel %vm1509, %v1465, %v1483
        %v1539 = vsel %vm1509, %v1466, %v1484
        %v1540 = vsel %vm1509, %v1467, %v1485
        %v1541 = vsel %vm1509, %v1468, %v1486
        %v1542 = vsel %vm1509, %v1469, %v1487
        %v1543 = vsel %vm1509, %v1470, %v1488
        %v1544 = vsel %vm1509, %v1471, %v1489
        %v1545 = vsel %vm1509, %v1472, %v1490
        %v1546 = vlaneseq
        %v1547 = vshrl.u32 %v1546, 7
        %v1548 = vsub.s32 0, %v1547
        %v1549 = vrot.slane %v1362, %v1548
        %v1550 = vmul.f32 %v1308, %v1549
        %v1551 = vmul.f32 %v1309, %v1549
        %v1552 = vmul.f32 %v1311, %v1549
        %v1553 = vmul.f32 %v1312, %v1549
        %v1554 = vmul.f32 %v1314, %v1549
        %v1555 = vmul.f32 %v1315, %v1549
        %v1556 = vmul.f32 %v1317, %v1549
        %v1557 = vmul.f32 %v1318, %v1549
        %v1558 = vmul.f32 %v1320, %v1549
        %v1559 = vmul.f32 %v1321, %v1549
        %v1560 = vmul.f32 %v1323, %v1549
        %v1561 = vmul.f32 %v1324, %v1549
        %v1562 = vmul.f32 %v1326, %v1549
        %v1563 = vmul.f32 %v1327, %v1549
        %v1564 = vmul.f32 %v1329, %v1549
        %v1565 = vmul.f32 %v1330, %v1549
        %v1566 = vmul.f32 %v1332, %v1549
        %v1567 = vmul.f32 %v1333, %v1549
        %v1568 = vmul.f32 %v1335, %v1549
        %v1569 = vmul.f32 %v1336, %v1549
        %v1570 = vmul.f32 %v1338, %v1549
        %v1571 = vmul.f32 %v1339, %v1549
        %v1572 = vmul.f32 %v1341, %v1549
        %v1573 = vmul.f32 %v1342, %v1549
        %v1574 = vmul.f32 %v1344, %v1549
        %v1575 = vmul.f32 %v1345, %v1549
        %v1576 = vmul.f32 %v1347, %v1549
        %v1577 = vmul.f32 %v1348, %v1549
        %v1578 = vmul.f32 %v1350, %v1549
        %v1579 = vmul.f32 %v1351, %v1549
        %v1580 = vmul.f32 %v1353, %v1549
        %v1581 = vmul.f32 %v1354, %v1549
        %v1582 = vadd.f32 %v1550, 0.0
        %v1583 = vadd.f32 %v1551, 0.0
        %v1584 = vadd.f32 %v1552, 0.0
        %v1585 = vadd.f32 %v1553, 0.0
        %v1586 = vadd.f32 %v1554, 0.0
        %v1587 = vadd.f32 %v1555, 0.0
        %v1588 = vadd.f32 %v1556, 0.0
        %v1589 = vadd.f32 %v1557, 0.0
        %v1590 = vadd.f32 %v1558, 0.0
        %v1591 = vadd.f32 %v1559, 0.0
        %v1592 = vadd.f32 %v1560, 0.0
        %v1593 = vadd.f32 %v1561, 0.0
        %v1594 = vadd.f32 %v1562, 0.0
        %v1595 = vadd.f32 %v1563, 0.0
        %v1596 = vadd.f32 %v1564, 0.0
        %v1597 = vadd.f32 %v1565, 0.0
        %v1598 = vadd.f32 %v1566, 0.0
        %v1599 = vadd.f32 %v1567, 0.0
        %v1600 = vadd.f32 %v1568, 0.0
        %v1601 = vadd.f32 %v1569, 0.0
        %v1602 = vadd.f32 %v1570, 0.0
        %v1603 = vadd.f32 %v1571, 0.0
        %v1604 = vadd.f32 %v1572, 0.0
        %v1605 = vadd.f32 %v1573, 0.0
        %v1606 = vadd.f32 %v1574, 0.0
        %v1607 = vadd.f32 %v1575, 0.0
        %v1608 = vadd.f32 %v1576, 0.0
        %v1609 = vadd.f32 %v1577, 0.0
        %v1610 = vadd.f32 %v1578, 0.0
        %v1611 = vadd.f32 %v1579, 0.0
        %v1612 = vadd.f32 %v1580, 0.0
        %v1613 = vadd.f32 %v1581, 0.0
        %v1614 = vlaneseq
        %v1615 = vshrl.u32 %v1614, 7
        %v1616 = vsub.s32 1, %v1615
        %v1617 = vrot.slane %v1362, %v1616
        %v1618 = vmul.f32 %v1437, %v1617
        %v1619 = vmul.f32 %v1419, %v1617
        %v1620 = vmul.f32 %v1438, %v1617
        %v1621 = vmul.f32 %v1420, %v1617
        %v1622 = vmul.f32 %v1439, %v1617
        %v1623 = vmul.f32 %v1421, %v1617
        %v1624 = vmul.f32 %v1440, %v1617
        %v1625 = vmul.f32 %v1422, %v1617
        %v1626 = vmul.f32 %v1441, %v1617
        %v1627 = vmul.f32 %v1423, %v1617
        %v1628 = vmul.f32 %v1442, %v1617
        %v1629 = vmul.f32 %v1424, %v1617
        %v1630 = vmul.f32 %v1443, %v1617
        %v1631 = vmul.f32 %v1425, %v1617
        %v1632 = vmul.f32 %v1444, %v1617
        %v1633 = vmul.f32 %v1426, %v1617
        %v1634 = vmul.f32 %v1445, %v1617
        %v1635 = vmul.f32 %v1427, %v1617
        %v1636 = vmul.f32 %v1446, %v1617
        %v1637 = vmul.f32 %v1428, %v1617
        %v1638 = vmul.f32 %v1447, %v1617
        %v1639 = vmul.f32 %v1429, %v1617
        %v1640 = vmul.f32 %v1448, %v1617
        %v1641 = vmul.f32 %v1430, %v1617
        %v1642 = vmul.f32 %v1449, %v1617
        %v1643 = vmul.f32 %v1431, %v1617
        %v1644 = vmul.f32 %v1450, %v1617
        %v1645 = vmul.f32 %v1432, %v1617
        %v1646 = vmul.f32 %v1451, %v1617
        %v1647 = vmul.f32 %v1433, %v1617
        %v1648 = vmul.f32 %v1452, %v1617
        %v1649 = vmul.f32 %v1434, %v1617
        %v1650 = vadd.f32 %v1582, %v1618
        %v1651 = vadd.f32 %v1583, %v1619
        %v1652 = vadd.f32 %v1584, %v1620
        %v1653 = vadd.f32 %v1585, %v1621
        %v1654 = vadd.f32 %v1586, %v1622
        %v1655 = vadd.f32 %v1587, %v1623
        %v1656 = vadd.f32 %v1588, %v1624
        %v1657 = vadd.f32 %v1589, %v1625
        %v1658 = vadd.f32 %v1590, %v1626
        %v1659 = vadd.f32 %v1591, %v1627
        %v1660 = vadd.f32 %v1592, %v1628
        %v1661 = vadd.f32 %v1593, %v1629
        %v1662 = vadd.f32 %v1594, %v1630
        %v1663 = vadd.f32 %v1595, %v1631
        %v1664 = vadd.f32 %v1596, %v1632
        %v1665 = vadd.f32 %v1597, %v1633
        %v1666 = vadd.f32 %v1598, %v1634
        %v1667 = vadd.f32 %v1599, %v1635
        %v1668 = vadd.f32 %v1600, %v1636
        %v1669 = vadd.f32 %v1601, %v1637
        %v1670 = vadd.f32 %v1602, %v1638
        %v1671 = vadd.f32 %v1603, %v1639
        %v1672 = vadd.f32 %v1604, %v1640
        %v1673 = vadd.f32 %v1605, %v1641
        %v1674 = vadd.f32 %v1606, %v1642
        %v1675 = vadd.f32 %v1607, %v1643
        %v1676 = vadd.f32 %v1608, %v1644
        %v1677 = vadd.f32 %v1609, %v1645
        %v1678 = vadd.f32 %v1610, %v1646
        %v1679 = vadd.f32 %v1611, %v1647
        %v1680 = vadd.f32 %v1612, %v1648
        %v1681 = vadd.f32 %v1613, %v1649
        %v1682 = vlaneseq
        %v1683 = vshrl.u32 %v1682, 7
        %v1684 = vsub.s32 2, %v1683
        %v1685 = vrot.slane %v1362, %v1684
        %v1686 = vmul.f32 %v1528, %v1685
        %v1687 = vmul.f32 %v1510, %v1685
        %v1688 = vmul.f32 %v1529, %v1685
        %v1689 = vmul.f32 %v1511, %v1685
        %v1690 = vmul.f32 %v1530, %v1685
        %v1691 = vmul.f32 %v1512, %v1685
        %v1692 = vmul.f32 %v1531, %v1685
        %v1693 = vmul.f32 %v1513, %v1685
        %v1694 = vmul.f32 %v1532, %v1685
        %v1695 = vmul.f32 %v1514, %v1685
        %v1696 = vmul.f32 %v1533, %v1685
        %v1697 = vmul.f32 %v1515, %v1685
        %v1698 = vmul.f32 %v1534, %v1685
        %v1699 = vmul.f32 %v1516, %v1685
        %v1700 = vmul.f32 %v1535, %v1685
        %v1701 = vmul.f32 %v1517, %v1685
        %v1702 = vmul.f32 %v1536, %v1685
        %v1703 = vmul.f32 %v1518, %v1685
        %v1704 = vmul.f32 %v1537, %v1685
        %v1705 = vmul.f32 %v1519, %v1685
        %v1706 = vmul.f32 %v1538, %v1685
        %v1707 = vmul.f32 %v1520, %v1685
        %v1708 = vmul.f32 %v1539, %v1685
        %v1709 = vmul.f32 %v1521, %v1685
        %v1710 = vmul.f32 %v1540, %v1685
        %v1711 = vmul.f32 %v1522, %v1685
        %v1712 = vmul.f32 %v1541, %v1685
        %v1713 = vmul.f32 %v1523, %v1685
        %v1714 = vmul.f32 %v1542, %v1685
        %v1715 = vmul.f32 %v1524, %v1685
        %v1716 = vmul.f32 %v1543, %v1685
        %v1717 = vmul.f32 %v1525, %v1685
        %v1718 = vadd.f32 %v1650, %v1686
        %v1719 = vadd.f32 %v1651, %v1687
        %v1720 = vadd.f32 %v1652, %v1688
        %v1721 = vadd.f32 %v1653, %v1689
        %v1722 = vadd.f32 %v1654, %v1690
        %v1723 = vadd.f32 %v1655, %v1691
        %v1724 = vadd.f32 %v1656, %v1692
        %v1725 = vadd.f32 %v1657, %v1693
        %v1726 = vadd.f32 %v1658, %v1694
        %v1727 = vadd.f32 %v1659, %v1695
        %v1728 = vadd.f32 %v1660, %v1696
        %v1729 = vadd.f32 %v1661, %v1697
        %v1730 = vadd.f32 %v1662, %v1698
        %v1731 = vadd.f32 %v1663, %v1699
        %v1732 = vadd.f32 %v1664, %v1700
        %v1733 = vadd.f32 %v1665, %v1701
        %v1734 = vadd.f32 %v1666, %v1702
        %v1735 = vadd.f32 %v1667, %v1703
        %v1736 = vadd.f32 %v1668, %v1704
        %v1737 = vadd.f32 %v1669, %v1705
        %v1738 = vadd.f32 %v1670, %v1706
        %v1739 = vadd.f32 %v1671, %v1707
        %v1740 = vadd.f32 %v1672, %v1708
        %v1741 = vadd.f32 %v1673, %v1709
        %v1742 = vadd.f32 %v1674, %v1710
        %v1743 = vadd.f32 %v1675, %v1711
        %v1744 = vadd.f32 %v1676, %v1712
        %v1745 = vadd.f32 %v1677, %v1713
        %v1746 = vadd.f32 %v1678, %v1714
        %v1747 = vadd.f32 %v1679, %v1715
        %v1748 = vadd.f32 %v1680, %v1716
        %v1749 = vadd.f32 %v1681, %v1717
        %v1750 = vlaneseq
        %v1751 = vshrl.u32 %v1750, 7
        %v1752 = vsub.s32 3, %v1751
        %v1753 = vrot.slane %v1362, %v1752
        %v1754 = vmul.f32 %v1311, %v1753
        %v1755 = vmul.f32 %v1312, %v1753
        %v1756 = vmul.f32 %v1314, %v1753
        %v1757 = vmul.f32 %v1315, %v1753
        %v1758 = vmul.f32 %v1317, %v1753
        %v1759 = vmul.f32 %v1318, %v1753
        %v1760 = vmul.f32 %v1320, %v1753
        %v1761 = vmul.f32 %v1321, %v1753
        %v1762 = vmul.f32 %v1323, %v1753
        %v1763 = vmul.f32 %v1324, %v1753
        %v1764 = vmul.f32 %v1326, %v1753
        %v1765 = vmul.f32 %v1327, %v1753
        %v1766 = vmul.f32 %v1329, %v1753
        %v1767 = vmul.f32 %v1330, %v1753
        %v1768 = vmul.f32 %v1332, %v1753
        %v1769 = vmul.f32 %v1333, %v1753
        %v1770 = vmul.f32 %v1335, %v1753
        %v1771 = vmul.f32 %v1336, %v1753
        %v1772 = vmul.f32 %v1338, %v1753
        %v1773 = vmul.f32 %v1339, %v1753
        %v1774 = vmul.f32 %v1341, %v1753
        %v1775 = vmul.f32 %v1342, %v1753
        %v1776 = vmul.f32 %v1344, %v1753
        %v1777 = vmul.f32 %v1345, %v1753
        %v1778 = vmul.f32 %v1347, %v1753
        %v1779 = vmul.f32 %v1348, %v1753
        %v1780 = vmul.f32 %v1350, %v1753
        %v1781 = vmul.f32 %v1351, %v1753
        %v1782 = vmul.f32 %v1353, %v1753
        %v1783 = vmul.f32 %v1354, %v1753
        %v1784 = vmul.f32 %v1356, %v1753
        %v1785 = vmul.f32 %v1357, %v1753
        %v1786 = vadd.f32 %v1718, %v1754
        %v1787 = vadd.f32 %v1719, %v1755
        %v1788 = vadd.f32 %v1720, %v1756
        %v1789 = vadd.f32 %v1721, %v1757
        %v1790 = vadd.f32 %v1722, %v1758
        %v1791 = vadd.f32 %v1723, %v1759
        %v1792 = vadd.f32 %v1724, %v1760
        %v1793 = vadd.f32 %v1725, %v1761
        %v1794 = vadd.f32 %v1726, %v1762
        %v1795 = vadd.f32 %v1727, %v1763
        %v1796 = vadd.f32 %v1728, %v1764
        %v1797 = vadd.f32 %v1729, %v1765
        %v1798 = vadd.f32 %v1730, %v1766
        %v1799 = vadd.f32 %v1731, %v1767
        %v1800 = vadd.f32 %v1732, %v1768
        %v1801 = vadd.f32 %v1733, %v1769
        %v1802 = vadd.f32 %v1734, %v1770
        %v1803 = vadd.f32 %v1735, %v1771
        %v1804 = vadd.f32 %v1736, %v1772
        %v1805 = vadd.f32 %v1737, %v1773
        %v1806 = vadd.f32 %v1738, %v1774
        %v1807 = vadd.f32 %v1739, %v1775
        %v1808 = vadd.f32 %v1740, %v1776
        %v1809 = vadd.f32 %v1741, %v1777
        %v1810 = vadd.f32 %v1742, %v1778
        %v1811 = vadd.f32 %v1743, %v1779
        %v1812 = vadd.f32 %v1744, %v1780
        %v1813 = vadd.f32 %v1745, %v1781
        %v1814 = vadd.f32 %v1746, %v1782
        %v1815 = vadd.f32 %v1747, %v1783
        %v1816 = vadd.f32 %v1748, %v1784
        %v1817 = vadd.f32 %v1749, %v1785
        %v1818 = vlaneseq
        %v1819 = vshrl.u32 %v1818, 7
        %v1820 = vsub.s32 4, %v1819
        %v1821 = vrot.slane %v1362, %v1820
        %v1822 = vmul.f32 %v1438, %v1821
        %v1823 = vmul.f32 %v1420, %v1821
        %v1824 = vmul.f32 %v1439, %v1821
        %v1825 = vmul.f32 %v1421, %v1821
        %v1826 = vmul.f32 %v1440, %v1821
        %v1827 = vmul.f32 %v1422, %v1821
        %v1828 = vmul.f32 %v1441, %v1821
        %v1829 = vmul.f32 %v1423, %v1821
        %v1830 = vmul.f32 %v1442, %v1821
        %v1831 = vmul.f32 %v1424, %v1821
        %v1832 = vmul.f32 %v1443, %v1821
        %v1833 = vmul.f32 %v1425, %v1821
        %v1834 = vmul.f32 %v1444, %v1821
        %v1835 = vmul.f32 %v1426, %v1821
        %v1836 = vmul.f32 %v1445, %v1821
        %v1837 = vmul.f32 %v1427, %v1821
        %v1838 = vmul.f32 %v1446, %v1821
        %v1839 = vmul.f32 %v1428, %v1821
        %v1840 = vmul.f32 %v1447, %v1821
        %v1841 = vmul.f32 %v1429, %v1821
        %v1842 = vmul.f32 %v1448, %v1821
        %v1843 = vmul.f32 %v1430, %v1821
        %v1844 = vmul.f32 %v1449, %v1821
        %v1845 = vmul.f32 %v1431, %v1821
        %v1846 = vmul.f32 %v1450, %v1821
        %v1847 = vmul.f32 %v1432, %v1821
        %v1848 = vmul.f32 %v1451, %v1821
        %v1849 = vmul.f32 %v1433, %v1821
        %v1850 = vmul.f32 %v1452, %v1821
        %v1851 = vmul.f32 %v1434, %v1821
        %v1852 = vmul.f32 %v1453, %v1821
        %v1853 = vmul.f32 %v1435, %v1821
        %v1854 = vadd.f32 %v1786, %v1822
        %v1855 = vadd.f32 %v1787, %v1823
        %v1856 = vadd.f32 %v1788, %v1824
        %v1857 = vadd.f32 %v1789, %v1825
        %v1858 = vadd.f32 %v1790, %v1826
        %v1859 = vadd.f32 %v1791, %v1827
        %v1860 = vadd.f32 %v1792, %v1828
        %v1861 = vadd.f32 %v1793, %v1829
        %v1862 = vadd.f32 %v1794, %v1830
        %v1863 = vadd.f32 %v1795, %v1831
        %v1864 = vadd.f32 %v1796, %v1832
        %v1865 = vadd.f32 %v1797, %v1833
        %v1866 = vadd.f32 %v1798, %v1834
        %v1867 = vadd.f32 %v1799, %v1835
        %v1868 = vadd.f32 %v1800, %v1836
        %v1869 = vadd.f32 %v1801, %v1837
        %v1870 = vadd.f32 %v1802, %v1838
        %v1871 = vadd.f32 %v1803, %v1839
        %v1872 = vadd.f32 %v1804, %v1840
        %v1873 = vadd.f32 %v1805, %v1841
        %v1874 = vadd.f32 %v1806, %v1842
        %v1875 = vadd.f32 %v1807, %v1843
        %v1876 = vadd.f32 %v1808, %v1844
        %v1877 = vadd.f32 %v1809, %v1845
        %v1878 = vadd.f32 %v1810, %v1846
        %v1879 = vadd.f32 %v1811, %v1847
        %v1880 = vadd.f32 %v1812, %v1848
        %v1881 = vadd.f32 %v1813, %v1849
        %v1882 = vadd.f32 %v1814, %v1850
        %v1883 = vadd.f32 %v1815, %v1851
        %v1884 = vadd.f32 %v1816, %v1852
        %v1885 = vadd.f32 %v1817, %v1853
        %v1886 = vlaneseq
        %v1887 = vshrl.u32 %v1886, 7
        %v1888 = vsub.s32 5, %v1887
        %v1889 = vrot.slane %v1362, %v1888
        %v1890 = vmul.f32 %v1529, %v1889
        %v1891 = vmul.f32 %v1511, %v1889
        %v1892 = vmul.f32 %v1530, %v1889
        %v1893 = vmul.f32 %v1512, %v1889
        %v1894 = vmul.f32 %v1531, %v1889
        %v1895 = vmul.f32 %v1513, %v1889
        %v1896 = vmul.f32 %v1532, %v1889
        %v1897 = vmul.f32 %v1514, %v1889
        %v1898 = vmul.f32 %v1533, %v1889
        %v1899 = vmul.f32 %v1515, %v1889
        %v1900 = vmul.f32 %v1534, %v1889
        %v1901 = vmul.f32 %v1516, %v1889
        %v1902 = vmul.f32 %v1535, %v1889
        %v1903 = vmul.f32 %v1517, %v1889
        %v1904 = vmul.f32 %v1536, %v1889
        %v1905 = vmul.f32 %v1518, %v1889
        %v1906 = vmul.f32 %v1537, %v1889
        %v1907 = vmul.f32 %v1519, %v1889
        %v1908 = vmul.f32 %v1538, %v1889
        %v1909 = vmul.f32 %v1520, %v1889
        %v1910 = vmul.f32 %v1539, %v1889
        %v1911 = vmul.f32 %v1521, %v1889
        %v1912 = vmul.f32 %v1540, %v1889
        %v1913 = vmul.f32 %v1522, %v1889
        %v1914 = vmul.f32 %v1541, %v1889
        %v1915 = vmul.f32 %v1523, %v1889
        %v1916 = vmul.f32 %v1542, %v1889
        %v1917 = vmul.f32 %v1524, %v1889
        %v1918 = vmul.f32 %v1543, %v1889
        %v1919 = vmul.f32 %v1525, %v1889
        %v1920 = vmul.f32 %v1544, %v1889
        %v1921 = vmul.f32 %v1526, %v1889
        %v1922 = vadd.f32 %v1854, %v1890
        %v1923 = vadd.f32 %v1855, %v1891
        %v1924 = vadd.f32 %v1856, %v1892
        %v1925 = vadd.f32 %v1857, %v1893
        %v1926 = vadd.f32 %v1858, %v1894
        %v1927 = vadd.f32 %v1859, %v1895
        %v1928 = vadd.f32 %v1860, %v1896
        %v1929 = vadd.f32 %v1861, %v1897
        %v1930 = vadd.f32 %v1862, %v1898
        %v1931 = vadd.f32 %v1863, %v1899
        %v1932 = vadd.f32 %v1864, %v1900
        %v1933 = vadd.f32 %v1865, %v1901
        %v1934 = vadd.f32 %v1866, %v1902
        %v1935 = vadd.f32 %v1867, %v1903
        %v1936 = vadd.f32 %v1868, %v1904
        %v1937 = vadd.f32 %v1869, %v1905
        %v1938 = vadd.f32 %v1870, %v1906
        %v1939 = vadd.f32 %v1871, %v1907
        %v1940 = vadd.f32 %v1872, %v1908
        %v1941 = vadd.f32 %v1873, %v1909
        %v1942 = vadd.f32 %v1874, %v1910
        %v1943 = vadd.f32 %v1875, %v1911
        %v1944 = vadd.f32 %v1876, %v1912
        %v1945 = vadd.f32 %v1877, %v1913
        %v1946 = vadd.f32 %v1878, %v1914
        %v1947 = vadd.f32 %v1879, %v1915
        %v1948 = vadd.f32 %v1880, %v1916
        %v1949 = vadd.f32 %v1881, %v1917
        %v1950 = vadd.f32 %v1882, %v1918
        %v1951 = vadd.f32 %v1883, %v1919
        %v1952 = vadd.f32 %v1884, %v1920
        %v1953 = vadd.f32 %v1885, %v1921
        %v1954 = vlaneseq
        %v1955 = vshrl.u32 %v1954, 7
        %v1956 = vsub.s32 6, %v1955
        %v1957 = vrot.slane %v1362, %v1956
        %v1958 = vmul.f32 %v1314, %v1957
        %v1959 = vmul.f32 %v1315, %v1957
        %v1960 = vmul.f32 %v1317, %v1957
        %v1961 = vmul.f32 %v1318, %v1957
        %v1962 = vmul.f32 %v1320, %v1957
        %v1963 = vmul.f32 %v1321, %v1957
        %v1964 = vmul.f32 %v1323, %v1957
        %v1965 = vmul.f32 %v1324, %v1957
        %v1966 = vmul.f32 %v1326, %v1957
        %v1967 = vmul.f32 %v1327, %v1957
        %v1968 = vmul.f32 %v1329, %v1957
        %v1969 = vmul.f32 %v1330, %v1957
        %v1970 = vmul.f32 %v1332, %v1957
        %v1971 = vmul.f32 %v1333, %v1957
        %v1972 = vmul.f32 %v1335, %v1957
        %v1973 = vmul.f32 %v1336, %v1957
        %v1974 = vmul.f32 %v1338, %v1957
        %v1975 = vmul.f32 %v1339, %v1957
        %v1976 = vmul.f32 %v1341, %v1957
        %v1977 = vmul.f32 %v1342, %v1957
        %v1978 = vmul.f32 %v1344, %v1957
        %v1979 = vmul.f32 %v1345, %v1957
        %v1980 = vmul.f32 %v1347, %v1957
        %v1981 = vmul.f32 %v1348, %v1957
        %v1982 = vmul.f32 %v1350, %v1957
        %v1983 = vmul.f32 %v1351, %v1957
        %v1984 = vmul.f32 %v1353, %v1957
        %v1985 = vmul.f32 %v1354, %v1957
        %v1986 = vmul.f32 %v1356, %v1957
        %v1987 = vmul.f32 %v1357, %v1957
        %v1988 = vmul.f32 %v1359, %v1957
        %v1989 = vmul.f32 %v1360, %v1957
        %v1990 = vadd.f32 %v1922, %v1958
        %v1991 = vadd.f32 %v1923, %v1959
        %v1992 = vadd.f32 %v1924, %v1960
        %v1993 = vadd.f32 %v1925, %v1961
        %v1994 = vadd.f32 %v1926, %v1962
        %v1995 = vadd.f32 %v1927, %v1963
        %v1996 = vadd.f32 %v1928, %v1964
        %v1997 = vadd.f32 %v1929, %v1965
        %v1998 = vadd.f32 %v1930, %v1966
        %v1999 = vadd.f32 %v1931, %v1967
        %v2000 = vadd.f32 %v1932, %v1968
        %v2001 = vadd.f32 %v1933, %v1969
        %v2002 = vadd.f32 %v1934, %v1970
        %v2003 = vadd.f32 %v1935, %v1971
        %v2004 = vadd.f32 %v1936, %v1972
        %v2005 = vadd.f32 %v1937, %v1973
        %v2006 = vadd.f32 %v1938, %v1974
        %v2007 = vadd.f32 %v1939, %v1975
        %v2008 = vadd.f32 %v1940, %v1976
        %v2009 = vadd.f32 %v1941, %v1977
        %v2010 = vadd.f32 %v1942, %v1978
        %v2011 = vadd.f32 %v1943, %v1979
        %v2012 = vadd.f32 %v1944, %v1980
        %v2013 = vadd.f32 %v1945, %v1981
        %v2014 = vadd.f32 %v1946, %v1982
        %v2015 = vadd.f32 %v1947, %v1983
        %v2016 = vadd.f32 %v1948, %v1984
        %v2017 = vadd.f32 %v1949, %v1985
        %v2018 = vadd.f32 %v1950, %v1986
        %v2019 = vadd.f32 %v1951, %v1987
        %v2020 = vadd.f32 %v1952, %v1988
        %v2021 = vadd.f32 %v1953, %v1989
        %v2022 = vlaneseq
        %v2023 = vshrl.u32 %v2022, 7
        %v2024 = vsub.s32 7, %v2023
        %v2025 = vrot.slane %v1362, %v2024
        %v2026 = vmul.f32 %v1439, %v2025
        %v2027 = vmul.f32 %v1421, %v2025
        %v2028 = vmul.f32 %v1440, %v2025
        %v2029 = vmul.f32 %v1422, %v2025
        %v2030 = vmul.f32 %v1441, %v2025
        %v2031 = vmul.f32 %v1423, %v2025
        %v2032 = vmul.f32 %v1442, %v2025
        %v2033 = vmul.f32 %v1424, %v2025
        %v2034 = vmul.f32 %v1443, %v2025
        %v2035 = vmul.f32 %v1425, %v2025
        %v2036 = vmul.f32 %v1444, %v2025
        %v2037 = vmul.f32 %v1426, %v2025
        %v2038 = vmul.f32 %v1445, %v2025
        %v2039 = vmul.f32 %v1427, %v2025
        %v2040 = vmul.f32 %v1446, %v2025
        %v2041 = vmul.f32 %v1428, %v2025
        %v2042 = vmul.f32 %v1447, %v2025
        %v2043 = vmul.f32 %v1429, %v2025
        %v2044 = vmul.f32 %v1448, %v2025
        %v2045 = vmul.f32 %v1430, %v2025
        %v2046 = vmul.f32 %v1449, %v2025
        %v2047 = vmul.f32 %v1431, %v2025
        %v2048 = vmul.f32 %v1450, %v2025
        %v2049 = vmul.f32 %v1432, %v2025
        %v2050 = vmul.f32 %v1451, %v2025
        %v2051 = vmul.f32 %v1433, %v2025
        %v2052 = vmul.f32 %v1452, %v2025
        %v2053 = vmul.f32 %v1434, %v2025
        %v2054 = vmul.f32 %v1453, %v2025
        %v2055 = vmul.f32 %v1435, %v2025
        %v2056 = vmul.f32 %v1454, %v2025
        %v2057 = vmul.f32 %v1436, %v2025
        %v2058 = vadd.f32 %v1990, %v2026
        %v2059 = vadd.f32 %v1991, %v2027
        %v2060 = vadd.f32 %v1992, %v2028
        %v2061 = vadd.f32 %v1993, %v2029
        %v2062 = vadd.f32 %v1994, %v2030
        %v2063 = vadd.f32 %v1995, %v2031
        %v2064 = vadd.f32 %v1996, %v2032
        %v2065 = vadd.f32 %v1997, %v2033
        %v2066 = vadd.f32 %v1998, %v2034
        %v2067 = vadd.f32 %v1999, %v2035
        %v2068 = vadd.f32 %v2000, %v2036
        %v2069 = vadd.f32 %v2001, %v2037
        %v2070 = vadd.f32 %v2002, %v2038
        %v2071 = vadd.f32 %v2003, %v2039
        %v2072 = vadd.f32 %v2004, %v2040
        %v2073 = vadd.f32 %v2005, %v2041
        %v2074 = vadd.f32 %v2006, %v2042
        %v2075 = vadd.f32 %v2007, %v2043
        %v2076 = vadd.f32 %v2008, %v2044
        %v2077 = vadd.f32 %v2009, %v2045
        %v2078 = vadd.f32 %v2010, %v2046
        %v2079 = vadd.f32 %v2011, %v2047
        %v2080 = vadd.f32 %v2012, %v2048
        %v2081 = vadd.f32 %v2013, %v2049
        %v2082 = vadd.f32 %v2014, %v2050
        %v2083 = vadd.f32 %v2015, %v2051
        %v2084 = vadd.f32 %v2016, %v2052
        %v2085 = vadd.f32 %v2017, %v2053
        %v2086 = vadd.f32 %v2018, %v2054
        %v2087 = vadd.f32 %v2019, %v2055
        %v2088 = vadd.f32 %v2020, %v2056
        %v2089 = vadd.f32 %v2021, %v2057
        %v2090 = vlaneseq
        %v2091 = vshrl.u32 %v2090, 7
        %v2092 = vsub.s32 0, %v2091
        %v2093 = vrot.slane %v1363, %v2092
        %v2094 = vmul.f32 %v1530, %v2093
        %v2095 = vmul.f32 %v1512, %v2093
        %v2096 = vmul.f32 %v1531, %v2093
        %v2097 = vmul.f32 %v1513, %v2093
        %v2098 = vmul.f32 %v1532, %v2093
        %v2099 = vmul.f32 %v1514, %v2093
        %v2100 = vmul.f32 %v1533, %v2093
        %v2101 = vmul.f32 %v1515, %v2093
        %v2102 = vmul.f32 %v1534, %v2093
        %v2103 = vmul.f32 %v1516, %v2093
        %v2104 = vmul.f32 %v1535, %v2093
        %v2105 = vmul.f32 %v1517, %v2093
        %v2106 = vmul.f32 %v1536, %v2093
        %v2107 = vmul.f32 %v1518, %v2093
        %v2108 = vmul.f32 %v1537, %v2093
        %v2109 = vmul.f32 %v1519, %v2093
        %v2110 = vmul.f32 %v1538, %v2093
        %v2111 = vmul.f32 %v1520, %v2093
        %v2112 = vmul.f32 %v1539, %v2093
        %v2113 = vmul.f32 %v1521, %v2093
        %v2114 = vmul.f32 %v1540, %v2093
        %v2115 = vmul.f32 %v1522, %v2093
        %v2116 = vmul.f32 %v1541, %v2093
        %v2117 = vmul.f32 %v1523, %v2093
        %v2118 = vmul.f32 %v1542, %v2093
        %v2119 = vmul.f32 %v1524, %v2093
        %v2120 = vmul.f32 %v1543, %v2093
        %v2121 = vmul.f32 %v1525, %v2093
        %v2122 = vmul.f32 %v1544, %v2093
        %v2123 = vmul.f32 %v1526, %v2093
        %v2124 = vmul.f32 %v1545, %v2093
        %v2125 = vmul.f32 %v1527, %v2093
        %v2126 = vadd.f32 %v2058, %v2094
        %v2127 = vadd.f32 %v2059, %v2095
        %v2128 = vadd.f32 %v2060, %v2096
        %v2129 = vadd.f32 %v2061, %v2097
        %v2130 = vadd.f32 %v2062, %v2098
        %v2131 = vadd.f32 %v2063, %v2099
        %v2132 = vadd.f32 %v2064, %v2100
        %v2133 = vadd.f32 %v2065, %v2101
        %v2134 = vadd.f32 %v2066, %v2102
        %v2135 = vadd.f32 %v2067, %v2103
        %v2136 = vadd.f32 %v2068, %v2104
        %v2137 = vadd.f32 %v2069, %v2105
        %v2138 = vadd.f32 %v2070, %v2106
        %v2139 = vadd.f32 %v2071, %v2107
        %v2140 = vadd.f32 %v2072, %v2108
        %v2141 = vadd.f32 %v2073, %v2109
        %v2142 = vadd.f32 %v2074, %v2110
        %v2143 = vadd.f32 %v2075, %v2111
        %v2144 = vadd.f32 %v2076, %v2112
        %v2145 = vadd.f32 %v2077, %v2113
        %v2146 = vadd.f32 %v2078, %v2114
        %v2147 = vadd.f32 %v2079, %v2115
        %v2148 = vadd.f32 %v2080, %v2116
        %v2149 = vadd.f32 %v2081, %v2117
        %v2150 = vadd.f32 %v2082, %v2118
        %v2151 = vadd.f32 %v2083, %v2119
        %v2152 = vadd.f32 %v2084, %v2120
        %v2153 = vadd.f32 %v2085, %v2121
        %v2154 = vadd.f32 %v2086, %v2122
        %v2155 = vadd.f32 %v2087, %v2123
        %v2156 = vadd.f32 %v2088, %v2124
        %v2157 = vadd.f32 %v2089, %v2125
        %v2158 = vld [vmem:[%s4] sm:$0x1]
        %v2160 = vlaneseq
        %v2161 = vshrl.u32 %v2160, 7
        %v2162 = vsub.s32 0, %v2161
        %v2163 = vrot.slane %v2158, %v2162
        %v2165 = vadd.f32 %v2126, %v2163
        %v2166 = vadd.f32 %v2127, %v2163
        %v2167 = vadd.f32 %v2128, %v2163
        %v2168 = vadd.f32 %v2129, %v2163
        %v2169 = vadd.f32 %v2130, %v2163
        %v2170 = vadd.f32 %v2131, %v2163
        %v2171 = vadd.f32 %v2132, %v2163
        %v2172 = vadd.f32 %v2133, %v2163
        %v2173 = vadd.f32 %v2134, %v2163
        %v2174 = vadd.f32 %v2135, %v2163
        %v2175 = vadd.f32 %v2136, %v2163
        %v2176 = vadd.f32 %v2137, %v2163
        %v2177 = vadd.f32 %v2138, %v2163
        %v2178 = vadd.f32 %v2139, %v2163
        %v2179 = vadd.f32 %v2140, %v2163
        %v2180 = vadd.f32 %v2141, %v2163
        %v2181 = vadd.f32 %v2142, %v2163
        %v2182 = vadd.f32 %v2143, %v2163
        %v2183 = vadd.f32 %v2144, %v2163
        %v2184 = vadd.f32 %v2145, %v2163
        %v2185 = vadd.f32 %v2146, %v2163
        %v2186 = vadd.f32 %v2147, %v2163
        %v2187 = vadd.f32 %v2148, %v2163
        %v2188 = vadd.f32 %v2149, %v2163
        %v2189 = vadd.f32 %v2150, %v2163
        %v2190 = vadd.f32 %v2151, %v2163
        %v2191 = vadd.f32 %v2152, %v2163
        %v2192 = vadd.f32 %v2153, %v2163
        %v2193 = vadd.f32 %v2154, %v2163
        %v2194 = vadd.f32 %v2155, %v2163
        %v2195 = vadd.f32 %v2156, %v2163
        %v2196 = vadd.f32 %v2157, %v2163
        %v2197 = vmax.f32 %v2165, 0.0
        %v2198 = vmax.f32 %v2166, 0.0
        %v2199 = vmax.f32 %v2167, 0.0
        %v2200 = vmax.f32 %v2168, 0.0
        %v2201 = vmax.f32 %v2169, 0.0
        %v2202 = vmax.f32 %v2170, 0.0
        %v2203 = vmax.f32 %v2171, 0.0
        %v2204 = vmax.f32 %v2172, 0.0
        %v2205 = vmax.f32 %v2173, 0.0
        %v2206 = vmax.f32 %v2174, 0.0
        %v2207 = vmax.f32 %v2175, 0.0
        %v2208 = vmax.f32 %v2176, 0.0
        %v2209 = vmax.f32 %v2177, 0.0
        %v2210 = vmax.f32 %v2178, 0.0
        %v2211 = vmax.f32 %v2179, 0.0
        %v2212 = vmax.f32 %v2180, 0.0
        %v2213 = vmax.f32 %v2181, 0.0
        %v2214 = vmax.f32 %v2182, 0.0
        %v2215 = vmax.f32 %v2183, 0.0
        %v2216 = vmax.f32 %v2184, 0.0
        %v2217 = vmax.f32 %v2185, 0.0
        %v2218 = vmax.f32 %v2186, 0.0
        %v2219 = vmax.f32 %v2187, 0.0
        %v2220 = vmax.f32 %v2188, 0.0
        %v2221 = vmax.f32 %v2189, 0.0
        %v2222 = vmax.f32 %v2190, 0.0
        %v2223 = vmax.f32 %v2191, 0.0
        %v2224 = vmax.f32 %v2192, 0.0
        %v2225 = vmax.f32 %v2193, 0.0
        %v2226 = vmax.f32 %v2194, 0.0
        %v2227 = vmax.f32 %v2195, 0.0
        %v2228 = vmax.f32 %v2196, 0.0
        %v2229 = vmin.f32 %v2197, 6.0
        %v2230 = vmin.f32 %v2198, 6.0
        %v2231 = vmin.f32 %v2199, 6.0
        %v2232 = vmin.f32 %v2200, 6.0
        %v2233 = vmin.f32 %v2201, 6.0
        %v2234 = vmin.f32 %v2202, 6.0
        %v2235 = vmin.f32 %v2203, 6.0
        %v2236 = vmin.f32 %v2204, 6.0
        %v2237 = vmin.f32 %v2205, 6.0
        %v2238 = vmin.f32 %v2206, 6.0
        %v2239 = vmin.f32 %v2207, 6.0
        %v2240 = vmin.f32 %v2208, 6.0
        %v2241 = vmin.f32 %v2209, 6.0
        %v2242 = vmin.f32 %v2210, 6.0
        %v2243 = vmin.f32 %v2211, 6.0
        %v2244 = vmin.f32 %v2212, 6.0
        %v2245 = vmin.f32 %v2213, 6.0
        %v2246 = vmin.f32 %v2214, 6.0
        %v2247 = vmin.f32 %v2215, 6.0
        %v2248 = vmin.f32 %v2216, 6.0
        %v2249 = vmin.f32 %v2217, 6.0
        %v2250 = vmin.f32 %v2218, 6.0
        %v2251 = vmin.f32 %v2219, 6.0
        %v2252 = vmin.f32 %v2220, 6.0
        %v2253 = vmin.f32 %v2221, 6.0
        %v2254 = vmin.f32 %v2222, 6.0
        %v2255 = vmin.f32 %v2223, 6.0
        %v2256 = vmin.f32 %v2224, 6.0
        %v2257 = vmin.f32 %v2225, 6.0
        %v2258 = vmin.f32 %v2226, 6.0
        %v2259 = vmin.f32 %v2227, 6.0
        %v2260 = vmin.f32 %v2228, 6.0
        %v2261 = vpack.c.bf16 %v2230, %v2229
        %v2262 = vpack.c.bf16 %v2232, %v2231
        %v2263 = vpack.c.bf16 %v2234, %v2233
        %v2264 = vpack.c.bf16 %v2236, %v2235
        %v2265 = vpack.c.bf16 %v2238, %v2237
        %v2266 = vpack.c.bf16 %v2240, %v2239
        %v2267 = vpack.c.bf16 %v2242, %v2241
        %v2268 = vpack.c.bf16 %v2244, %v2243
        %v2269 = vpack.c.bf16 %v2246, %v2245
        %v2270 = vpack.c.bf16 %v2248, %v2247
        %v2271 = vpack.c.bf16 %v2250, %v2249
        %v2272 = vpack.c.bf16 %v2252, %v2251
        %v2273 = vpack.c.bf16 %v2254, %v2253
        %v2274 = vpack.c.bf16 %v2256, %v2255
        %v2275 = vpack.c.bf16 %v2258, %v2257
        %v2276 = vpack.c.bf16 %v2260, %v2259
        %v2277 = vld [vmem:[#allocation8] sm:$0xf]
        %v2278 = vld [vmem:[#allocation8 + $0x4] sm:$0xf]
        %v2279 = vld [vmem:[#allocation8 + $0x8] sm:$0xf]
        %v2280 = vld [vmem:[#allocation8 + $0xc] sm:$0xf]
        %v2281 = vld [vmem:[#allocation8 + $0x10] sm:$0xf]
        %v2282 = vld [vmem:[#allocation8 + $0x14] sm:$0xf]
        %v2283 = vld [vmem:[#allocation8 + $0x18] sm:$0xf]
        %v2284 = vld [vmem:[#allocation8 + $0x1c] sm:$0xf]
        %v2285 = vld [vmem:[#allocation8 + $0x20] sm:$0xf]
        %v2286 = vld [vmem:[#allocation8 + $0x24] sm:$0xf]
        %v2287 = vld [vmem:[#allocation8 + $0x28] sm:$0xf]
        %v2288 = vld [vmem:[#allocation8 + $0x2c] sm:$0xf]
        %v2289 = vld [vmem:[#allocation8 + $0x30] sm:$0xf]
        %v2290 = vld [vmem:[#allocation8 + $0x34] sm:$0xf]
        %v2291 = vld [vmem:[#allocation8 + $0x38] sm:$0xf]
        %v2292 = vld [vmem:[#allocation8 + $0x3c] sm:$0xf]
        %v2293 = vld [vmem:[%s6] sm:$0x1]
        %v2295 = vlaneseq
        %v2296 = vshrl.u32 %v2295, 7
        %v2297 = vsub.s32 0, %v2296
        %v2298 = vrot.slane %v2293, %v2297
        %v2316 = vunpack.c.l.b16 %v2277
        %v2317 = vunpack.c.l.b16 %v2278
        %v2318 = vunpack.c.l.b16 %v2279
        %v2319 = vunpack.c.l.b16 %v2280
        %v2320 = vunpack.c.l.b16 %v2281
        %v2321 = vunpack.c.l.b16 %v2282
        %v2322 = vunpack.c.l.b16 %v2283
        %v2323 = vunpack.c.l.b16 %v2284
        %v2324 = vunpack.c.l.b16 %v2285
        %v2325 = vunpack.c.l.b16 %v2286
        %v2326 = vunpack.c.l.b16 %v2287
        %v2327 = vunpack.c.l.b16 %v2288
        %v2328 = vunpack.c.l.b16 %v2289
        %v2329 = vunpack.c.l.b16 %v2290
        %v2330 = vunpack.c.l.b16 %v2291
        %v2331 = vunpack.c.l.b16 %v2292
        %v2332 = vpack.c.b16 %v2317, %v2316
        %v2333 = vpack.c.b16 %v2319, %v2318
        %v2334 = vpack.c.b16 %v2321, %v2320
        %v2335 = vpack.c.b16 %v2323, %v2322
        %v2336 = vpack.c.b16 %v2325, %v2324
        %v2337 = vpack.c.b16 %v2327, %v2326
        %v2338 = vpack.c.b16 %v2329, %v2328
        %v2339 = vpack.c.b16 %v2331, %v2330
        %2348 = vmatprep.subr.bf16.mxu0 0
        %2349 = vmatpush1.bf16.msra.mxu0 %v2332
        %2350 = vmatprep.subr.bf16.mxu0 0
        %2351 = vmatpush1.bf16.msra.mxu0 %v2333
        %2352 = vmatprep.subr.bf16.mxu0 0
        %2353 = vmatpush1.bf16.msra.mxu0 %v2334
        %2354 = vmatprep.subr.bf16.mxu0 0
        %2355 = vmatpush1.bf16.msra.mxu0 %v2335
        %2356 = vmatprep.subr.bf16.mxu0 0
        %2357 = vmatpush1.bf16.msra.mxu0 %v2336
        %2358 = vmatprep.subr.bf16.mxu0 0
        %2359 = vmatpush1.bf16.msra.mxu0 %v2337
        %2360 = vmatprep.subr.bf16.mxu0 0
        %2361 = vmatpush1.bf16.msra.mxu0 %v2338
        %2362 = vmatprep.subr.bf16.mxu0 0
        %2363 = vmatpush1.bf16.msra.mxu0 %v2339
        %2364 = vmatprep.subr.bf16.mxu0 0
        %2365 = vmatpush1.bf16.msra.mxu0 0
        %2366 = vmatprep.subr.bf16.mxu0 0
        %2367 = vmatpush1.bf16.msra.mxu0 0
        %2368 = vmatprep.subr.bf16.mxu0 0
        %2369 = vmatpush1.bf16.msra.mxu0 0
        %2370 = vmatprep.subr.bf16.mxu0 0
        %2371 = vmatpush1.bf16.msra.mxu0 0
        %2372 = vmatprep.subr.bf16.mxu0 0
        %2373 = vmatpush1.bf16.msra.mxu0 0
        %2374 = vmatprep.subr.bf16.mxu0 0
        %2375 = vmatpush1.bf16.msra.mxu0 0
        %2376 = vmatprep.subr.bf16.mxu0 0
        %2377 = vmatpush1.bf16.msra.mxu0 0
        %2378 = vmatprep.subr.bf16.mxu0 0
        %2379 = vmatpush1.bf16.msra.mxu0 0
        %2380 = vmatprep.mubr.bf16.mxu0 0
        %2381 = vmatmul.mubr.bf16.gmra.mrb[0].mxu0 %v2261
        %v2382 = vpop.f32.mrb[0].mxu0
        %v2383 = vadd.f32 %v2298, %v2382
        %v2384 = vpop.f32.mrb[0].mxu0
        %v2385 = vpop.f32.mrb[0].mxu0
        %v2386 = vadd.f32 %v2298, %v2385
        %v2387 = vpop.f32.mrb[0].mxu0
        %2388 = vmatprep.mubr.bf16.mxu0 0
        %2389 = vmatmul.mubr.bf16.gmra.mrb[0].mxu0 %v2262
        %v2390 = vpop.f32.mrb[0].mxu0
        %v2391 = vadd.f32 %v2298, %v2390
        %v2392 = vpop.f32.mrb[0].mxu0
        %v2393 = vpop.f32.mrb[0].mxu0
        %v2394 = vadd.f32 %v2298, %v2393
        %v2395 = vpop.f32.mrb[0].mxu0
        %2396 = vmatprep.mubr.bf16.mxu0 0
        %2397 = vmatmul.mubr.bf16.gmra.mrb[0].mxu0 %v2263
        %v2398 = vpop.f32.mrb[0].mxu0
        %v2399 = vadd.f32 %v2298, %v2398
        %v2400 = vpop.f32.mrb[0].mxu0
        %v2401 = vpop.f32.mrb[0].mxu0
        %v2402 = vadd.f32 %v2298, %v2401
        %v2403 = vpop.f32.mrb[0].mxu0
        %2404 = vmatprep.mubr.bf16.mxu0 0
        %2405 = vmatmul.mubr.bf16.gmra.mrb[0].mxu0 %v2264
        %v2406 = vpop.f32.mrb[0].mxu0
        %v2407 = vadd.f32 %v2298, %v2406
        %v2408 = vpop.f32.mrb[0].mxu0
        %v2409 = vpop.f32.mrb[0].mxu0
        %v2410 = vadd.f32 %v2298, %v2409
        %v2411 = vpop.f32.mrb[0].mxu0
        %2412 = vmatprep.mubr.bf16.mxu0 0
        %2413 = vmatmul.mubr.bf16.gmra.mrb[0].mxu0 %v2265
        %v2414 = vpop.f32.mrb[0].mxu0
        %v2415 = vadd.f32 %v2298, %v2414
        %v2416 = vpop.f32.mrb[0].mxu0
        %v2417 = vpop.f32.mrb[0].mxu0
        %v2418 = vadd.f32 %v2298, %v2417
        %v2419 = vpop.f32.mrb[0].mxu0
        %2420 = vmatprep.mubr.bf16.mxu0 0
        %2421 = vmatmul.mubr.bf16.gmra.mrb[0].mxu0 %v2266
        %v2422 = vpop.f32.mrb[0].mxu0
        %v2423 = vadd.f32 %v2298, %v2422
        %v2424 = vpop.f32.mrb[0].mxu0
        %v2425 = vpop.f32.mrb[0].mxu0
        %v2426 = vadd.f32 %v2298, %v2425
        %v2427 = vpop.f32.mrb[0].mxu0
        %2428 = vmatprep.mubr.bf16.mxu0 0
        %2429 = vmatmul.mubr.bf16.gmra.mrb[0].mxu0 %v2267
        %v2430 = vpop.f32.mrb[0].mxu0
        %v2431 = vadd.f32 %v2298, %v2430
        %v2432 = vpop.f32.mrb[0].mxu0
        %v2433 = vpop.f32.mrb[0].mxu0
        %v2434 = vadd.f32 %v2298, %v2433
        %v2435 = vpop.f32.mrb[0].mxu0
        %2436 = vmatprep.mubr.bf16.mxu0 0
        %2437 = vmatmul.mubr.bf16.gmra.mrb[0].mxu0 %v2268
        %v2438 = vpop.f32.mrb[0].mxu0
        %v2439 = vadd.f32 %v2298, %v2438
        %v2440 = vpop.f32.mrb[0].mxu0
        %v2441 = vpop.f32.mrb[0].mxu0
        %v2442 = vadd.f32 %v2298, %v2441
        %v2443 = vpop.f32.mrb[0].mxu0
        %2444 = vmatprep.mubr.bf16.mxu0 0
        %2445 = vmatmul.mubr.bf16.gmra.mrb[0].mxu0 %v2269
        %v2446 = vpop.f32.mrb[0].mxu0
        %v2447 = vadd.f32 %v2298, %v2446
        %v2448 = vpop.f32.mrb[0].mxu0
        %v2449 = vpop.f32.mrb[0].mxu0
        %v2450 = vadd.f32 %v2298, %v2449
        %v2451 = vpop.f32.mrb[0].mxu0
        %2452 = vmatprep.mubr.bf16.mxu0 0
        %2453 = vmatmul.mubr.bf16.gmra.mrb[0].mxu0 %v2270
        %v2454 = vpop.f32.mrb[0].mxu0
        %v2455 = vadd.f32 %v2298, %v2454
        %v2456 = vpop.f32.mrb[0].mxu0
        %v2457 = vpop.f32.mrb[0].mxu0
        %v2458 = vadd.f32 %v2298, %v2457
        %v2459 = vpop.f32.mrb[0].mxu0
        %2460 = vmatprep.mubr.bf16.mxu0 0
        %2461 = vmatmul.mubr.bf16.gmra.mrb[0].mxu0 %v2271
        %v2462 = vpop.f32.mrb[0].mxu0
        %v2463 = vadd.f32 %v2298, %v2462
        %v2464 = vpop.f32.mrb[0].mxu0
        %v2465 = vpop.f32.mrb[0].mxu0
        %v2466 = vadd.f32 %v2298, %v2465
        %v2467 = vpop.f32.mrb[0].mxu0
        %2468 = vmatprep.mubr.bf16.mxu0 0
        %2469 = vmatmul.mubr.bf16.gmra.mrb[0].mxu0 %v2272
        %v2470 = vpop.f32.mrb[0].mxu0
        %v2471 = vadd.f32 %v2298, %v2470
        %v2472 = vpop.f32.mrb[0].mxu0
        %v2473 = vpop.f32.mrb[0].mxu0
        %v2474 = vadd.f32 %v2298, %v2473
        %v2475 = vpop.f32.mrb[0].mxu0
        %2476 = vmatprep.mubr.bf16.mxu0 0
        %2477 = vmatmul.mubr.bf16.gmra.mrb[0].mxu0 %v2273
        %v2478 = vpop.f32.mrb[0].mxu0
        %v2479 = vadd.f32 %v2298, %v2478
        %v2480 = vpop.f32.mrb[0].mxu0
        %v2481 = vpop.f32.mrb[0].mxu0
        %v2482 = vadd.f32 %v2298, %v2481
        %v2483 = vpop.f32.mrb[0].mxu0
        %2484 = vmatprep.mubr.bf16.mxu0 0
        %2485 = vmatmul.mubr.bf16.gmra.mrb[0].mxu0 %v2274
        %v2486 = vpop.f32.mrb[0].mxu0
        %v2487 = vadd.f32 %v2298, %v2486
        %v2488 = vpop.f32.mrb[0].mxu0
        %v2489 = vpop.f32.mrb[0].mxu0
        %v2490 = vadd.f32 %v2298, %v2489
        %v2491 = vpop.f32.mrb[0].mxu0
        %2492 = vmatprep.mubr.bf16.mxu0 0
        %2493 = vmatmul.mubr.bf16.gmra.mrb[0].mxu0 %v2275
        %v2494 = vpop.f32.mrb[0].mxu0
        %v2495 = vadd.f32 %v2298, %v2494
        %v2496 = vpop.f32.mrb[0].mxu0
        %v2497 = vpop.f32.mrb[0].mxu0
        %v2498 = vadd.f32 %v2298, %v2497
        %v2499 = vpop.f32.mrb[0].mxu0
        %2500 = vmatprep.mubr.bf16.mxu0 0
        %2501 = vmatmul.mubr.bf16.gmra.mrb[0].mxu0 %v2276
        %v2502 = vpop.f32.mrb[0].mxu0
        %v2503 = vadd.f32 %v2298, %v2502
        %v2504 = vpop.f32.mrb[0].mxu0
        %v2505 = vpop.f32.mrb[0].mxu0
        %v2506 = vadd.f32 %v2298, %v2505
        %v2507 = vpop.f32.mrb[0].mxu0
        %2508 = vdwg.mxu0
        %v2509 = vunpack.c.l.bf16 %v364
        %v2510 = vunpack.c.l.bf16 %v365
        %v2511 = vunpack.c.l.bf16 %v366
        %v2512 = vunpack.c.l.bf16 %v367
        %v2513 = vunpack.c.l.bf16 %v368
        %v2514 = vunpack.c.l.bf16 %v369
        %v2515 = vunpack.c.l.bf16 %v370
        %v2516 = vunpack.c.l.bf16 %v371
        %v2517 = vunpack.c.l.bf16 %v372
        %v2518 = vunpack.c.l.bf16 %v373
        %v2519 = vunpack.c.l.bf16 %v374
        %v2520 = vunpack.c.l.bf16 %v375
        %v2521 = vunpack.c.l.bf16 %v376
        %v2522 = vunpack.c.l.bf16 %v377
        %v2523 = vunpack.c.l.bf16 %v378
        %v2524 = vunpack.c.l.bf16 %v379
        %v2525 = vunpack.c.l.bf16 %v380
        %v2526 = vunpack.c.l.bf16 %v381
        %v2527 = vunpack.c.l.bf16 %v382
        %v2528 = vunpack.c.l.bf16 %v383
        %v2529 = vunpack.c.l.bf16 %v384
        %v2530 = vunpack.c.l.bf16 %v385
        %v2531 = vunpack.c.l.bf16 %v386
        %v2532 = vunpack.c.l.bf16 %v387
        %v2533 = vunpack.c.l.bf16 %v388
        %v2534 = vunpack.c.l.bf16 %v389
        %v2535 = vunpack.c.l.bf16 %v390
        %v2536 = vunpack.c.l.bf16 %v391
        %v2537 = vunpack.c.l.bf16 %v392
        %v2538 = vunpack.c.l.bf16 %v393
        %v2539 = vunpack.c.l.bf16 %v394
        %v2540 = vunpack.c.l.bf16 %v395
        %v2541 = vunpack.c.l.bf16 %v396
        %v2542 = vunpack.c.l.bf16 %v397
        %v2543 = vunpack.c.l.bf16 %v398
        %v2544 = vunpack.c.l.bf16 %v399
        %v2545 = vunpack.c.l.bf16 %v400
        %v2546 = vunpack.c.l.bf16 %v401
        %v2547 = vunpack.c.l.bf16 %v402
        %v2548 = vunpack.c.l.bf16 %v403
        %v2549 = vunpack.c.l.bf16 %v404
        %v2550 = vunpack.c.l.bf16 %v405
        %v2551 = vunpack.c.l.bf16 %v406
        %v2552 = vunpack.c.l.bf16 %v407
        %v2553 = vunpack.c.l.bf16 %v408
        %v2554 = vunpack.c.l.bf16 %v409
        %v2555 = vunpack.c.l.bf16 %v410
        %v2556 = vunpack.c.l.bf16 %v411
        %vm2605 = vcmask 1046528
        %v2606 = vrot.slane %v2509, 1
        %v2607 = vrot.slane %v2510, 1
        %v2608 = vsel %vm2605, %v2606, %v2607
        %v2609 = vrot.slane %v2511, 1
        %v2610 = vsel %vm2605, %v2607, %v2609
        %v2611 = vrot.slane %v2512, 1
        %v2612 = vrot.slane %v2513, 1
        %v2613 = vsel %vm2605, %v2611, %v2612
        %v2614 = vrot.slane %v2514, 1
        %v2615 = vsel %vm2605, %v2612, %v2614
        %v2616 = vrot.slane %v2515, 1
        %v2617 = vrot.slane %v2516, 1
        %v2618 = vsel %vm2605, %v2616, %v2617
        %v2619 = vrot.slane %v2517, 1
        %v2620 = vsel %vm2605, %v2617, %v2619
        %v2621 = vrot.slane %v2518, 1
        %v2622 = vrot.slane %v2519, 1
        %v2623 = vsel %vm2605, %v2621, %v2622
        %v2624 = vrot.slane %v2520, 1
        %v2625 = vsel %vm2605, %v2622, %v2624
        %v2626 = vrot.slane %v2521, 1
        %v2627 = vrot.slane %v2522, 1
        %v2628 = vsel %vm2605, %v2626, %v2627
        %v2629 = vrot.slane %v2523, 1
        %v2630 = vsel %vm2605, %v2627, %v2629
        %v2631 = vrot.slane %v2524, 1
        %v2632 = vrot.slane %v2525, 1
        %v2633 = vsel %vm2605, %v2631, %v2632
        %v2634 = vrot.slane %v2526, 1
        %v2635 = vsel %vm2605, %v2632, %v2634
        %v2636 = vrot.slane %v2527, 1
        %v2637 = vrot.slane %v2528, 1
        %v2638 = vsel %vm2605, %v2636, %v2637
        %v2639 = vrot.slane %v2529, 1
        %v2640 = vsel %vm2605, %v2637, %v2639
        %v2641 = vrot.slane %v2530, 1
        %v2642 = vrot.slane %v2531, 1
        %v2643 = vsel %vm2605, %v2641, %v2642
        %v2644 = vrot.slane %v2532, 1
        %v2645 = vsel %vm2605, %v2642, %v2644
        %v2646 = vrot.slane %v2533, 1
        %v2647 = vrot.slane %v2534, 1
        %v2648 = vsel %vm2605, %v2646, %v2647
        %v2649 = vrot.slane %v2535, 1
        %v2650 = vsel %vm2605, %v2647, %v2649
        %v2651 = vrot.slane %v2536, 1
        %v2652 = vrot.slane %v2537, 1
        %v2653 = vsel %vm2605, %v2651, %v2652
        %v2654 = vrot.slane %v2538, 1
        %v2655 = vsel %vm2605, %v2652, %v2654
        %v2656 = vrot.slane %v2539, 1
        %v2657 = vrot.slane %v2540, 1
        %v2658 = vsel %vm2605, %v2656, %v2657
        %v2659 = vrot.slane %v2541, 1
        %v2660 = vsel %vm2605, %v2657, %v2659
        %v2661 = vrot.slane %v2542, 1
        %v2662 = vrot.slane %v2543, 1
        %v2663 = vsel %vm2605, %v2661, %v2662
        %v2664 = vrot.slane %v2544, 1
        %v2665 = vsel %vm2605, %v2662, %v2664
        %v2666 = vrot.slane %v2545, 1
        %v2667 = vrot.slane %v2546, 1
        %v2668 = vsel %vm2605, %v2666, %v2667
        %v2669 = vrot.slane %v2547, 1
        %v2670 = vsel %vm2605, %v2667, %v2669
        %v2671 = vrot.slane %v2548, 1
        %v2672 = vrot.slane %v2549, 1
        %v2673 = vsel %vm2605, %v2671, %v2672
        %v2674 = vrot.slane %v2550, 1
        %v2675 = vsel %vm2605, %v2672, %v2674
        %v2676 = vrot.slane %v2551, 1
        %v2677 = vrot.slane %v2552, 1
        %v2678 = vsel %vm2605, %v2676, %v2677
        %v2679 = vrot.slane %v2553, 1
        %v2680 = vsel %vm2605, %v2677, %v2679
        %v2681 = vrot.slane %v2554, 1
        %v2682 = vrot.slane %v2555, 1
        %v2683 = vsel %vm2605, %v2681, %v2682
        %v2684 = vrot.slane %v2556, 1
        %v2685 = vsel %vm2605, %v2682, %v2684
        %v2718 = vadd.f32 %v2383, %v2608
        %v2719 = vadd.f32 %v2386, %v2610
        %v2720 = vadd.f32 %v2391, %v2613
        %v2721 = vadd.f32 %v2394, %v2615
        %v2722 = vadd.f32 %v2399, %v2618
        %v2723 = vadd.f32 %v2402, %v2620
        %v2724 = vadd.f32 %v2407, %v2623
        %v2725 = vadd.f32 %v2410, %v2625
        %v2726 = vadd.f32 %v2415, %v2628
        %v2727 = vadd.f32 %v2418, %v2630
        %v2728 = vadd.f32 %v2423, %v2633
        %v2729 = vadd.f32 %v2426, %v2635
        %v2730 = vadd.f32 %v2431, %v2638
        %v2731 = vadd.f32 %v2434, %v2640
        %v2732 = vadd.f32 %v2439, %v2643
        %v2733 = vadd.f32 %v2442, %v2645
        %v2734 = vadd.f32 %v2447, %v2648
        %v2735 = vadd.f32 %v2450, %v2650
        %v2736 = vadd.f32 %v2455, %v2653
        %v2737 = vadd.f32 %v2458, %v2655
        %v2738 = vadd.f32 %v2463, %v2658
        %v2739 = vadd.f32 %v2466, %v2660
        %v2740 = vadd.f32 %v2471, %v2663
        %v2741 = vadd.f32 %v2474, %v2665
        %v2742 = vadd.f32 %v2479, %v2668
        %v2743 = vadd.f32 %v2482, %v2670
        %v2744 = vadd.f32 %v2487, %v2673
        %v2745 = vadd.f32 %v2490, %v2675
        %v2746 = vadd.f32 %v2495, %v2678
        %v2747 = vadd.f32 %v2498, %v2680
        %v2748 = vadd.f32 %v2503, %v2683
        %v2749 = vadd.f32 %v2506, %v2685
        %v2750 = vpack.c.bf16 %v2719, %v2718
        %v2751 = vpack.c.bf16 %v2721, %v2720
        %v2752 = vpack.c.bf16 %v2723, %v2722
        %v2753 = vpack.c.bf16 %v2725, %v2724
        %v2754 = vpack.c.bf16 %v2727, %v2726
        %v2755 = vpack.c.bf16 %v2729, %v2728
        %v2756 = vpack.c.bf16 %v2731, %v2730
        %v2757 = vpack.c.bf16 %v2733, %v2732
        %v2758 = vpack.c.bf16 %v2735, %v2734
        %v2759 = vpack.c.bf16 %v2737, %v2736
        %v2760 = vpack.c.bf16 %v2739, %v2738
        %v2761 = vpack.c.bf16 %v2741, %v2740
        %v2762 = vpack.c.bf16 %v2743, %v2742
        %v2763 = vpack.c.bf16 %v2745, %v2744
        %v2764 = vpack.c.bf16 %v2747, %v2746
        %v2765 = vpack.c.bf16 %v2749, %v2748
        %v2782 = vunpack.c.l.b16 %v2750
        %v2783 = vunpack.c.h.b16 %v2750
        %v2784 = vunpack.c.l.b16 %v2751
        %v2785 = vunpack.c.h.b16 %v2751
        %v2786 = vunpack.c.l.b16 %v2752
        %v2787 = vunpack.c.h.b16 %v2752
        %v2788 = vunpack.c.l.b16 %v2753
        %v2789 = vunpack.c.h.b16 %v2753
        %v2790 = vunpack.c.l.b16 %v2754
        %v2791 = vunpack.c.h.b16 %v2754
        %v2792 = vunpack.c.l.b16 %v2755
        %v2793 = vunpack.c.h.b16 %v2755
        %v2794 = vunpack.c.l.b16 %v2756
        %v2795 = vunpack.c.h.b16 %v2756
        %v2796 = vunpack.c.l.b16 %v2757
        %v2797 = vunpack.c.h.b16 %v2757
        %v2798 = vunpack.c.l.b16 %v2758
        %v2799 = vunpack.c.h.b16 %v2758
        %v2800 = vunpack.c.l.b16 %v2759
        %v2801 = vunpack.c.h.b16 %v2759
        %v2802 = vunpack.c.l.b16 %v2760
        %v2803 = vunpack.c.h.b16 %v2760
        %v2804 = vunpack.c.l.b16 %v2761
        %v2805 = vunpack.c.h.b16 %v2761
        %v2806 = vunpack.c.l.b16 %v2762
        %v2807 = vunpack.c.h.b16 %v2762
        %v2808 = vunpack.c.l.b16 %v2763
        %v2809 = vunpack.c.h.b16 %v2763
        %v2810 = vunpack.c.l.b16 %v2764
        %v2811 = vunpack.c.h.b16 %v2764
        %v2812 = vunpack.c.l.b16 %v2765
        %v2813 = vunpack.c.h.b16 %v2765
        %v2814 = vpack.c.b16 %v2782, %v2782
        %v2815 = vpack.c.b16 %v2783, %v2783
        %v2816 = vpack.c.b16 %v2784, %v2784
        %v2817 = vpack.c.b16 %v2785, %v2785
        %v2818 = vpack.c.b16 %v2786, %v2786
        %v2819 = vpack.c.b16 %v2787, %v2787
        %v2820 = vpack.c.b16 %v2788, %v2788
        %v2821 = vpack.c.b16 %v2789, %v2789
        %v2822 = vpack.c.b16 %v2790, %v2790
        %v2823 = vpack.c.b16 %v2791, %v2791
        %v2824 = vpack.c.b16 %v2792, %v2792
        %v2825 = vpack.c.b16 %v2793, %v2793
        %v2826 = vpack.c.b16 %v2794, %v2794
        %v2827 = vpack.c.b16 %v2795, %v2795
        %v2828 = vpack.c.b16 %v2796, %v2796
        %v2829 = vpack.c.b16 %v2797, %v2797
        %v2830 = vpack.c.b16 %v2798, %v2798
        %v2831 = vpack.c.b16 %v2799, %v2799
        %v2832 = vpack.c.b16 %v2800, %v2800
        %v2833 = vpack.c.b16 %v2801, %v2801
        %v2834 = vpack.c.b16 %v2802, %v2802
        %v2835 = vpack.c.b16 %v2803, %v2803
        %v2836 = vpack.c.b16 %v2804, %v2804
        %v2837 = vpack.c.b16 %v2805, %v2805
        %v2838 = vpack.c.b16 %v2806, %v2806
        %v2839 = vpack.c.b16 %v2807, %v2807
        %v2840 = vpack.c.b16 %v2808, %v2808
        %v2841 = vpack.c.b16 %v2809, %v2809
        %v2842 = vpack.c.b16 %v2810, %v2810
        %v2843 = vpack.c.b16 %v2811, %v2811
        %v2844 = vpack.c.b16 %v2812, %v2812
        %v2845 = vpack.c.b16 %v2813, %v2813
        %2878 = vst [vmem:[%s354] sm:$0xf] %v2814
        %2879 = vst [vmem:[%s354 + $0x4] sm:$0xf] %v2815
        %2880 = vst [vmem:[%s354 + $0x8] sm:$0xf] %v2816
        %2881 = vst [vmem:[%s354 + $0xc] sm:$0xf] %v2817
        %2882 = vst [vmem:[%s354 + $0x10] sm:$0xf] %v2818
        %2883 = vst [vmem:[%s354 + $0x14] sm:$0xf] %v2819
        %2884 = vst [vmem:[%s354 + $0x18] sm:$0xf] %v2820
        %2885 = vst [vmem:[%s354 + $0x1c] sm:$0xf] %v2821
        %2886 = vst [vmem:[%s354 + $0x20] sm:$0xf] %v2822
        %2887 = vst [vmem:[%s354 + $0x24] sm:$0xf] %v2823
        %2888 = vst [vmem:[%s354 + $0x28] sm:$0xf] %v2824
        %2889 = vst [vmem:[%s354 + $0x2c] sm:$0xf] %v2825
        %2890 = vst [vmem:[%s354 + $0x30] sm:$0xf] %v2826
        %2891 = vst [vmem:[%s354 + $0x34] sm:$0xf] %v2827
        %2892 = vst [vmem:[%s354 + $0x38] sm:$0xf] %v2828
        %2893 = vst [vmem:[%s354 + $0x3c] sm:$0xf] %v2829
        %2894 = vst [vmem:[%s354 + $0x40] sm:$0xf] %v2830
        %2895 = vst [vmem:[%s354 + $0x44] sm:$0xf] %v2831
        %2896 = vst [vmem:[%s354 + $0x48] sm:$0xf] %v2832
        %2897 = vst [vmem:[%s354 + $0x4c] sm:$0xf] %v2833
        %2898 = vst [vmem:[%s354 + $0x50] sm:$0xf] %v2834
        %2899 = vst [vmem:[%s354 + $0x54] sm:$0xf] %v2835
        %2900 = vst [vmem:[%s354 + $0x58] sm:$0xf] %v2836
        %2901 = vst [vmem:[%s354 + $0x5c] sm:$0xf] %v2837
        %2902 = vst [vmem:[%s354 + $0x60] sm:$0xf] %v2838
        %2903 = vst [vmem:[%s354 + $0x64] sm:$0xf] %v2839
        %2904 = vst [vmem:[%s354 + $0x68] sm:$0xf] %v2840
        %2905 = vst [vmem:[%s354 + $0x6c] sm:$0xf] %v2841
        %2906 = vst [vmem:[%s354 + $0x70] sm:$0xf] %v2842
        %2907 = vst [vmem:[%s354 + $0x74] sm:$0xf] %v2843
        %2908 = vst [vmem:[%s354 + $0x78] sm:$0xf] %v2844
        %2909 = vst [vmem:[%s354 + $0x7c] sm:$0xf] %v2845
        %s2910 = sand.u32 %s200, 1
        %s2911 = scalar_lea.sflag [#allocation4], %s2910
        %s2912 = sand.u32 %s200, 1
        %s2913 = smul.addr %s2912, 128
        %s2914 = scalar_lea.vmem [#allocation10], %s2913
        // Predicated region
        $region65: #{tpu_custom_call.1} parent=47 // pred_check
          %p2915 = pneg %p210
        $region66: #{tpu_custom_call.1} parent=47 // pred_check_branch
          %2917 = sbr.rel (%p2915) target = $region68
        $region67: #{tpu_custom_call.1} parent=47 // pred_region
          %s2918 = smul.u32 16, %s31
          %s2920 = ssub.s32 2048, 2048
          %2921 = vsyncadd %s2911, %s2920
          %s2922 = smul.addr %s2918, 2
          %s2923 = smul.addr %s30, 32
          %s2924 = sadd.s32 %s2922, %s2923
          %s2925 = smul.addr %s2924, 64
          %s2926 = scalar_lea.hbm %s7, %s2925
          %s2927 = sshll.u32 %s2914, 4
          %s2928 = int_to_ptr.vmem [resolvable:$true] %s2927
          %2933 = dma.vmem_to_hbm [thread:$0]  %s2928, 2048, %s2926, %s2911, 64, 64, 4
        $region68: #{tpu_custom_call.1} parent=47 // pred_fallthru
          _
      $region48: #{tpu_custom_call.1} parent=5 // pred_fallthru
        _
      %p2934 = scmp.le.s32.totalorder 2, %s21
      // Predicated region
      $region69: #{tpu_custom_call.1} parent=5 // pred_check
        %p2935 = pneg %p2934
      $region70: #{tpu_custom_call.1} parent=5 // pred_check_branch
        %2937 = sbr.rel (%p2935) target = $region72
      $region71: #{tpu_custom_call.1} parent=5 // pred_region
        %s2938 = ssub.s32 %s21, 2
        // Predicated region
        $region73: #{tpu_custom_call.1} parent=71 // pred_check
          %p2939 = pneg %p216
        $region74: #{tpu_custom_call.1} parent=71 // pred_check_branch
          %2941 = sbr.rel (%p2939) target = $region76
        $region75: #{tpu_custom_call.1} parent=71 // pred_region
          %s2942 = sand.u32 %s201, 1
          %s2943 = scalar_lea.sflag [#allocation4], %s2942
          %s2944 = sand.u32 %s201, 1
          %s2945 = smul.addr %s2944, 128
          %s2946 = scalar_lea.vmem [#allocation10], %s2945
          %2947 = dma.done %s2943, 2048
        $region76: #{tpu_custom_call.1} parent=71 // pred_fallthru
          _
      $region72: #{tpu_custom_call.1} parent=5 // pred_fallthru
        _
    $region6: #{tpu_custom_call.1} parent=1 // loop_footer
      %s25 = sadd.s32 1, %s21
    $region7: #{tpu_custom_call.1} parent=1 // loop_footer_branch
      %20 = sbr.rel target = $region3
    $region8: #{tpu_custom_call.1} parent=1 // loop_exit
      _
    %2948 = vsyncpa [#allocation3], 1
    %s2949 = scalar_lea.sflag [#allocation3], 1
    %2950 = vsyncpa %s2949, 1
    %2951 = vsyncpa [#allocation6], 1
    %2952 = vsyncpa [#allocation9], 1
    %2953 = vsyncpa [#allocation4], 1
    %s2954 = scalar_lea.sflag [#allocation4], 1
    %2955 = vsyncpa %s2954, 1

</llo_original>
